<compile_context>
chip_gen: v5e
topology: v5e:2x2
jax: 0.10.0
libtpu: 0.0.40
codegen_flags: <defaults>
</compile_context>

<pallas_src>
import functools

import jax
import jax.numpy as jnp
import numpy as np
from jax import lax
from jax.experimental import pallas as pl
from jax.experimental.pallas import tpu as pltpu

MODE = "elu"  # matches DeepConvNet(mode='elu'); 'relu' / 'leakyrelu' also supported

# Static widths implied by Linear(8600, 2): input must be (N, 1, 2, 750).
W_IN = 750
WC_A, WP_A = 746, 373      # stage A: conv width / pooled width
WC_2, WP_2 = 369, 184
WC_3, WP_3 = 180, 90
WC_4, WP_4 = 86, 43


def _act(x, mode=MODE):
    if mode == "elu":
        return jnp.where(x > 0, x, jnp.exp(jnp.minimum(x, 0.0)) - 1.0)
    if mode == "relu":
        return jnp.maximum(x, 0.0)
    if mode == "leakyrelu":
        return jnp.where(x > 0, x, 0.01 * x)
    raise ValueError(mode)


def _pool_select_mat(wc):
    """(wc-1, wc//2) 0/1 matrix: column q picks row 2q (even-column select)."""
    p = wc // 2
    rows = np.arange(wc - 1)[:, None]
    cols = np.arange(p)[None, :]
    return jnp.asarray((rows == 2 * cols).astype(np.float32))


def _pool(y, e):
    """MaxPool2d((1,2)) on (C, Wc): adjacent-pair max (VPU) + even select (MXU)."""
    z = jnp.maximum(y[:, :-1], y[:, 1:])
    return jnp.dot(z, e, preferred_element_type=jnp.float32)


# ---------------------------------------------------------------------------
# Fused kernel: whole DeepConvNet forward for one sample per grid step.
# ---------------------------------------------------------------------------
def _deepconv_kernel(x_ref, wa_ref, ba_ref, w2_ref, b2_ref, w3_ref, b3_ref,
                     w4_ref, b4_ref, wc_ref, bc_ref,
                     e1_ref, e2_ref, e3_ref, e4_ref, o_ref, *, mode):
    x = x_ref[0, 0]                                       # (2, 750)

    # Stage A: conv0(1x5,1->25) . conv1(2x1,25->25) . BN1, folded to (25,10) matmul.
    rhs_a = jnp.concatenate(
        [x[h:h + 1, k:k + WC_A] for h in range(2) for k in range(5)], axis=0)
    y = jnp.dot(wa_ref[...], rhs_a,
                preferred_element_type=jnp.float32) + ba_ref[...]
    act1 = _act(_pool(y, e1_ref[...]), mode)              # (25, 373)
    # NOTE: pool before activation is exact here (activations are monotone and
    # the pool is a max + column selection), and it halves the EUP/VPU work.

    def stage(a_in, w_ref, b_ref, e_ref, wc):             # conv(1x5)+BN+act+pool
        rhs = jnp.concatenate([a_in[:, k:k + wc] for k in range(5)], axis=0)
        yy = jnp.dot(w_ref[...], rhs,
                     preferred_element_type=jnp.float32) + b_ref[...]
        return _act(_pool(yy, e_ref[...]), mode)

    act2 = stage(act1, w2_ref, b2_ref, e2_ref, WC_2)      # (50, 184)
    act3 = stage(act2, w3_ref, b3_ref, e3_ref, WC_3)      # (100, 90)
    act4 = stage(act3, w4_ref, b4_ref, e4_ref, WC_4)      # (200, 43)

    # Classifier Linear(8600, 2): weights pre-reshaped to (2, 200, 43) in glue,
    # feats never leave VMEM.  Dropout = identity (eval).
    l0 = jnp.sum(jnp.sum(wc_ref[0] * act4, axis=1, keepdims=True),
                 axis=0, keepdims=True)                   # (1, 1)
    l1 = jnp.sum(jnp.sum(wc_ref[1] * act4, axis=1, keepdims=True),
                 axis=0, keepdims=True)                   # (1, 1)
    sel = lax.broadcasted_iota(jnp.int32, (1, 2), 1)
    o_ref[0] = jnp.where(sel == 0, l0, l1) + bc_ref[0]    # (1, 2)


# ---------------------------------------------------------------------------
# Glue: eval-mode parameter folding + the single pallas_call.
# ---------------------------------------------------------------------------
def deepconvnet_forward(x, p, mode=MODE):
    n = x.shape[0]

    # conv0 + conv1 + BN1  ->  one effective (25, 2*5) matrix + bias.
    w0 = p['w0'][:, 0, 0, :]                              # (25, 5)
    w1 = p['w1'][:, :, :, 0]                              # (25, 25, 2) [out, in, h]
    sc1, sh1 = p['bn1_scale'], p['bn1_shift']
    wa = (jnp.einsum('oqh,qk->ohk', w1, w0)
          * sc1[:, None, None]).reshape(25, 10)
    ba = (sc1 * (jnp.einsum('oqh,q->o', w1, p['b0']) + p['b1'])
          + sh1).reshape(25, 1)

    def fold(w, b, sc, sh):                               # conv(1x5)+BN -> matmul form
        cout, cin = w.shape[0], w.shape[1]
        wm = jnp.transpose(w[:, :, 0, :], (0, 2, 1)).reshape(cout, 5 * cin)
        return wm * sc[:, None], (b * sc + sh).reshape(cout, 1)

    w2, b2 = fold(p['w2'], p['b2'], p['bn2_scale'], p['bn2_shift'])
    w3, b3 = fold(p['w3'], p['b3'], p['bn3_scale'], p['bn3_shift'])
    w4, b4 = fold(p['w4'], p['b4'], p['bn4_scale'], p['bn4_shift'])

    wc = p['wc'].reshape(2, 200, WP_4)                    # matches output.view(N, -1)
    bc = p['bc'].reshape(1, 1, 2)

    e1 = _pool_select_mat(WC_A)
    e2 = _pool_select_mat(WC_2)
    e3 = _pool_select_mat(WC_3)
    e4 = _pool_select_mat(WC_4)

    def cspec(arr):                                       # resident constant block
        nd = arr.ndim
        return pl.BlockSpec(arr.shape, lambda i, nd=nd: (0,) * nd)

    kernel = functools.partial(_deepconv_kernel, mode=mode)
    out = pl.pallas_call(
        kernel,
        out_shape=jax.ShapeDtypeStruct((n, 1, 2), jnp.float32),
        grid=(n,),
        in_specs=[pl.BlockSpec((1, 1, 2, W_IN), lambda i: (i, 0, 0, 0)),
                  cspec(wa), cspec(ba), cspec(w2), cspec(b2),
                  cspec(w3), cspec(b3), cspec(w4), cspec(b4),
                  cspec(wc), cspec(bc),
                  cspec(e1), cspec(e2), cspec(e3), cspec(e4)],
        out_specs=pl.BlockSpec((1, 1, 2), lambda i: (i, 0, 0)),
        compiler_params=pltpu.CompilerParams(
            dimension_semantics=("parallel",)),
    )(x, wa, ba, w2, b2, w3, b3, w4, b4, wc, bc, e1, e2, e3, e4)
    return out.reshape(n, 2)


# ---------------------------------------------------------------------------
# Parameters (deterministic, synthetic)
# ---------------------------------------------------------------------------
def init_params(key):
    keys = jax.random.split(key, 12)

    def conv_w(k, o, i, kh, kw):
        fan_in = i * kh * kw
        return jax.random.normal(k, (o, i, kh, kw), jnp.float32) * np.sqrt(2.0 / fan_in)

    def bn_params(k, c):
        k1, k2, k3, k4 = jax.random.split(k, 4)
        gamma = 1.0 + 0.1 * jax.random.normal(k1, (c,), jnp.float32)
        beta = 0.1 * jax.random.normal(k2, (c,), jnp.float32)
        mean = 0.1 * jax.random.normal(k3, (c,), jnp.float32)
        var = 1.0 + 0.1 * jax.random.uniform(k4, (c,), jnp.float32)
        scale = gamma / jnp.sqrt(var + 1e-5)
        shift = beta - mean * scale
        return scale, shift

    p = {}
    p['w0'] = conv_w(keys[0], 25, 1, 1, 5)
    p['b0'] = 0.01 * jax.random.normal(keys[1], (25,), jnp.float32)
    p['w1'] = conv_w(keys[2], 25, 25, 2, 1)
    p['b1'] = jnp.zeros((25,), jnp.float32)
    p['bn1_scale'], p['bn1_shift'] = bn_params(keys[3], 25)
    p['w2'] = conv_w(keys[4], 50, 25, 1, 5)
    p['b2'] = jnp.zeros((50,), jnp.float32)
    p['bn2_scale'], p['bn2_shift'] = bn_params(keys[5], 50)
    p['w3'] = conv_w(keys[6], 100, 50, 1, 5)
    p['b3'] = jnp.zeros((100,), jnp.float32)
    p['bn3_scale'], p['bn3_shift'] = bn_params(keys[7], 100)
    p['w4'] = conv_w(keys[8], 200, 100, 1, 5)
    p['b4'] = jnp.zeros((200,), jnp.float32)
    p['bn4_scale'], p['bn4_shift'] = bn_params(keys[9], 200)
    p['wc'] = jax.random.normal(keys[10], (2, 8600), jnp.float32) * np.sqrt(1.0 / 8600)
    p['bc'] = 0.01 * jax.random.normal(keys[11], (2,), jnp.float32)
    return p


# Pure-XLA reference (same eval-mode semantics) for a correctness check.
def deepconvnet_ref(x, p, mode=MODE):
    dn = ('NCHW', 'OIHW', 'NCHW')
    hp = lax.Precision.HIGHEST

    def conv(y, w, b):
        y = lax.conv_general_dilated(y, w, (1, 1), 'VALID',
                                     dimension_numbers=dn, precision=hp)
        return y + b.reshape(1, -1, 1, 1)

    def block(y, w, b, sc, sh):
        y = conv(y, w, b)
        y = y * sc.reshape(1, -1, 1, 1) + sh.reshape(1, -1, 1, 1)
        y = _act(y, mode)
        return lax.reduce_window(y, -jnp.inf, lax.max,
                                 (1, 1, 1, 2), (1, 1, 1, 2), 'VALID')

    y = conv(x, p['w0'], p['b0'])
    y = block(y, p['w1'], p['b1'], p['bn1_scale'], p['bn1_shift'])
    y = block(y, p['w2'], p['b2'], p['bn2_scale'], p['bn2_shift'])
    y = block(y, p['w3'], p['b3'], p['bn3_scale'], p['bn3_shift'])
    y = block(y, p['w4'], p['b4'], p['bn4_scale'], p['bn4_shift'])
    y = y.reshape(y.shape[0], -1)
    return jnp.dot(y, p['wc'].T, precision=hp) + p['bc'][None, :]


if __name__ == "__main__":
    key = jax.random.PRNGKey(0)
    pkey, xkey = jax.random.split(key)
    params = init_params(pkey)
    # Linear(8600, 2) pins the spatial size: input must be (N, 1, 2, 750).
    x = jax.random.normal(xkey, (2, 1, 2, 750), jnp.float32)

    fwd = jax.jit(deepconvnet_forward)
    out = jax.block_until_ready(fwd(x, params))
    assert out.shape == (2, 2)
    assert bool(jnp.all(jnp.isfinite(out)))

    ref = jax.block_until_ready(deepconvnet_ref(x, params))
    np.testing.assert_allclose(np.asarray(out), np.asarray(ref), rtol=2e-2, atol=2e-2)

    print("KERNEL_OK")
</pallas_src>

<mosaic_0001>
module attributes {stable_mosaic.version = 11 : i64} {
  func.func @_deepconv_kernel(%arg0: i32, %arg1: memref<1x1x2x750xf32, #tpu.memory_space<vmem>>, %arg2: memref<25x10xf32, #tpu.memory_space<vmem>>, %arg3: memref<25x1xf32, #tpu.memory_space<vmem>>, %arg4: memref<50x125xf32, #tpu.memory_space<vmem>>, %arg5: memref<50x1xf32, #tpu.memory_space<vmem>>, %arg6: memref<100x250xf32, #tpu.memory_space<vmem>>, %arg7: memref<100x1xf32, #tpu.memory_space<vmem>>, %arg8: memref<200x500xf32, #tpu.memory_space<vmem>>, %arg9: memref<200x1xf32, #tpu.memory_space<vmem>>, %arg10: memref<2x200x43xf32, #tpu.memory_space<vmem>>, %arg11: memref<1x1x2xf32, #tpu.memory_space<vmem>>, %arg12: memref<745x373xf32, #tpu.memory_space<vmem>>, %arg13: memref<368x184xf32, #tpu.memory_space<vmem>>, %arg14: memref<179x90xf32, #tpu.memory_space<vmem>>, %arg15: memref<85x43xf32, #tpu.memory_space<vmem>>, %arg16: memref<1x1x2xf32, #tpu.memory_space<vmem>>) attributes {dimension_semantics = [#tpu.dimension_semantics<parallel>], iteration_bounds = array<i64: 2>, scalar_prefetch = 0 : i64, scratch_operands = 0 : i64, tpu.core_type = #tpu.core_type<tc>, window_params = [{transform_indices = @transform_0, window_bounds = array<i64: 1, 1, 2, 750>}, {pipeline_mode = #tpu.pipeline_mode<synchronous>, transform_indices = @transform_1, window_bounds = array<i64: 25, 10>}, {pipeline_mode = #tpu.pipeline_mode<synchronous>, transform_indices = @transform_2, window_bounds = array<i64: 25, 1>}, {pipeline_mode = #tpu.pipeline_mode<synchronous>, transform_indices = @transform_3, window_bounds = array<i64: 50, 125>}, {pipeline_mode = #tpu.pipeline_mode<synchronous>, transform_indices = @transform_4, window_bounds = array<i64: 50, 1>}, {pipeline_mode = #tpu.pipeline_mode<synchronous>, transform_indices = @transform_5, window_bounds = array<i64: 100, 250>}, {pipeline_mode = #tpu.pipeline_mode<synchronous>, transform_indices = @transform_6, window_bounds = array<i64: 100, 1>}, {pipeline_mode = #tpu.pipeline_mode<synchronous>, transform_indices = @transform_7, window_bounds = array<i64: 200, 500>}, {pipeline_mode = #tpu.pipeline_mode<synchronous>, transform_indices = @transform_8, window_bounds = array<i64: 200, 1>}, {pipeline_mode = #tpu.pipeline_mode<synchronous>, transform_indices = @transform_9, window_bounds = array<i64: 2, 200, 43>}, {pipeline_mode = #tpu.pipeline_mode<synchronous>, transform_indices = @transform_10, window_bounds = array<i64: 1, 1, 2>}, {pipeline_mode = #tpu.pipeline_mode<synchronous>, transform_indices = @transform_11, window_bounds = array<i64: 745, 373>}, {pipeline_mode = #tpu.pipeline_mode<synchronous>, transform_indices = @transform_12, window_bounds = array<i64: 368, 184>}, {pipeline_mode = #tpu.pipeline_mode<synchronous>, transform_indices = @transform_13, window_bounds = array<i64: 179, 90>}, {pipeline_mode = #tpu.pipeline_mode<synchronous>, transform_indices = @transform_14, window_bounds = array<i64: 85, 43>}, {transform_indices = @transform_15, window_bounds = array<i64: 1, 1, 2>}]} {
    %c0 = arith.constant 0 : index
    %c0_0 = arith.constant 0 : index
    %c0_1 = arith.constant 0 : index
    %c0_2 = arith.constant 0 : index
    %0 = vector.load %arg1[%c0, %c0_0, %c0_1, %c0_2] : memref<1x1x2x750xf32, #tpu.memory_space<vmem>>, vector<1x1x2x750xf32>
    %1 = vector.shape_cast %0 : vector<1x1x2x750xf32> to vector<2x750xf32>
    %2 = vector.extract_strided_slice %1 {offsets = [0, 0], sizes = [1, 746], strides = [1, 1]} : vector<2x750xf32> to vector<1x746xf32>
    %3 = vector.extract_strided_slice %1 {offsets = [0, 1], sizes = [1, 746], strides = [1, 1]} : vector<2x750xf32> to vector<1x746xf32>
    %4 = vector.extract_strided_slice %1 {offsets = [0, 2], sizes = [1, 746], strides = [1, 1]} : vector<2x750xf32> to vector<1x746xf32>
    %5 = vector.extract_strided_slice %1 {offsets = [0, 3], sizes = [1, 746], strides = [1, 1]} : vector<2x750xf32> to vector<1x746xf32>
    %6 = vector.extract_strided_slice %1 {offsets = [0, 4], sizes = [1, 746], strides = [1, 1]} : vector<2x750xf32> to vector<1x746xf32>
    %7 = vector.extract_strided_slice %1 {offsets = [1, 0], sizes = [1, 746], strides = [1, 1]} : vector<2x750xf32> to vector<1x746xf32>
    %8 = vector.extract_strided_slice %1 {offsets = [1, 1], sizes = [1, 746], strides = [1, 1]} : vector<2x750xf32> to vector<1x746xf32>
    %9 = vector.extract_strided_slice %1 {offsets = [1, 2], sizes = [1, 746], strides = [1, 1]} : vector<2x750xf32> to vector<1x746xf32>
    %10 = vector.extract_strided_slice %1 {offsets = [1, 3], sizes = [1, 746], strides = [1, 1]} : vector<2x750xf32> to vector<1x746xf32>
    %11 = vector.extract_strided_slice %1 {offsets = [1, 4], sizes = [1, 746], strides = [1, 1]} : vector<2x750xf32> to vector<1x746xf32>
    %12 = tpu.concatenate %2, %3, %4, %5, %6, %7, %8, %9, %10, %11 in 0 : vector<1x746xf32>, vector<1x746xf32>, vector<1x746xf32>, vector<1x746xf32>, vector<1x746xf32>, vector<1x746xf32>, vector<1x746xf32>, vector<1x746xf32>, vector<1x746xf32>, vector<1x746xf32> -> vector<10x746xf32>
    %c0_3 = arith.constant 0 : index
    %c0_4 = arith.constant 0 : index
    %13 = vector.load %arg2[%c0_3, %c0_4] : memref<25x10xf32, #tpu.memory_space<vmem>>, vector<25x10xf32>
    %cst = arith.constant dense<0.000000e+00> : vector<25x746xf32>
    %14 = tpu.matmul %13, %12, %cst {dimension_numbers = #tpu.dot_dimension_numbers<[1], [0], [0], [1], [0, 0, 1, 1], [], []>} : vector<25x10xf32>, vector<10x746xf32>, vector<25x746xf32> -> vector<25x746xf32>
    %c0_5 = arith.constant 0 : index
    %c0_6 = arith.constant 0 : index
    %15 = vector.load %arg3[%c0_5, %c0_6] : memref<25x1xf32, #tpu.memory_space<vmem>>, vector<25x1xf32>
    %16 = vector.broadcast %15 : vector<25x1xf32> to vector<25x746xf32>
    %17 = arith.addf %14, %16 : vector<25x746xf32>
    %c0_7 = arith.constant 0 : index
    %c0_8 = arith.constant 0 : index
    %18 = vector.load %arg12[%c0_7, %c0_8] : memref<745x373xf32, #tpu.memory_space<vmem>>, vector<745x373xf32>
    %19 = vector.extract_strided_slice %17 {offsets = [0, 0], sizes = [25, 745], strides = [1, 1]} : vector<25x746xf32> to vector<25x745xf32>
    %20 = vector.extract_strided_slice %17 {offsets = [0, 1], sizes = [25, 745], strides = [1, 1]} : vector<25x746xf32> to vector<25x745xf32>
    %21 = arith.maximumf %19, %20 : vector<25x745xf32>
    %cst_9 = arith.constant dense<0.000000e+00> : vector<25x373xf32>
    %22 = tpu.matmul %21, %18, %cst_9 {dimension_numbers = #tpu.dot_dimension_numbers<[1], [0], [0], [1], [0, 0, 1, 1], [], []>} : vector<25x745xf32>, vector<745x373xf32>, vector<25x373xf32> -> vector<25x373xf32>
    %cst_10 = arith.constant 0.000000e+00 : f32
    %23 = vector.broadcast %cst_10 : f32 to vector<25x373xf32>
    %24 = arith.cmpf ogt, %22, %23 : vector<25x373xf32>
    %cst_11 = arith.constant 0.000000e+00 : f32
    %25 = vector.broadcast %cst_11 : f32 to vector<25x373xf32>
    %26 = arith.minimumf %22, %25 : vector<25x373xf32>
    %27 = math.exp %26 : vector<25x373xf32>
    %cst_12 = arith.constant 1.000000e+00 : f32
    %28 = vector.broadcast %cst_12 : f32 to vector<25x373xf32>
    %29 = arith.subf %27, %28 : vector<25x373xf32>
    %30 = arith.select %24, %22, %29 : vector<25x373xi1>, vector<25x373xf32>
    %31 = vector.extract_strided_slice %30 {offsets = [0, 0], sizes = [25, 369], strides = [1, 1]} : vector<25x373xf32> to vector<25x369xf32>
    %32 = vector.extract_strided_slice %30 {offsets = [0, 1], sizes = [25, 369], strides = [1, 1]} : vector<25x373xf32> to vector<25x369xf32>
    %33 = vector.extract_strided_slice %30 {offsets = [0, 2], sizes = [25, 369], strides = [1, 1]} : vector<25x373xf32> to vector<25x369xf32>
    %34 = vector.extract_strided_slice %30 {offsets = [0, 3], sizes = [25, 369], strides = [1, 1]} : vector<25x373xf32> to vector<25x369xf32>
    %35 = vector.extract_strided_slice %30 {offsets = [0, 4], sizes = [25, 369], strides = [1, 1]} : vector<25x373xf32> to vector<25x369xf32>
    %36 = tpu.concatenate %31, %32, %33, %34, %35 in 0 : vector<25x369xf32>, vector<25x369xf32>, vector<25x369xf32>, vector<25x369xf32>, vector<25x369xf32> -> vector<125x369xf32>
    %c0_13 = arith.constant 0 : index
    %c0_14 = arith.constant 0 : index
    %37 = vector.load %arg4[%c0_13, %c0_14] : memref<50x125xf32, #tpu.memory_space<vmem>>, vector<50x125xf32>
    %cst_15 = arith.constant dense<0.000000e+00> : vector<50x369xf32>
    %38 = tpu.matmul %37, %36, %cst_15 {dimension_numbers = #tpu.dot_dimension_numbers<[1], [0], [0], [1], [0, 0, 1, 1], [], []>} : vector<50x125xf32>, vector<125x369xf32>, vector<50x369xf32> -> vector<50x369xf32>
    %c0_16 = arith.constant 0 : index
    %c0_17 = arith.constant 0 : index
    %39 = vector.load %arg5[%c0_16, %c0_17] : memref<50x1xf32, #tpu.memory_space<vmem>>, vector<50x1xf32>
    %40 = vector.broadcast %39 : vector<50x1xf32> to vector<50x369xf32>
    %41 = arith.addf %38, %40 : vector<50x369xf32>
    %c0_18 = arith.constant 0 : index
    %c0_19 = arith.constant 0 : index
    %42 = vector.load %arg13[%c0_18, %c0_19] : memref<368x184xf32, #tpu.memory_space<vmem>>, vector<368x184xf32>
    %43 = vector.extract_strided_slice %41 {offsets = [0, 0], sizes = [50, 368], strides = [1, 1]} : vector<50x369xf32> to vector<50x368xf32>
    %44 = vector.extract_strided_slice %41 {offsets = [0, 1], sizes = [50, 368], strides = [1, 1]} : vector<50x369xf32> to vector<50x368xf32>
    %45 = arith.maximumf %43, %44 : vector<50x368xf32>
    %cst_20 = arith.constant dense<0.000000e+00> : vector<50x184xf32>
    %46 = tpu.matmul %45, %42, %cst_20 {dimension_numbers = #tpu.dot_dimension_numbers<[1], [0], [0], [1], [0, 0, 1, 1], [], []>} : vector<50x368xf32>, vector<368x184xf32>, vector<50x184xf32> -> vector<50x184xf32>
    %cst_21 = arith.constant 0.000000e+00 : f32
    %47 = vector.broadcast %cst_21 : f32 to vector<50x184xf32>
    %48 = arith.cmpf ogt, %46, %47 : vector<50x184xf32>
    %cst_22 = arith.constant 0.000000e+00 : f32
    %49 = vector.broadcast %cst_22 : f32 to vector<50x184xf32>
    %50 = arith.minimumf %46, %49 : vector<50x184xf32>
    %51 = math.exp %50 : vector<50x184xf32>
    %cst_23 = arith.constant 1.000000e+00 : f32
    %52 = vector.broadcast %cst_23 : f32 to vector<50x184xf32>
    %53 = arith.subf %51, %52 : vector<50x184xf32>
    %54 = arith.select %48, %46, %53 : vector<50x184xi1>, vector<50x184xf32>
    %55 = vector.extract_strided_slice %54 {offsets = [0, 0], sizes = [50, 180], strides = [1, 1]} : vector<50x184xf32> to vector<50x180xf32>
    %56 = vector.extract_strided_slice %54 {offsets = [0, 1], sizes = [50, 180], strides = [1, 1]} : vector<50x184xf32> to vector<50x180xf32>
    %57 = vector.extract_strided_slice %54 {offsets = [0, 2], sizes = [50, 180], strides = [1, 1]} : vector<50x184xf32> to vector<50x180xf32>
    %58 = vector.extract_strided_slice %54 {offsets = [0, 3], sizes = [50, 180], strides = [1, 1]} : vector<50x184xf32> to vector<50x180xf32>
    %59 = vector.extract_strided_slice %54 {offsets = [0, 4], sizes = [50, 180], strides = [1, 1]} : vector<50x184xf32> to vector<50x180xf32>
    %60 = tpu.concatenate %55, %56, %57, %58, %59 in 0 : vector<50x180xf32>, vector<50x180xf32>, vector<50x180xf32>, vector<50x180xf32>, vector<50x180xf32> -> vector<250x180xf32>
    %c0_24 = arith.constant 0 : index
    %c0_25 = arith.constant 0 : index
    %61 = vector.load %arg6[%c0_24, %c0_25] : memref<100x250xf32, #tpu.memory_space<vmem>>, vector<100x250xf32>
    %cst_26 = arith.constant dense<0.000000e+00> : vector<100x180xf32>
    %62 = tpu.matmul %61, %60, %cst_26 {dimension_numbers = #tpu.dot_dimension_numbers<[1], [0], [0], [1], [0, 0, 1, 1], [], []>} : vector<100x250xf32>, vector<250x180xf32>, vector<100x180xf32> -> vector<100x180xf32>
    %c0_27 = arith.constant 0 : index
    %c0_28 = arith.constant 0 : index
    %63 = vector.load %arg7[%c0_27, %c0_28] : memref<100x1xf32, #tpu.memory_space<vmem>>, vector<100x1xf32>
    %64 = vector.broadcast %63 : vector<100x1xf32> to vector<100x180xf32>
    %65 = arith.addf %62, %64 : vector<100x180xf32>
    %c0_29 = arith.constant 0 : index
    %c0_30 = arith.constant 0 : index
    %66 = vector.load %arg14[%c0_29, %c0_30] : memref<179x90xf32, #tpu.memory_space<vmem>>, vector<179x90xf32>
    %67 = vector.extract_strided_slice %65 {offsets = [0, 0], sizes = [100, 179], strides = [1, 1]} : vector<100x180xf32> to vector<100x179xf32>
    %68 = vector.extract_strided_slice %65 {offsets = [0, 1], sizes = [100, 179], strides = [1, 1]} : vector<100x180xf32> to vector<100x179xf32>
    %69 = arith.maximumf %67, %68 : vector<100x179xf32>
    %cst_31 = arith.constant dense<0.000000e+00> : vector<100x90xf32>
    %70 = tpu.matmul %69, %66, %cst_31 {dimension_numbers = #tpu.dot_dimension_numbers<[1], [0], [0], [1], [0, 0, 1, 1], [], []>} : vector<100x179xf32>, vector<179x90xf32>, vector<100x90xf32> -> vector<100x90xf32>
    %cst_32 = arith.constant 0.000000e+00 : f32
    %71 = vector.broadcast %cst_32 : f32 to vector<100x90xf32>
    %72 = arith.cmpf ogt, %70, %71 : vector<100x90xf32>
    %cst_33 = arith.constant 0.000000e+00 : f32
    %73 = vector.broadcast %cst_33 : f32 to vector<100x90xf32>
    %74 = arith.minimumf %70, %73 : vector<100x90xf32>
    %75 = math.exp %74 : vector<100x90xf32>
    %cst_34 = arith.constant 1.000000e+00 : f32
    %76 = vector.broadcast %cst_34 : f32 to vector<100x90xf32>
    %77 = arith.subf %75, %76 : vector<100x90xf32>
    %78 = arith.select %72, %70, %77 : vector<100x90xi1>, vector<100x90xf32>
    %79 = vector.extract_strided_slice %78 {offsets = [0, 0], sizes = [100, 86], strides = [1, 1]} : vector<100x90xf32> to vector<100x86xf32>
    %80 = vector.extract_strided_slice %78 {offsets = [0, 1], sizes = [100, 86], strides = [1, 1]} : vector<100x90xf32> to vector<100x86xf32>
    %81 = vector.extract_strided_slice %78 {offsets = [0, 2], sizes = [100, 86], strides = [1, 1]} : vector<100x90xf32> to vector<100x86xf32>
    %82 = vector.extract_strided_slice %78 {offsets = [0, 3], sizes = [100, 86], strides = [1, 1]} : vector<100x90xf32> to vector<100x86xf32>
    %83 = vector.extract_strided_slice %78 {offsets = [0, 4], sizes = [100, 86], strides = [1, 1]} : vector<100x90xf32> to vector<100x86xf32>
    %84 = tpu.concatenate %79, %80, %81, %82, %83 in 0 : vector<100x86xf32>, vector<100x86xf32>, vector<100x86xf32>, vector<100x86xf32>, vector<100x86xf32> -> vector<500x86xf32>
    %c0_35 = arith.constant 0 : index
    %c0_36 = arith.constant 0 : index
    %85 = vector.load %arg8[%c0_35, %c0_36] : memref<200x500xf32, #tpu.memory_space<vmem>>, vector<200x500xf32>
    %cst_37 = arith.constant dense<0.000000e+00> : vector<200x86xf32>
    %86 = tpu.matmul %85, %84, %cst_37 {dimension_numbers = #tpu.dot_dimension_numbers<[1], [0], [0], [1], [0, 0, 1, 1], [], []>} : vector<200x500xf32>, vector<500x86xf32>, vector<200x86xf32> -> vector<200x86xf32>
    %c0_38 = arith.constant 0 : index
    %c0_39 = arith.constant 0 : index
    %87 = vector.load %arg9[%c0_38, %c0_39] : memref<200x1xf32, #tpu.memory_space<vmem>>, vector<200x1xf32>
    %88 = vector.broadcast %87 : vector<200x1xf32> to vector<200x86xf32>
    %89 = arith.addf %86, %88 : vector<200x86xf32>
    %c0_40 = arith.constant 0 : index
    %c0_41 = arith.constant 0 : index
    %90 = vector.load %arg15[%c0_40, %c0_41] : memref<85x43xf32, #tpu.memory_space<vmem>>, vector<85x43xf32>
    %91 = vector.extract_strided_slice %89 {offsets = [0, 0], sizes = [200, 85], strides = [1, 1]} : vector<200x86xf32> to vector<200x85xf32>
    %92 = vector.extract_strided_slice %89 {offsets = [0, 1], sizes = [200, 85], strides = [1, 1]} : vector<200x86xf32> to vector<200x85xf32>
    %93 = arith.maximumf %91, %92 : vector<200x85xf32>
    %cst_42 = arith.constant dense<0.000000e+00> : vector<200x43xf32>
    %94 = tpu.matmul %93, %90, %cst_42 {dimension_numbers = #tpu.dot_dimension_numbers<[1], [0], [0], [1], [0, 0, 1, 1], [], []>} : vector<200x85xf32>, vector<85x43xf32>, vector<200x43xf32> -> vector<200x43xf32>
    %cst_43 = arith.constant 0.000000e+00 : f32
    %95 = vector.broadcast %cst_43 : f32 to vector<200x43xf32>
    %96 = arith.cmpf ogt, %94, %95 : vector<200x43xf32>
    %cst_44 = arith.constant 0.000000e+00 : f32
    %97 = vector.broadcast %cst_44 : f32 to vector<200x43xf32>
    %98 = arith.minimumf %94, %97 : vector<200x43xf32>
    %99 = math.exp %98 : vector<200x43xf32>
    %cst_45 = arith.constant 1.000000e+00 : f32
    %100 = vector.broadcast %cst_45 : f32 to vector<200x43xf32>
    %101 = arith.subf %99, %100 : vector<200x43xf32>
    %102 = arith.select %96, %94, %101 : vector<200x43xi1>, vector<200x43xf32>
    %c0_46 = arith.constant 0 : index
    %c0_47 = arith.constant 0 : index
    %c0_48 = arith.constant 0 : index
    %103 = vector.load %arg10[%c0_46, %c0_47, %c0_48] : memref<2x200x43xf32, #tpu.memory_space<vmem>>, vector<1x200x43xf32>
    %104 = vector.shape_cast %103 : vector<1x200x43xf32> to vector<200x43xf32>
    %105 = arith.mulf %104, %102 : vector<200x43xf32>
    %cst_49 = arith.constant dense<0.000000e+00> : vector<200xf32>
    %106 = vector.multi_reduction <add>, %105, %cst_49 [1] : vector<200x43xf32> to vector<200xf32>
    %107 = vector.shape_cast %106 : vector<200xf32> to vector<200x1xf32>
    %cst_50 = arith.constant dense<0.000000e+00> : vector<1xf32>
    %108 = vector.multi_reduction <add>, %107, %cst_50 [0] : vector<200x1xf32> to vector<1xf32>
    %109 = vector.shape_cast %108 : vector<1xf32> to vector<1x1xf32>
    %c1 = arith.constant 1 : index
    %c0_51 = arith.constant 0 : index
    %c0_52 = arith.constant 0 : index
    %110 = vector.load %arg10[%c1, %c0_51, %c0_52] : memref<2x200x43xf32, #tpu.memory_space<vmem>>, vector<1x200x43xf32>
    %111 = vector.shape_cast %110 : vector<1x200x43xf32> to vector<200x43xf32>
    %112 = arith.mulf %111, %102 : vector<200x43xf32>
    %cst_53 = arith.constant dense<0.000000e+00> : vector<200xf32>
    %113 = vector.multi_reduction <add>, %112, %cst_53 [1] : vector<200x43xf32> to vector<200xf32>
    %114 = vector.shape_cast %113 : vector<200xf32> to vector<200x1xf32>
    %cst_54 = arith.constant dense<0.000000e+00> : vector<1xf32>
    %115 = vector.multi_reduction <add>, %114, %cst_54 [0] : vector<200x1xf32> to vector<1xf32>
    %116 = vector.shape_cast %115 : vector<1xf32> to vector<1x1xf32>
    %117 = tpu.iota {dimensions = array<i32: 1>} : vector<1x2xi32>
    %c0_i32 = arith.constant 0 : i32
    %118 = vector.broadcast %c0_i32 : i32 to vector<1x2xi32>
    %119 = arith.cmpi eq, %117, %118 : vector<1x2xi32>
    %120 = vector.shape_cast %109 : vector<1x1xf32> to vector<1x1xf32>
    %121 = vector.broadcast %120 : vector<1x1xf32> to vector<1x2xf32>
    %122 = vector.shape_cast %116 : vector<1x1xf32> to vector<1x1xf32>
    %123 = vector.broadcast %122 : vector<1x1xf32> to vector<1x2xf32>
    %124 = arith.select %119, %121, %123 : vector<1x2xi1>, vector<1x2xf32>
    %c0_55 = arith.constant 0 : index
    %c0_56 = arith.constant 0 : index
    %c0_57 = arith.constant 0 : index
    %125 = vector.load %arg11[%c0_55, %c0_56, %c0_57] : memref<1x1x2xf32, #tpu.memory_space<vmem>>, vector<1x1x2xf32>
    %126 = vector.shape_cast %125 : vector<1x1x2xf32> to vector<1x2xf32>
    %127 = arith.addf %124, %126 : vector<1x2xf32>
    %c0_58 = arith.constant 0 : index
    %c0_59 = arith.constant 0 : index
    %c0_60 = arith.constant 0 : index
    %128 = vector.load %arg16[%c0_58, %c0_59, %c0_60] : memref<1x1x2xf32, #tpu.memory_space<vmem>>, vector<1x1x2xf32>
    %129 = vector.shape_cast %128 : vector<1x1x2xf32> to vector<1x2xf32>
    %130 = vector.shape_cast %127 : vector<1x2xf32> to vector<1x1x2xf32>
    tpu.vector_store %arg16[%c0_58, %c0_59, %c0_60], %130 {strides = array<i32>} : memref<1x1x2xf32, #tpu.memory_space<vmem>>, vector<1x1x2xf32>,
    return
  }
  func.func @transform_0(%arg0: i32) -> (i32, i32, i32, i32) {
    %c0_i32 = arith.constant 0 : i32
    %c0_i32_0 = arith.constant 0 : i32
    %c0_i32_1 = arith.constant 0 : i32
    %c0_i32_2 = arith.constant 0 : i32
    return %arg0, %c0_i32, %c0_i32_0, %c0_i32_1 : i32, i32, i32, i32
  }
  func.func @transform_1(%arg0: i32) -> (i32, i32) {
    %c0_i32 = arith.constant 0 : i32
    %c0_i32_0 = arith.constant 0 : i32
    %c0_i32_1 = arith.constant 0 : i32
    return %c0_i32, %c0_i32_0 : i32, i32
  }
  func.func @transform_2(%arg0: i32) -> (i32, i32) {
    %c0_i32 = arith.constant 0 : i32
    %c0_i32_0 = arith.constant 0 : i32
    %c0_i32_1 = arith.constant 0 : i32
    return %c0_i32, %c0_i32_0 : i32, i32
  }
  func.func @transform_3(%arg0: i32) -> (i32, i32) {
    %c0_i32 = arith.constant 0 : i32
    %c0_i32_0 = arith.constant 0 : i32
    %c0_i32_1 = arith.constant 0 : i32
    return %c0_i32, %c0_i32_0 : i32, i32
  }
  func.func @transform_4(%arg0: i32) -> (i32, i32) {
    %c0_i32 = arith.constant 0 : i32
    %c0_i32_0 = arith.constant 0 : i32
    %c0_i32_1 = arith.constant 0 : i32
    return %c0_i32, %c0_i32_0 : i32, i32
  }
  func.func @transform_5(%arg0: i32) -> (i32, i32) {
    %c0_i32 = arith.constant 0 : i32
    %c0_i32_0 = arith.constant 0 : i32
    %c0_i32_1 = arith.constant 0 : i32
    return %c0_i32, %c0_i32_0 : i32, i32
  }
  func.func @transform_6(%arg0: i32) -> (i32, i32) {
    %c0_i32 = arith.constant 0 : i32
    %c0_i32_0 = arith.constant 0 : i32
    %c0_i32_1 = arith.constant 0 : i32
    return %c0_i32, %c0_i32_0 : i32, i32
  }
  func.func @transform_7(%arg0: i32) -> (i32, i32) {
    %c0_i32 = arith.constant 0 : i32
    %c0_i32_0 = arith.constant 0 : i32
    %c0_i32_1 = arith.constant 0 : i32
    return %c0_i32, %c0_i32_0 : i32, i32
  }
  func.func @transform_8(%arg0: i32) -> (i32, i32) {
    %c0_i32 = arith.constant 0 : i32
    %c0_i32_0 = arith.constant 0 : i32
    %c0_i32_1 = arith.constant 0 : i32
    return %c0_i32, %c0_i32_0 : i32, i32
  }
  func.func @transform_9(%arg0: i32) -> (i32, i32, i32) {
    %c0_i32 = arith.constant 0 : i32
    %c0_i32_0 = arith.constant 0 : i32
    %c0_i32_1 = arith.constant 0 : i32
    %c0_i32_2 = arith.constant 0 : i32
    return %c0_i32, %c0_i32_0, %c0_i32_1 : i32, i32, i32
  }
  func.func @transform_10(%arg0: i32) -> (i32, i32, i32) {
    %c0_i32 = arith.constant 0 : i32
    %c0_i32_0 = arith.constant 0 : i32
    %c0_i32_1 = arith.constant 0 : i32
    %c0_i32_2 = arith.constant 0 : i32
    return %c0_i32, %c0_i32_0, %c0_i32_1 : i32, i32, i32
  }
  func.func @transform_11(%arg0: i32) -> (i32, i32) {
    %c0_i32 = arith.constant 0 : i32
    %c0_i32_0 = arith.constant 0 : i32
    %c0_i32_1 = arith.constant 0 : i32
    return %c0_i32, %c0_i32_0 : i32, i32
  }
  func.func @transform_12(%arg0: i32) -> (i32, i32) {
    %c0_i32 = arith.constant 0 : i32
    %c0_i32_0 = arith.constant 0 : i32
    %c0_i32_1 = arith.constant 0 : i32
    return %c0_i32, %c0_i32_0 : i32, i32
  }
  func.func @transform_13(%arg0: i32) -> (i32, i32) {
    %c0_i32 = arith.constant 0 : i32
    %c0_i32_0 = arith.constant 0 : i32
    %c0_i32_1 = arith.constant 0 : i32
    return %c0_i32, %c0_i32_0 : i32, i32
  }
  func.func @transform_14(%arg0: i32) -> (i32, i32) {
    %c0_i32 = arith.constant 0 : i32
    %c0_i32_0 = arith.constant 0 : i32
    %c0_i32_1 = arith.constant 0 : i32
    return %c0_i32, %c0_i32_0 : i32, i32
  }
  func.func @transform_15(%arg0: i32) -> (i32, i32, i32) {
    %c0_i32 = arith.constant 0 : i32
    %c0_i32_0 = arith.constant 0 : i32
    %c0_i32_1 = arith.constant 0 : i32
    return %arg0, %c0_i32, %c0_i32_0 : i32, i32, i32
  }
}

</mosaic_0001>

<llo_original>
// kernel: deepconvnet_forward.1
$region0: #{deepconvnet_forward.1}
  #allocation0 [shape = 'u32[]', space=smem, size = 0x4, offset = 0x4, fixed_abs, tag = 'smem constant byte address 0x4 - core index']
  #allocation1 [shape = 'u32[72,128]{1,0:T(1,128)}', space=vmem, size = 0x9000, scoped, tag = 'internal scratch']
  %s0 = inlined_call_operand.vmem [shape: f32[2,1,2,750], index: 0, kind: input, shape index: {}]
  %s1 = inlined_call_operand.vmem [shape: f32[25,10], index: 1, kind: input, shape index: {}]
  %s2 = inlined_call_operand.vmem [shape: f32[25,1], index: 2, kind: input, shape index: {}]
  %s3 = inlined_call_operand.vmem [shape: f32[50,125], index: 3, kind: input, shape index: {}]
  %s4 = inlined_call_operand.vmem [shape: f32[50,1], index: 4, kind: input, shape index: {}]
  %s5 = inlined_call_operand.vmem [shape: f32[100,250], index: 5, kind: input, shape index: {}]
  %s6 = inlined_call_operand.vmem [shape: f32[100,1], index: 6, kind: input, shape index: {}]
  %s7 = inlined_call_operand.vmem [shape: f32[200,500], index: 7, kind: input, shape index: {}]
  %s8 = inlined_call_operand.vmem [shape: f32[200,1], index: 8, kind: input, shape index: {}]
  %s9 = inlined_call_operand.vmem [shape: f32[2,200,43], index: 9, kind: input, shape index: {}]
  %s10 = inlined_call_operand.vmem [shape: f32[1,1,2], index: 10, kind: input, shape index: {}]
  %s11 = inlined_call_operand.vmem [shape: f32[745,373], index: 11, kind: input, shape index: {}]
  %s12 = inlined_call_operand.vmem [shape: f32[368,184], index: 12, kind: input, shape index: {}]
  %s13 = inlined_call_operand.vmem [shape: f32[179,90], index: 13, kind: input, shape index: {}]
  %s14 = inlined_call_operand.vmem [shape: f32[85,43], index: 14, kind: input, shape index: {}]
  %s15 = inlined_call_operand.hbm [shape: f32[2,1,2], index: 15, kind: output, shape index: {}]
  %s16 = sld [smem:[#allocation0]]
  $region93: #{deepconvnet_forward.1} parent=0
    _
  %s18 = ssub.s32 1, %s16
  %s19 = scalar_select 0, %s18, %s16
  $region1: #{deepconvnet_forward.1} parent=0
    #allocation2 [shape = 'u8[1024]{0}', space=vmem, size = 0x400, scoped, tag = 'output window, operand 0']
    #allocation3 [shape = 's32[2]{0}', space=sflag, size = 0x8, scoped, tag = 'scoped memory for deepconvnet_forward.1']
    %20 = vsyncpa [#allocation3], 0
    %s21 = scalar_lea.sflag [#allocation3], 1
    %22 = vsyncpa %s21, 0
    loop: start=0, step=1, limit=4
    $region2: #{deepconvnet_forward.1} parent=1 // loop_pre_header
      _
    $region3: #{deepconvnet_forward.1} parent=1 // loop_header
      %s24 = sphi 0, %s28
      %p25 = scmp.ge.s32.totalorder %s24, 4
      %s34 = sphi 0, %s36
      %s37 = sphi 0, %s34
      %s38 = sphi 0, %s37
      %s54 = sphi 0, %s38
      %s58 = sphi 0, %s58
      %s60 = sphi 0, %s58
      %s61 = sphi 0, %s60
      %s75 = sphi 0, %s61
      %s79 = sphi 0, %s79
      %s81 = sphi 0, %s79
      %s82 = sphi 0, %s81
      %s96 = sphi 0, %s82
      %s100 = sphi 0, %s100
      %s102 = sphi 0, %s100
      %s103 = sphi 0, %s102
      %s117 = sphi 0, %s103
      %s121 = sphi 0, %s121
      %s123 = sphi 0, %s121
      %s124 = sphi 0, %s123
      %s138 = sphi 0, %s124
      %s142 = sphi 0, %s142
      %s144 = sphi 0, %s142
      %s145 = sphi 0, %s144
      %s159 = sphi 0, %s145
      %s163 = sphi 0, %s163
      %s165 = sphi 0, %s163
      %s166 = sphi 0, %s165
      %s180 = sphi 0, %s166
      %s184 = sphi 0, %s184
      %s186 = sphi 0, %s184
      %s187 = sphi 0, %s186
      %s201 = sphi 0, %s187
      %s205 = sphi 0, %s205
      %s207 = sphi 0, %s205
      %s208 = sphi 0, %s207
      %s222 = sphi 0, %s208
      %s226 = sphi 0, %s226
      %s228 = sphi 0, %s226
      %s229 = sphi 0, %s228
      %s243 = sphi 0, %s229
      %s247 = sphi 0, %s247
      %s249 = sphi 0, %s247
      %s250 = sphi 0, %s249
      %s264 = sphi 0, %s250
      %s268 = sphi 0, %s268
      %s270 = sphi 0, %s268
      %s271 = sphi 0, %s270
      %s285 = sphi 0, %s271
      %s289 = sphi 0, %s289
      %s291 = sphi 0, %s289
      %s292 = sphi 0, %s291
      %s306 = sphi 0, %s292
      %s310 = sphi 0, %s310
      %s312 = sphi 0, %s310
      %s313 = sphi 0, %s312
      %s327 = sphi 0, %s313
      %s331 = sphi 0, %s331
      %s333 = sphi 0, %s331
      %s334 = sphi 0, %s333
      %s348 = sphi 0, %s334
      %s354 = sphi 0, %s356
      %s357 = sphi 0, %s354
      %s358 = sphi 0, %s357
      %s374 = sphi 0, %s358
    $region4: #{deepconvnet_forward.1} parent=1 // loop_header_branch
      %27 = sbr.rel (%p25) target = $region8
    $region5: #{deepconvnet_forward.1} parent=1 // loop_body
      %s29 = ssub.s32 %s24, 1
      %s30 = ssub.s32 %s24, 2
      %s31 = sadd.s32 %s24, 1
      %s32 = ssub.s32 %s24, %s31
      %p33 = scmp.eq.s32.totalorder %s32, 0
      %s35 = sadd.s32 %s34, 1
      %s36 = scalar_select %p33, %s34, %s35
      %p39 = pneg %p33
      %p40 = scmp.eq.s32.totalorder %s24, 1
      %p41 = por %p39, %p40
      %p42 = scmp.ne.s32.totalorder %s34, %s37
      %p43 = scmp.eq.s32.totalorder %s24, 0
      %p44 = por %p42, %p43
      %p45 = scmp.ne.s32.totalorder %s34, %s37
      %p46 = scmp.eq.s32.totalorder %s29, 1
      %p47 = por %p45, %p46
      %p48 = scmp.ne.s32.totalorder %s37, %s38
      %p49 = scmp.eq.s32.totalorder %s29, 0
      %p50 = por %p48, %p49
      %p51 = scmp.ne.s32.totalorder %s37, %s38
      %p52 = scmp.eq.s32.totalorder %s30, 1
      %p53 = por %p51, %p52
      %p55 = scmp.ne.s32.totalorder %s38, %s54
      %p56 = scmp.eq.s32.totalorder %s30, 0
      %p57 = por %p55, %p56
      %s59 = sadd.s32 %s58, 1
      %p62 = scmp.eq.s32.totalorder %s24, 1
      %p63 = scmp.ne.s32.totalorder %s58, %s60
      %p64 = scmp.eq.s32.totalorder %s24, 0
      %p65 = por %p63, %p64
      %p66 = scmp.ne.s32.totalorder %s58, %s60
      %p67 = scmp.eq.s32.totalorder %s29, 1
      %p68 = por %p66, %p67
      %p69 = scmp.ne.s32.totalorder %s60, %s61
      %p70 = scmp.eq.s32.totalorder %s29, 0
      %p71 = por %p69, %p70
      %p72 = scmp.ne.s32.totalorder %s60, %s61
      %p73 = scmp.eq.s32.totalorder %s30, 1
      %p74 = por %p72, %p73
      %p76 = scmp.ne.s32.totalorder %s61, %s75
      %p77 = scmp.eq.s32.totalorder %s30, 0
      %p78 = por %p76, %p77
      %s80 = sadd.s32 %s79, 1
      %p83 = scmp.eq.s32.totalorder %s24, 1
      %p84 = scmp.ne.s32.totalorder %s79, %s81
      %p85 = scmp.eq.s32.totalorder %s24, 0
      %p86 = por %p84, %p85
      %p87 = scmp.ne.s32.totalorder %s79, %s81
      %p88 = scmp.eq.s32.totalorder %s29, 1
      %p89 = por %p87, %p88
      %p90 = scmp.ne.s32.totalorder %s81, %s82
      %p91 = scmp.eq.s32.totalorder %s29, 0
      %p92 = por %p90, %p91
      %p93 = scmp.ne.s32.totalorder %s81, %s82
      %p94 = scmp.eq.s32.totalorder %s30, 1
      %p95 = por %p93, %p94
      %p97 = scmp.ne.s32.totalorder %s82, %s96
      %p98 = scmp.eq.s32.totalorder %s30, 0
      %p99 = por %p97, %p98
      %s101 = sadd.s32 %s100, 1
      %p104 = scmp.eq.s32.totalorder %s24, 1
      %p105 = scmp.ne.s32.totalorder %s100, %s102
      %p106 = scmp.eq.s32.totalorder %s24, 0
      %p107 = por %p105, %p106
      %p108 = scmp.ne.s32.totalorder %s100, %s102
      %p109 = scmp.eq.s32.totalorder %s29, 1
      %p110 = por %p108, %p109
      %p111 = scmp.ne.s32.totalorder %s102, %s103
      %p112 = scmp.eq.s32.totalorder %s29, 0
      %p113 = por %p111, %p112
      %p114 = scmp.ne.s32.totalorder %s102, %s103
      %p115 = scmp.eq.s32.totalorder %s30, 1
      %p116 = por %p114, %p115
      %p118 = scmp.ne.s32.totalorder %s103, %s117
      %p119 = scmp.eq.s32.totalorder %s30, 0
      %p120 = por %p118, %p119
      %s122 = sadd.s32 %s121, 1
      %p125 = scmp.eq.s32.totalorder %s24, 1
      %p126 = scmp.ne.s32.totalorder %s121, %s123
      %p127 = scmp.eq.s32.totalorder %s24, 0
      %p128 = por %p126, %p127
      %p129 = scmp.ne.s32.totalorder %s121, %s123
      %p130 = scmp.eq.s32.totalorder %s29, 1
      %p131 = por %p129, %p130
      %p132 = scmp.ne.s32.totalorder %s123, %s124
      %p133 = scmp.eq.s32.totalorder %s29, 0
      %p134 = por %p132, %p133
      %p135 = scmp.ne.s32.totalorder %s123, %s124
      %p136 = scmp.eq.s32.totalorder %s30, 1
      %p137 = por %p135, %p136
      %p139 = scmp.ne.s32.totalorder %s124, %s138
      %p140 = scmp.eq.s32.totalorder %s30, 0
      %p141 = por %p139, %p140
      %s143 = sadd.s32 %s142, 1
      %p146 = scmp.eq.s32.totalorder %s24, 1
      %p147 = scmp.ne.s32.totalorder %s142, %s144
      %p148 = scmp.eq.s32.totalorder %s24, 0
      %p149 = por %p147, %p148
      %p150 = scmp.ne.s32.totalorder %s142, %s144
      %p151 = scmp.eq.s32.totalorder %s29, 1
      %p152 = por %p150, %p151
      %p153 = scmp.ne.s32.totalorder %s144, %s145
      %p154 = scmp.eq.s32.totalorder %s29, 0
      %p155 = por %p153, %p154
      %p156 = scmp.ne.s32.totalorder %s144, %s145
      %p157 = scmp.eq.s32.totalorder %s30, 1
      %p158 = por %p156, %p157
      %p160 = scmp.ne.s32.totalorder %s145, %s159
      %p161 = scmp.eq.s32.totalorder %s30, 0
      %p162 = por %p160, %p161
      %s164 = sadd.s32 %s163, 1
      %p167 = scmp.eq.s32.totalorder %s24, 1
      %p168 = scmp.ne.s32.totalorder %s163, %s165
      %p169 = scmp.eq.s32.totalorder %s24, 0
      %p170 = por %p168, %p169
      %p171 = scmp.ne.s32.totalorder %s163, %s165
      %p172 = scmp.eq.s32.totalorder %s29, 1
      %p173 = por %p171, %p172
      %p174 = scmp.ne.s32.totalorder %s165, %s166
      %p175 = scmp.eq.s32.totalorder %s29, 0
      %p176 = por %p174, %p175
      %p177 = scmp.ne.s32.totalorder %s165, %s166
      %p178 = scmp.eq.s32.totalorder %s30, 1
      %p179 = por %p177, %p178
      %p181 = scmp.ne.s32.totalorder %s166, %s180
      %p182 = scmp.eq.s32.totalorder %s30, 0
      %p183 = por %p181, %p182
      %s185 = sadd.s32 %s184, 1
      %p188 = scmp.eq.s32.totalorder %s24, 1
      %p189 = scmp.ne.s32.totalorder %s184, %s186
      %p190 = scmp.eq.s32.totalorder %s24, 0
      %p191 = por %p189, %p190
      %p192 = scmp.ne.s32.totalorder %s184, %s186
      %p193 = scmp.eq.s32.totalorder %s29, 1
      %p194 = por %p192, %p193
      %p195 = scmp.ne.s32.totalorder %s186, %s187
      %p196 = scmp.eq.s32.totalorder %s29, 0
      %p197 = por %p195, %p196
      %p198 = scmp.ne.s32.totalorder %s186, %s187
      %p199 = scmp.eq.s32.totalorder %s30, 1
      %p200 = por %p198, %p199
      %p202 = scmp.ne.s32.totalorder %s187, %s201
      %p203 = scmp.eq.s32.totalorder %s30, 0
      %p204 = por %p202, %p203
      %s206 = sadd.s32 %s205, 1
      %p209 = scmp.eq.s32.totalorder %s24, 1
      %p210 = scmp.ne.s32.totalorder %s205, %s207
      %p211 = scmp.eq.s32.totalorder %s24, 0
      %p212 = por %p210, %p211
      %p213 = scmp.ne.s32.totalorder %s205, %s207
      %p214 = scmp.eq.s32.totalorder %s29, 1
      %p215 = por %p213, %p214
      %p216 = scmp.ne.s32.totalorder %s207, %s208
      %p217 = scmp.eq.s32.totalorder %s29, 0
      %p218 = por %p216, %p217
      %p219 = scmp.ne.s32.totalorder %s207, %s208
      %p220 = scmp.eq.s32.totalorder %s30, 1
      %p221 = por %p219, %p220
      %p223 = scmp.ne.s32.totalorder %s208, %s222
      %p224 = scmp.eq.s32.totalorder %s30, 0
      %p225 = por %p223, %p224
      %s227 = sadd.s32 %s226, 1
      %p230 = scmp.eq.s32.totalorder %s24, 1
      %p231 = scmp.ne.s32.totalorder %s226, %s228
      %p232 = scmp.eq.s32.totalorder %s24, 0
      %p233 = por %p231, %p232
      %p234 = scmp.ne.s32.totalorder %s226, %s228
      %p235 = scmp.eq.s32.totalorder %s29, 1
      %p236 = por %p234, %p235
      %p237 = scmp.ne.s32.totalorder %s228, %s229
      %p238 = scmp.eq.s32.totalorder %s29, 0
      %p239 = por %p237, %p238
      %p240 = scmp.ne.s32.totalorder %s228, %s229
      %p241 = scmp.eq.s32.totalorder %s30, 1
      %p242 = por %p240, %p241
      %p244 = scmp.ne.s32.totalorder %s229, %s243
      %p245 = scmp.eq.s32.totalorder %s30, 0
      %p246 = por %p244, %p245
      %s248 = sadd.s32 %s247, 1
      %p251 = scmp.eq.s32.totalorder %s24, 1
      %p252 = scmp.ne.s32.totalorder %s247, %s249
      %p253 = scmp.eq.s32.totalorder %s24, 0
      %p254 = por %p252, %p253
      %p255 = scmp.ne.s32.totalorder %s247, %s249
      %p256 = scmp.eq.s32.totalorder %s29, 1
      %p257 = por %p255, %p256
      %p258 = scmp.ne.s32.totalorder %s249, %s250
      %p259 = scmp.eq.s32.totalorder %s29, 0
      %p260 = por %p258, %p259
      %p261 = scmp.ne.s32.totalorder %s249, %s250
      %p262 = scmp.eq.s32.totalorder %s30, 1
      %p263 = por %p261, %p262
      %p265 = scmp.ne.s32.totalorder %s250, %s264
      %p266 = scmp.eq.s32.totalorder %s30, 0
      %p267 = por %p265, %p266
      %s269 = sadd.s32 %s268, 1
      %p272 = scmp.eq.s32.totalorder %s24, 1
      %p273 = scmp.ne.s32.totalorder %s268, %s270
      %p274 = scmp.eq.s32.totalorder %s24, 0
      %p275 = por %p273, %p274
      %p276 = scmp.ne.s32.totalorder %s268, %s270
      %p277 = scmp.eq.s32.totalorder %s29, 1
      %p278 = por %p276, %p277
      %p279 = scmp.ne.s32.totalorder %s270, %s271
      %p280 = scmp.eq.s32.totalorder %s29, 0
      %p281 = por %p279, %p280
      %p282 = scmp.ne.s32.totalorder %s270, %s271
      %p283 = scmp.eq.s32.totalorder %s30, 1
      %p284 = por %p282, %p283
      %p286 = scmp.ne.s32.totalorder %s271, %s285
      %p287 = scmp.eq.s32.totalorder %s30, 0
      %p288 = por %p286, %p287
      %s290 = sadd.s32 %s289, 1
      %p293 = scmp.eq.s32.totalorder %s24, 1
      %p294 = scmp.ne.s32.totalorder %s289, %s291
      %p295 = scmp.eq.s32.totalorder %s24, 0
      %p296 = por %p294, %p295
      %p297 = scmp.ne.s32.totalorder %s289, %s291
      %p298 = scmp.eq.s32.totalorder %s29, 1
      %p299 = por %p297, %p298
      %p300 = scmp.ne.s32.totalorder %s291, %s292
      %p301 = scmp.eq.s32.totalorder %s29, 0
      %p302 = por %p300, %p301
      %p303 = scmp.ne.s32.totalorder %s291, %s292
      %p304 = scmp.eq.s32.totalorder %s30, 1
      %p305 = por %p303, %p304
      %p307 = scmp.ne.s32.totalorder %s292, %s306
      %p308 = scmp.eq.s32.totalorder %s30, 0
      %p309 = por %p307, %p308
      %s311 = sadd.s32 %s310, 1
      %p314 = scmp.eq.s32.totalorder %s24, 1
      %p315 = scmp.ne.s32.totalorder %s310, %s312
      %p316 = scmp.eq.s32.totalorder %s24, 0
      %p317 = por %p315, %p316
      %p318 = scmp.ne.s32.totalorder %s310, %s312
      %p319 = scmp.eq.s32.totalorder %s29, 1
      %p320 = por %p318, %p319
      %p321 = scmp.ne.s32.totalorder %s312, %s313
      %p322 = scmp.eq.s32.totalorder %s29, 0
      %p323 = por %p321, %p322
      %p324 = scmp.ne.s32.totalorder %s312, %s313
      %p325 = scmp.eq.s32.totalorder %s30, 1
      %p326 = por %p324, %p325
      %p328 = scmp.ne.s32.totalorder %s313, %s327
      %p329 = scmp.eq.s32.totalorder %s30, 0
      %p330 = por %p328, %p329
      %s332 = sadd.s32 %s331, 1
      %p335 = scmp.eq.s32.totalorder %s24, 1
      %p336 = scmp.ne.s32.totalorder %s331, %s333
      %p337 = scmp.eq.s32.totalorder %s24, 0
      %p338 = por %p336, %p337
      %p339 = scmp.ne.s32.totalorder %s331, %s333
      %p340 = scmp.eq.s32.totalorder %s29, 1
      %p341 = por %p339, %p340
      %p342 = scmp.ne.s32.totalorder %s333, %s334
      %p343 = scmp.eq.s32.totalorder %s29, 0
      %p344 = por %p342, %p343
      %p345 = scmp.ne.s32.totalorder %s333, %s334
      %p346 = scmp.eq.s32.totalorder %s30, 1
      %p347 = por %p345, %p346
      %p349 = scmp.ne.s32.totalorder %s334, %s348
      %p350 = scmp.eq.s32.totalorder %s30, 0
      %p351 = por %p349, %p350
      %s352 = ssub.s32 %s24, %s31
      %p353 = scmp.eq.s32.totalorder %s352, 0
      %s355 = sadd.s32 %s354, 1
      %s356 = scalar_select %p353, %s354, %s355
      %p359 = pneg %p353
      %p360 = scmp.eq.s32.totalorder %s24, 1
      %p361 = por %p359, %p360
      %p362 = scmp.ne.s32.totalorder %s354, %s357
      %p363 = scmp.eq.s32.totalorder %s24, 0
      %p364 = por %p362, %p363
      %p365 = scmp.ne.s32.totalorder %s354, %s357
      %p366 = scmp.eq.s32.totalorder %s29, 1
      %p367 = por %p365, %p366
      %p368 = scmp.ne.s32.totalorder %s357, %s358
      %p369 = scmp.eq.s32.totalorder %s29, 0
      %p370 = por %p368, %p369
      %p371 = scmp.ne.s32.totalorder %s357, %s358
      %p372 = scmp.eq.s32.totalorder %s30, 1
      %p373 = por %p371, %p372
      %p375 = scmp.ne.s32.totalorder %s358, %s374
      %p376 = scmp.eq.s32.totalorder %s30, 0
      %p377 = por %p375, %p376
      %p378 = scmp.le.s32.totalorder 1, %s24
      %p379 = scmp.lt.s32.totalorder %s24, 3
      %p380 = pnand %p378, %p379
      %p381 = pneg %p380
      // Predicated region
      $region9: #{deepconvnet_forward.1} parent=5 // pred_check
        _
      $region10: #{deepconvnet_forward.1} parent=5 // pred_check_branch
        %383 = sbr.rel (%p380) target = $region12
      $region11: #{deepconvnet_forward.1} parent=5 // pred_region
        %s384 = ssub.s32 %s24, 1
        // Predicated region
        $region13: #{deepconvnet_forward.1} parent=11 // pred_check
          %p385 = pneg %p71
        $region14: #{deepconvnet_forward.1} parent=11 // pred_check_branch
          %387 = sbr.rel (%p385) target = $region16
        $region15: #{deepconvnet_forward.1} parent=11 // pred_region
          _
        $region16: #{deepconvnet_forward.1} parent=11 // pred_fallthru
          _
        // Predicated region
        $region17: #{deepconvnet_forward.1} parent=11 // pred_check
          %p388 = pneg %p92
        $region18: #{deepconvnet_forward.1} parent=11 // pred_check_branch
          %390 = sbr.rel (%p388) target = $region20
        $region19: #{deepconvnet_forward.1} parent=11 // pred_region
          _
        $region20: #{deepconvnet_forward.1} parent=11 // pred_fallthru
          _
        // Predicated region
        $region21: #{deepconvnet_forward.1} parent=11 // pred_check
          %p391 = pneg %p113
        $region22: #{deepconvnet_forward.1} parent=11 // pred_check_branch
          %393 = sbr.rel (%p391) target = $region24
        $region23: #{deepconvnet_forward.1} parent=11 // pred_region
          _
        $region24: #{deepconvnet_forward.1} parent=11 // pred_fallthru
          _
        // Predicated region
        $region25: #{deepconvnet_forward.1} parent=11 // pred_check
          %p394 = pneg %p134
        $region26: #{deepconvnet_forward.1} parent=11 // pred_check_branch
          %396 = sbr.rel (%p394) target = $region28
        $region27: #{deepconvnet_forward.1} parent=11 // pred_region
          _
        $region28: #{deepconvnet_forward.1} parent=11 // pred_fallthru
          _
        // Predicated region
        $region29: #{deepconvnet_forward.1} parent=11 // pred_check
          %p397 = pneg %p155
        $region30: #{deepconvnet_forward.1} parent=11 // pred_check_branch
          %399 = sbr.rel (%p397) target = $region32
        $region31: #{deepconvnet_forward.1} parent=11 // pred_region
          _
        $region32: #{deepconvnet_forward.1} parent=11 // pred_fallthru
          _
        // Predicated region
        $region33: #{deepconvnet_forward.1} parent=11 // pred_check
          %p400 = pneg %p176
        $region34: #{deepconvnet_forward.1} parent=11 // pred_check_branch
          %402 = sbr.rel (%p400) target = $region36
        $region35: #{deepconvnet_forward.1} parent=11 // pred_region
          _
        $region36: #{deepconvnet_forward.1} parent=11 // pred_fallthru
          _
        // Predicated region
        $region37: #{deepconvnet_forward.1} parent=11 // pred_check
          %p403 = pneg %p197
        $region38: #{deepconvnet_forward.1} parent=11 // pred_check_branch
          %405 = sbr.rel (%p403) target = $region40
        $region39: #{deepconvnet_forward.1} parent=11 // pred_region
          _
        $region40: #{deepconvnet_forward.1} parent=11 // pred_fallthru
          _
        // Predicated region
        $region41: #{deepconvnet_forward.1} parent=11 // pred_check
          %p406 = pneg %p218
        $region42: #{deepconvnet_forward.1} parent=11 // pred_check_branch
          %408 = sbr.rel (%p406) target = $region44
        $region43: #{deepconvnet_forward.1} parent=11 // pred_region
          _
        $region44: #{deepconvnet_forward.1} parent=11 // pred_fallthru
          _
        // Predicated region
        $region45: #{deepconvnet_forward.1} parent=11 // pred_check
          %p409 = pneg %p239
        $region46: #{deepconvnet_forward.1} parent=11 // pred_check_branch
          %411 = sbr.rel (%p409) target = $region48
        $region47: #{deepconvnet_forward.1} parent=11 // pred_region
          _
        $region48: #{deepconvnet_forward.1} parent=11 // pred_fallthru
          _
        // Predicated region
        $region49: #{deepconvnet_forward.1} parent=11 // pred_check
          %p412 = pneg %p260
        $region50: #{deepconvnet_forward.1} parent=11 // pred_check_branch
          %414 = sbr.rel (%p412) target = $region52
        $region51: #{deepconvnet_forward.1} parent=11 // pred_region
          _
        $region52: #{deepconvnet_forward.1} parent=11 // pred_fallthru
          _
        // Predicated region
        $region53: #{deepconvnet_forward.1} parent=11 // pred_check
          %p415 = pneg %p281
        $region54: #{deepconvnet_forward.1} parent=11 // pred_check_branch
          %417 = sbr.rel (%p415) target = $region56
        $region55: #{deepconvnet_forward.1} parent=11 // pred_region
          _
        $region56: #{deepconvnet_forward.1} parent=11 // pred_fallthru
          _
        // Predicated region
        $region57: #{deepconvnet_forward.1} parent=11 // pred_check
          %p418 = pneg %p302
        $region58: #{deepconvnet_forward.1} parent=11 // pred_check_branch
          %420 = sbr.rel (%p418) target = $region60
        $region59: #{deepconvnet_forward.1} parent=11 // pred_region
          _
        $region60: #{deepconvnet_forward.1} parent=11 // pred_fallthru
          _
        // Predicated region
        $region61: #{deepconvnet_forward.1} parent=11 // pred_check
          %p421 = pneg %p323
        $region62: #{deepconvnet_forward.1} parent=11 // pred_check_branch
          %423 = sbr.rel (%p421) target = $region64
        $region63: #{deepconvnet_forward.1} parent=11 // pred_region
          _
        $region64: #{deepconvnet_forward.1} parent=11 // pred_fallthru
          _
        // Predicated region
        $region65: #{deepconvnet_forward.1} parent=11 // pred_check
          %p424 = pneg %p344
        $region66: #{deepconvnet_forward.1} parent=11 // pred_check_branch
          %426 = sbr.rel (%p424) target = $region68
        $region67: #{deepconvnet_forward.1} parent=11 // pred_region
          _
        $region68: #{deepconvnet_forward.1} parent=11 // pred_fallthru
          _
      $region12: #{deepconvnet_forward.1} parent=5 // pred_fallthru
        _
      %p427 = scmp.lt.s32.totalorder %s24, 2
      // Predicated region
      $region69: #{deepconvnet_forward.1} parent=5 // pred_check
        %p428 = pneg %p427
      $region70: #{deepconvnet_forward.1} parent=5 // pred_check_branch
        %430 = sbr.rel (%p428) target = $region72
      $region71: #{deepconvnet_forward.1} parent=5 // pred_region
        // Predicated region
        $region73: #{deepconvnet_forward.1} parent=71 // pred_check
          %p431 = pneg %p44
        $region74: #{deepconvnet_forward.1} parent=71 // pred_check_branch
          %433 = sbr.rel (%p431) target = $region76
        $region75: #{deepconvnet_forward.1} parent=71 // pred_region
          %p434 = scmp.lt.s32.totalorder %s24, 1
          %s435 = scalar_select %p434, %s24, 1
          %s436 = smul.addr %s435, 6
          %s437 = smul.addr %s436, 2
          %s438 = scalar_lea.vmem %s0, %s437
        $region76: #{deepconvnet_forward.1} parent=71 // pred_fallthru
          _
      $region72: #{deepconvnet_forward.1} parent=5 // pred_fallthru
        _
      %p439 = scmp.le.s32.totalorder 1, %s24
      %p440 = scmp.lt.s32.totalorder %s24, 3
      %p441 = pnand %p439, %p440
      %p442 = pneg %p441
      // Predicated region
      $region77: #{deepconvnet_forward.1} parent=5 // pred_check
        _
      $region78: #{deepconvnet_forward.1} parent=5 // pred_check_branch
        %444 = sbr.rel (%p441) target = $region80
      $region79: #{deepconvnet_forward.1} parent=5 // pred_region
        %s445 = ssub.s32 %s24, 1
        %p446 = scmp.lt.s32.totalorder %s29, 1
        %s447 = scalar_select %p446, %s29, 1
        %s448 = smul.addr %s447, 6
        %s449 = smul.addr %s448, 2
        %s450 = scalar_lea.vmem %s0, %s449
        %p451 = pneg %p50
        %p452 = pneg %p47
        %p453 = pneg %p71
        %p454 = pneg %p68
        %p455 = pneg %p92
        %p456 = pneg %p89
        %p457 = pneg %p113
        %p458 = pneg %p110
        %p459 = pneg %p134
        %p460 = pneg %p131
        %p461 = pneg %p155
        %p462 = pneg %p152
        %p463 = pneg %p176
        %p464 = pneg %p173
        %p465 = pneg %p197
        %p466 = pneg %p194
        %p467 = pneg %p218
        %p468 = pneg %p215
        %p469 = pneg %p239
        %p470 = pneg %p236
        %p471 = pneg %p260
        %p472 = pneg %p257
        %p473 = pneg %p281
        %p474 = pneg %p278
        %p475 = pneg %p302
        %p476 = pneg %p299
        %p477 = pneg %p323
        %p478 = pneg %p320
        %p479 = pneg %p344
        %p480 = pneg %p341
        %p481 = pneg %p370
        %p482 = pneg %p367
        %s483 = sand.u32 %s357, 1
        %s484 = scalar_lea.sflag [#allocation3], %s483
        %s485 = sand.u32 %s357, 1
        %s486 = scalar_lea.vmem [#allocation2], %s485
        %p487 = scmp.lt.s32.totalorder %s29, 1
        %s488 = scalar_select %p487, %s29, 1
        %s489 = smul.addr %s488, 6
        %s490 = smul.addr %s489, 2
        %s491 = scalar_lea.vmem %s0, %s490
        %v492 = vld [vmem:[%s491] sm:$0xff]
        %v493 = vld [vmem:[%s491 + $0x8] sm:$0xf]
        %v496 = vperm.slane %v492, 0
        %v497 = vperm.slane %v492, 2
        %v498 = vperm.slane %v492, 4
        %v499 = vperm.slane %v492, 6
        %v500 = vperm.slane %v493, 0
        %v501 = vperm.slane %v493, 2
        %508 = vrot.lane.b32.xlu0 %v496, 127
        %v509 = vpop.permute.xlu0 %508
        %510 = vrot.lane.b32.xlu0 %v497, 127
        %v511 = vpop.permute.xlu0 %510
        %512 = vrot.lane.b32.xlu0 %v498, 127
        %v513 = vpop.permute.xlu0 %512
        %514 = vrot.lane.b32.xlu0 %v499, 127
        %v515 = vpop.permute.xlu0 %514
        %516 = vrot.lane.b32.xlu0 %v500, 127
        %v517 = vpop.permute.xlu0 %516
        %518 = vrot.lane.b32.xlu0 %v501, 127
        %v519 = vpop.permute.xlu0 %518
        %vm520 = vcmask 1039360
        %v521 = vsel %vm520, %v509, %v511
        %v522 = vsel %vm520, %v511, %v513
        %v523 = vsel %vm520, %v513, %v515
        %v524 = vsel %vm520, %v515, %v517
        %v525 = vsel %vm520, %v517, %v519
        %532 = vrot.lane.b32.xlu0 %v496, 126
        %v533 = vpop.permute.xlu0 %532
        %534 = vrot.lane.b32.xlu0 %v497, 126
        %v535 = vpop.permute.xlu0 %534
        %536 = vrot.lane.b32.xlu0 %v498, 126
        %v537 = vpop.permute.xlu0 %536
        %538 = vrot.lane.b32.xlu0 %v499, 126
        %v539 = vpop.permute.xlu0 %538
        %540 = vrot.lane.b32.xlu0 %v500, 126
        %v541 = vpop.permute.xlu0 %540
        %542 = vrot.lane.b32.xlu0 %v501, 126
        %v543 = vpop.permute.xlu0 %542
        %vm544 = vcmask 1031168
        %v545 = vsel %vm544, %v533, %v535
        %v546 = vsel %vm544, %v535, %v537
        %v547 = vsel %vm544, %v537, %v539
        %v548 = vsel %vm544, %v539, %v541
        %v549 = vsel %vm544, %v541, %v543
        %556 = vrot.lane.b32.xlu0 %v496, 125
        %v557 = vpop.permute.xlu0 %556
        %558 = vrot.lane.b32.xlu0 %v497, 125
        %v559 = vpop.permute.xlu0 %558
        %560 = vrot.lane.b32.xlu0 %v498, 125
        %v561 = vpop.permute.xlu0 %560
        %562 = vrot.lane.b32.xlu0 %v499, 125
        %v563 = vpop.permute.xlu0 %562
        %564 = vrot.lane.b32.xlu0 %v500, 125
        %v565 = vpop.permute.xlu0 %564
        %566 = vrot.lane.b32.xlu0 %v501, 125
        %v567 = vpop.permute.xlu0 %566
        %vm568 = vcmask 1022976
        %v569 = vsel %vm568, %v557, %v559
        %v570 = vsel %vm568, %v559, %v561
        %v571 = vsel %vm568, %v561, %v563
        %v572 = vsel %vm568, %v563, %v565
        %v573 = vsel %vm568, %v565, %v567
        %580 = vrot.lane.b32.xlu0 %v496, 124
        %v581 = vpop.permute.xlu0 %580
        %582 = vrot.lane.b32.xlu0 %v497, 124
        %v583 = vpop.permute.xlu0 %582
        %584 = vrot.lane.b32.xlu0 %v498, 124
        %v585 = vpop.permute.xlu0 %584
        %586 = vrot.lane.b32.xlu0 %v499, 124
        %v587 = vpop.permute.xlu0 %586
        %588 = vrot.lane.b32.xlu0 %v500, 124
        %v589 = vpop.permute.xlu0 %588
        %590 = vrot.lane.b32.xlu0 %v501, 124
        %v591 = vpop.permute.xlu0 %590
        %vm592 = vcmask 1014784
        %v593 = vsel %vm592, %v581, %v583
        %v594 = vsel %vm592, %v583, %v585
        %v595 = vsel %vm592, %v585, %v587
        %v596 = vsel %vm592, %v587, %v589
        %v597 = vsel %vm592, %v589, %v591
        %v604 = vperm.slane %v492, 1
        %v605 = vperm.slane %v492, 3
        %v606 = vperm.slane %v492, 5
        %v607 = vperm.slane %v492, 7
        %v608 = vperm.slane %v493, 1
        %v609 = vperm.slane %v493, 3
        %616 = vrot.lane.b32.xlu0 %v604, 127
        %v617 = vpop.permute.xlu0 %616
        %618 = vrot.lane.b32.xlu0 %v605, 127
        %v619 = vpop.permute.xlu0 %618
        %620 = vrot.lane.b32.xlu0 %v606, 127
        %v621 = vpop.permute.xlu0 %620
        %622 = vrot.lane.b32.xlu0 %v607, 127
        %v623 = vpop.permute.xlu0 %622
        %624 = vrot.lane.b32.xlu0 %v608, 127
        %v625 = vpop.permute.xlu0 %624
        %626 = vrot.lane.b32.xlu0 %v609, 127
        %v627 = vpop.permute.xlu0 %626
        %v628 = vsel %vm520, %v617, %v619
        %v629 = vsel %vm520, %v619, %v621
        %v630 = vsel %vm520, %v621, %v623
        %v631 = vsel %vm520, %v623, %v625
        %v632 = vsel %vm520, %v625, %v627
        %639 = vrot.lane.b32.xlu0 %v604, 126
        %v640 = vpop.permute.xlu0 %639
        %641 = vrot.lane.b32.xlu0 %v605, 126
        %v642 = vpop.permute.xlu0 %641
        %643 = vrot.lane.b32.xlu0 %v606, 126
        %v644 = vpop.permute.xlu0 %643
        %645 = vrot.lane.b32.xlu0 %v607, 126
        %v646 = vpop.permute.xlu0 %645
        %647 = vrot.lane.b32.xlu0 %v608, 126
        %v648 = vpop.permute.xlu0 %647
        %649 = vrot.lane.b32.xlu0 %v609, 126
        %v650 = vpop.permute.xlu0 %649
        %v651 = vsel %vm544, %v640, %v642
        %v652 = vsel %vm544, %v642, %v644
        %v653 = vsel %vm544, %v644, %v646
        %v654 = vsel %vm544, %v646, %v648
        %v655 = vsel %vm544, %v648, %v650
        %662 = vrot.lane.b32.xlu0 %v604, 125
        %v663 = vpop.permute.xlu0 %662
        %664 = vrot.lane.b32.xlu0 %v605, 125
        %v665 = vpop.permute.xlu0 %664
        %666 = vrot.lane.b32.xlu0 %v606, 125
        %v667 = vpop.permute.xlu0 %666
        %668 = vrot.lane.b32.xlu0 %v607, 125
        %v669 = vpop.permute.xlu0 %668
        %670 = vrot.lane.b32.xlu0 %v608, 125
        %v671 = vpop.permute.xlu0 %670
        %672 = vrot.lane.b32.xlu0 %v609, 125
        %v673 = vpop.permute.xlu0 %672
        %v674 = vsel %vm568, %v663, %v665
        %v675 = vsel %vm568, %v665, %v667
        %v676 = vsel %vm568, %v667, %v669
        %v677 = vsel %vm568, %v669, %v671
        %v678 = vsel %vm568, %v671, %v673
        %685 = vrot.lane.b32.xlu0 %v604, 124
        %v686 = vpop.permute.xlu0 %685
        %687 = vrot.lane.b32.xlu0 %v605, 124
        %v688 = vpop.permute.xlu0 %687
        %689 = vrot.lane.b32.xlu0 %v606, 124
        %v690 = vpop.permute.xlu0 %689
        %691 = vrot.lane.b32.xlu0 %v607, 124
        %v692 = vpop.permute.xlu0 %691
        %693 = vrot.lane.b32.xlu0 %v608, 124
        %v694 = vpop.permute.xlu0 %693
        %695 = vrot.lane.b32.xlu0 %v609, 124
        %v696 = vpop.permute.xlu0 %695
        %v697 = vsel %vm592, %v686, %v688
        %v698 = vsel %vm592, %v688, %v690
        %v699 = vsel %vm592, %v690, %v692
        %v700 = vsel %vm592, %v692, %v694
        %v701 = vsel %vm592, %v694, %v696
        %vm708 = vcmask 1040384
        %v709 = vsel %vm708, %v496, %v521
        %v710 = vsel %vm708, %v497, %v522
        %v711 = vsel %vm708, %v498, %v523
        %v712 = vsel %vm708, %v499, %v524
        %v713 = vsel %vm708, %v500, %v525
        %v714 = vsel %vm708, %v501, %v519
        %vm715 = vcmask 1041408
        %v716 = vsel %vm715, %v709, %v545
        %v717 = vsel %vm715, %v710, %v546
        %v718 = vsel %vm715, %v711, %v547
        %v719 = vsel %vm715, %v712, %v548
        %v720 = vsel %vm715, %v713, %v549
        %v721 = vsel %vm715, %v714, %v543
        %vm722 = vcmask 1042432
        %v723 = vsel %vm722, %v716, %v569
        %v724 = vsel %vm722, %v717, %v570
        %v725 = vsel %vm722, %v718, %v571
        %v726 = vsel %vm722, %v719, %v572
        %v727 = vsel %vm722, %v720, %v573
        %v728 = vsel %vm722, %v721, %v567
        %vm729 = vcmask 1043456
        %v730 = vsel %vm729, %v723, %v593
        %v731 = vsel %vm729, %v724, %v594
        %v732 = vsel %vm729, %v725, %v595
        %v733 = vsel %vm729, %v726, %v596
        %v734 = vsel %vm729, %v727, %v597
        %v735 = vsel %vm729, %v728, %v591
        %vm736 = vcmask 1044480
        %v737 = vsel %vm736, %v730, %v604
        %v738 = vsel %vm736, %v731, %v605
        %v739 = vsel %vm736, %v732, %v606
        %v740 = vsel %vm736, %v733, %v607
        %v741 = vsel %vm736, %v734, %v608
        %v742 = vsel %vm736, %v735, %v609
        %vm743 = vcmask 1045504
        %v744 = vsel %vm743, %v737, %v628
        %v745 = vsel %vm743, %v738, %v629
        %v746 = vsel %vm743, %v739, %v630
        %v747 = vsel %vm743, %v740, %v631
        %v748 = vsel %vm743, %v741, %v632
        %v749 = vsel %vm743, %v742, %v627
        %vm750 = vcmask 1046528
        %v751 = vsel %vm750, %v744, %v651
        %v752 = vsel %vm750, %v745, %v652
        %v753 = vsel %vm750, %v746, %v653
        %v754 = vsel %vm750, %v747, %v654
        %v755 = vsel %vm750, %v748, %v655
        %v756 = vsel %vm750, %v749, %v650
        %v757 = vsel %vm708, %v674, %v697
        %v758 = vsel %vm708, %v675, %v698
        %v759 = vsel %vm708, %v676, %v699
        %v760 = vsel %vm708, %v677, %v700
        %v761 = vsel %vm708, %v678, %v701
        %v762 = vsel %vm708, %v673, %v696
        %v763 = vld [vmem:[%s1] sm:$0xff]
        %v764 = vld [vmem:[%s1 + $0x8] sm:$0xff]
        %v765 = vld [vmem:[%s1 + $0x10] sm:$0xff]
        %v766 = vld [vmem:[%s1 + $0x18] sm:$0x1]
        %v767 = vld [vmem:[%s2] sm:$0xff]
        %v768 = vld [vmem:[%s2 + $0x8] sm:$0xff]
        %v769 = vld [vmem:[%s2 + $0x10] sm:$0xff]
        %v770 = vld [vmem:[%s2 + $0x18] sm:$0x1]
        %772 = vset.pattern.permute.xlu0 0
        %773 = vperm.xlu0 %772, %v767
        %v774 = vpop.permute.xlu0 %773
        %777 = vset.pattern.permute.xlu0 0
        %778 = vperm.xlu0 %777, %v768
        %v779 = vpop.permute.xlu0 %778
        %782 = vset.pattern.permute.xlu0 0
        %783 = vperm.xlu0 %782, %v769
        %v784 = vpop.permute.xlu0 %783
        %787 = vset.pattern.permute.xlu0 0
        %788 = vperm.xlu0 %787, %v770
        %v789 = vpop.permute.xlu0 %788
        %vm791 = vcmask 80896
        %v793 = vsel %vm791, %v763, 0
        %v796 = vsel %vm791, %v764, 0
        %v799 = vsel %vm791, %v765, 0
        %v802 = vsel %vm791, %v766, 0
        %v805 = vsel %vm715, %v757, 0
        %v808 = vsel %vm715, %v758, 0
        %v811 = vsel %vm715, %v759, 0
        %v814 = vsel %vm715, %v760, 0
        %v817 = vsel %vm715, %v761, 0
        %v820 = vsel %vm715, %v762, 0
        %822 = vmatpush.msra.mxu0 0.0
        %823 = vmatpush.msra.mxu0 0.0
        %824 = vmatpush.msra.mxu0 0.0
        %825 = vmatpush.msra.mxu0 0.0
        %826 = vmatpush.msra.mxu0 0.0
        %827 = vmatpush.msra.mxu0 0.0
        %828 = vmatpush.msra.mxu0 0.0
        %829 = vmatpush.msra.mxu0 0.0
        %830 = vmatpush.msra.mxu0 0.0
        %831 = vmatpush.msra.mxu0 0.0
        %832 = vmatpush.msra.mxu0 0.0
        %833 = vmatpush.msra.mxu0 0.0
        %834 = vmatpush.msra.mxu0 0.0
        %835 = vmatpush.msra.mxu0 0.0
        %836 = vmatpush.msra.mxu0 %v805
        %837 = vmatpush.msra.mxu0 %v751
        %838 = vmatmul.f32.gmra.mxu0 %v793
        %v839 = vpop.f32.mrf.mxu0
        %v840 = vadd.f32 %v774, %v839
        %841 = vmatmul.f32.gmra.mxu0 %v796
        %v842 = vpop.f32.mrf.mxu0
        %v843 = vadd.f32 %v779, %v842
        %844 = vmatmul.f32.gmra.mxu0 %v799
        %v845 = vpop.f32.mrf.mxu0
        %v846 = vadd.f32 %v784, %v845
        %847 = vmatmul.f32.gmra.mxu0 %v802
        %v848 = vpop.f32.mrf.mxu0
        %v849 = vadd.f32 %v789, %v848
        %850 = vdwg.mxu0
        %851 = vmatpush.msra.mxu0 0.0
        %852 = vmatpush.msra.mxu0 0.0
        %853 = vmatpush.msra.mxu0 0.0
        %854 = vmatpush.msra.mxu0 0.0
        %855 = vmatpush.msra.mxu0 0.0
        %856 = vmatpush.msra.mxu0 0.0
        %857 = vmatpush.msra.mxu0 0.0
        %858 = vmatpush.msra.mxu0 0.0
        %859 = vmatpush.msra.mxu0 0.0
        %860 = vmatpush.msra.mxu0 0.0
        %861 = vmatpush.msra.mxu0 0.0
        %862 = vmatpush.msra.mxu0 0.0
        %863 = vmatpush.msra.mxu0 0.0
        %864 = vmatpush.msra.mxu0 0.0
        %865 = vmatpush.msra.mxu0 %v808
        %866 = vmatpush.msra.mxu0 %v752
        %867 = vmatmul.f32.gmra.mxu0 %v793
        %v868 = vpop.f32.mrf.mxu0
        %v869 = vadd.f32 %v774, %v868
        %870 = vmatmul.f32.gmra.mxu0 %v796
        %v871 = vpop.f32.mrf.mxu0
        %v872 = vadd.f32 %v779, %v871
        %873 = vmatmul.f32.gmra.mxu0 %v799
        %v874 = vpop.f32.mrf.mxu0
        %v875 = vadd.f32 %v784, %v874
        %876 = vmatmul.f32.gmra.mxu0 %v802
        %v877 = vpop.f32.mrf.mxu0
        %v878 = vadd.f32 %v789, %v877
        %879 = vdwg.mxu0
        %880 = vmatpush.msra.mxu0 0.0
        %881 = vmatpush.msra.mxu0 0.0
        %882 = vmatpush.msra.mxu0 0.0
        %883 = vmatpush.msra.mxu0 0.0
        %884 = vmatpush.msra.mxu0 0.0
        %885 = vmatpush.msra.mxu0 0.0
        %886 = vmatpush.msra.mxu0 0.0
        %887 = vmatpush.msra.mxu0 0.0
        %888 = vmatpush.msra.mxu0 0.0
        %889 = vmatpush.msra.mxu0 0.0
        %890 = vmatpush.msra.mxu0 0.0
        %891 = vmatpush.msra.mxu0 0.0
        %892 = vmatpush.msra.mxu0 0.0
        %893 = vmatpush.msra.mxu0 0.0
        %894 = vmatpush.msra.mxu0 %v811
        %895 = vmatpush.msra.mxu0 %v753
        %896 = vmatmul.f32.gmra.mxu0 %v793
        %v897 = vpop.f32.mrf.mxu0
        %v898 = vadd.f32 %v774, %v897
        %899 = vmatmul.f32.gmra.mxu0 %v796
        %v900 = vpop.f32.mrf.mxu0
        %v901 = vadd.f32 %v779, %v900
        %902 = vmatmul.f32.gmra.mxu0 %v799
        %v903 = vpop.f32.mrf.mxu0
        %v904 = vadd.f32 %v784, %v903
        %905 = vmatmul.f32.gmra.mxu0 %v802
        %v906 = vpop.f32.mrf.mxu0
        %v907 = vadd.f32 %v789, %v906
        %908 = vdwg.mxu0
        %909 = vmatpush.msra.mxu0 0.0
        %910 = vmatpush.msra.mxu0 0.0
        %911 = vmatpush.msra.mxu0 0.0
        %912 = vmatpush.msra.mxu0 0.0
        %913 = vmatpush.msra.mxu0 0.0
        %914 = vmatpush.msra.mxu0 0.0
        %915 = vmatpush.msra.mxu0 0.0
        %916 = vmatpush.msra.mxu0 0.0
        %917 = vmatpush.msra.mxu0 0.0
        %918 = vmatpush.msra.mxu0 0.0
        %919 = vmatpush.msra.mxu0 0.0
        %920 = vmatpush.msra.mxu0 0.0
        %921 = vmatpush.msra.mxu0 0.0
        %922 = vmatpush.msra.mxu0 0.0
        %923 = vmatpush.msra.mxu0 %v814
        %924 = vmatpush.msra.mxu0 %v754
        %925 = vmatmul.f32.gmra.mxu0 %v793
        %v926 = vpop.f32.mrf.mxu0
        %v927 = vadd.f32 %v774, %v926
        %928 = vmatmul.f32.gmra.mxu0 %v796
        %v929 = vpop.f32.mrf.mxu0
        %v930 = vadd.f32 %v779, %v929
        %931 = vmatmul.f32.gmra.mxu0 %v799
        %v932 = vpop.f32.mrf.mxu0
        %v933 = vadd.f32 %v784, %v932
        %934 = vmatmul.f32.gmra.mxu0 %v802
        %v935 = vpop.f32.mrf.mxu0
        %v936 = vadd.f32 %v789, %v935
        %937 = vdwg.mxu0
        %938 = vmatpush.msra.mxu0 0.0
        %939 = vmatpush.msra.mxu0 0.0
        %940 = vmatpush.msra.mxu0 0.0
        %941 = vmatpush.msra.mxu0 0.0
        %942 = vmatpush.msra.mxu0 0.0
        %943 = vmatpush.msra.mxu0 0.0
        %944 = vmatpush.msra.mxu0 0.0
        %945 = vmatpush.msra.mxu0 0.0
        %946 = vmatpush.msra.mxu0 0.0
        %947 = vmatpush.msra.mxu0 0.0
        %948 = vmatpush.msra.mxu0 0.0
        %949 = vmatpush.msra.mxu0 0.0
        %950 = vmatpush.msra.mxu0 0.0
        %951 = vmatpush.msra.mxu0 0.0
        %952 = vmatpush.msra.mxu0 %v817
        %953 = vmatpush.msra.mxu0 %v755
        %954 = vmatmul.f32.gmra.mxu0 %v793
        %v955 = vpop.f32.mrf.mxu0
        %v956 = vadd.f32 %v774, %v955
        %957 = vmatmul.f32.gmra.mxu0 %v796
        %v958 = vpop.f32.mrf.mxu0
        %v959 = vadd.f32 %v779, %v958
        %960 = vmatmul.f32.gmra.mxu0 %v799
        %v961 = vpop.f32.mrf.mxu0
        %v962 = vadd.f32 %v784, %v961
        %963 = vmatmul.f32.gmra.mxu0 %v802
        %v964 = vpop.f32.mrf.mxu0
        %v965 = vadd.f32 %v789, %v964
        %966 = vdwg.mxu0
        %967 = vmatpush.msra.mxu0 0.0
        %968 = vmatpush.msra.mxu0 0.0
        %969 = vmatpush.msra.mxu0 0.0
        %970 = vmatpush.msra.mxu0 0.0
        %971 = vmatpush.msra.mxu0 0.0
        %972 = vmatpush.msra.mxu0 0.0
        %973 = vmatpush.msra.mxu0 0.0
        %974 = vmatpush.msra.mxu0 0.0
        %975 = vmatpush.msra.mxu0 0.0
        %976 = vmatpush.msra.mxu0 0.0
        %977 = vmatpush.msra.mxu0 0.0
        %978 = vmatpush.msra.mxu0 0.0
        %979 = vmatpush.msra.mxu0 0.0
        %980 = vmatpush.msra.mxu0 0.0
        %981 = vmatpush.msra.mxu0 %v820
        %982 = vmatpush.msra.mxu0 %v756
        %983 = vmatmul.f32.gmra.mxu0 %v793
        %v984 = vpop.f32.mrf.mxu0
        %v985 = vadd.f32 %v774, %v984
        %986 = vmatmul.f32.gmra.mxu0 %v796
        %v987 = vpop.f32.mrf.mxu0
        %v988 = vadd.f32 %v779, %v987
        %989 = vmatmul.f32.gmra.mxu0 %v799
        %v990 = vpop.f32.mrf.mxu0
        %v991 = vadd.f32 %v784, %v990
        %992 = vmatmul.f32.gmra.mxu0 %v802
        %v993 = vpop.f32.mrf.mxu0
        %v994 = vadd.f32 %v789, %v993
        %995 = vdwg.mxu0
        %v996 = vld [vmem:[%s11] sm:$0xff]
        %v997 = vld [vmem:[%s11 + $0x8] sm:$0xff]
        %v998 = vld [vmem:[%s11 + $0x10] sm:$0xff]
        %v999 = vld [vmem:[%s11 + $0x18] sm:$0xff]
        %v1000 = vld [vmem:[%s11 + $0x20] sm:$0xff]
        %v1001 = vld [vmem:[%s11 + $0x28] sm:$0xff]
        %v1002 = vld [vmem:[%s11 + $0x30] sm:$0xff]
        %v1003 = vld [vmem:[%s11 + $0x38] sm:$0xff]
        %v1004 = vld [vmem:[%s11 + $0x40] sm:$0xff]
        %v1005 = vld [vmem:[%s11 + $0x48] sm:$0xff]
        %v1006 = vld [vmem:[%s11 + $0x50] sm:$0xff]
        %v1007 = vld [vmem:[%s11 + $0x58] sm:$0xff]
        %v1008 = vld [vmem:[%s11 + $0x60] sm:$0xff]
        %v1009 = vld [vmem:[%s11 + $0x68] sm:$0xff]
        %v1010 = vld [vmem:[%s11 + $0x70] sm:$0xff]
        %v1011 = vld [vmem:[%s11 + $0x78] sm:$0xff]
        %v1012 = vld [vmem:[%s11 + $0x80] sm:$0xff]
        %v1013 = vld [vmem:[%s11 + $0x88] sm:$0xff]
        %v1014 = vld [vmem:[%s11 + $0x90] sm:$0xff]
        %v1015 = vld [vmem:[%s11 + $0x98] sm:$0xff]
        %v1016 = vld [vmem:[%s11 + $0xa0] sm:$0xff]
        %v1017 = vld [vmem:[%s11 + $0xa8] sm:$0xff]
        %v1018 = vld [vmem:[%s11 + $0xb0] sm:$0xff]
        %v1019 = vld [vmem:[%s11 + $0xb8] sm:$0xff]
        %v1020 = vld [vmem:[%s11 + $0xc0] sm:$0xff]
        %v1021 = vld [vmem:[%s11 + $0xc8] sm:$0xff]
        %v1022 = vld [vmem:[%s11 + $0xd0] sm:$0xff]
        %v1023 = vld [vmem:[%s11 + $0xd8] sm:$0xff]
        %v1024 = vld [vmem:[%s11 + $0xe0] sm:$0xff]
        %v1025 = vld [vmem:[%s11 + $0xe8] sm:$0xff]
        %v1026 = vld [vmem:[%s11 + $0xf0] sm:$0xff]
        %v1027 = vld [vmem:[%s11 + $0xf8] sm:$0xff]
        %v1028 = vld [vmem:[%s11 + $0x100] sm:$0xff]
        %v1029 = vld [vmem:[%s11 + $0x108] sm:$0xff]
        %v1030 = vld [vmem:[%s11 + $0x110] sm:$0xff]
        %v1031 = vld [vmem:[%s11 + $0x118] sm:$0xff]
        %v1032 = vld [vmem:[%s11 + $0x120] sm:$0xff]
        %v1033 = vld [vmem:[%s11 + $0x128] sm:$0xff]
        %v1034 = vld [vmem:[%s11 + $0x130] sm:$0xff]
        %v1035 = vld [vmem:[%s11 + $0x138] sm:$0xff]
        %v1036 = vld [vmem:[%s11 + $0x140] sm:$0xff]
        %v1037 = vld [vmem:[%s11 + $0x148] sm:$0xff]
        %v1038 = vld [vmem:[%s11 + $0x150] sm:$0xff]
        %v1039 = vld [vmem:[%s11 + $0x158] sm:$0xff]
        %v1040 = vld [vmem:[%s11 + $0x160] sm:$0xff]
        %v1041 = vld [vmem:[%s11 + $0x168] sm:$0xff]
        %v1042 = vld [vmem:[%s11 + $0x170] sm:$0xff]
        %v1043 = vld [vmem:[%s11 + $0x178] sm:$0xff]
        %v1044 = vld [vmem:[%s11 + $0x180] sm:$0xff]
        %v1045 = vld [vmem:[%s11 + $0x188] sm:$0xff]
        %v1046 = vld [vmem:[%s11 + $0x190] sm:$0xff]
        %v1047 = vld [vmem:[%s11 + $0x198] sm:$0xff]
        %v1048 = vld [vmem:[%s11 + $0x1a0] sm:$0xff]
        %v1049 = vld [vmem:[%s11 + $0x1a8] sm:$0xff]
        %v1050 = vld [vmem:[%s11 + $0x1b0] sm:$0xff]
        %v1051 = vld [vmem:[%s11 + $0x1b8] sm:$0xff]
        %v1052 = vld [vmem:[%s11 + $0x1c0] sm:$0xff]
        %v1053 = vld [vmem:[%s11 + $0x1c8] sm:$0xff]
        %v1054 = vld [vmem:[%s11 + $0x1d0] sm:$0xff]
        %v1055 = vld [vmem:[%s11 + $0x1d8] sm:$0xff]
        %v1056 = vld [vmem:[%s11 + $0x1e0] sm:$0xff]
        %v1057 = vld [vmem:[%s11 + $0x1e8] sm:$0xff]
        %v1058 = vld [vmem:[%s11 + $0x1f0] sm:$0xff]
        %v1059 = vld [vmem:[%s11 + $0x1f8] sm:$0xff]
        %v1060 = vld [vmem:[%s11 + $0x200] sm:$0xff]
        %v1061 = vld [vmem:[%s11 + $0x208] sm:$0xff]
        %v1062 = vld [vmem:[%s11 + $0x210] sm:$0xff]
        %v1063 = vld [vmem:[%s11 + $0x218] sm:$0xff]
        %v1064 = vld [vmem:[%s11 + $0x220] sm:$0xff]
        %v1065 = vld [vmem:[%s11 + $0x228] sm:$0xff]
        %v1066 = vld [vmem:[%s11 + $0x230] sm:$0xff]
        %v1067 = vld [vmem:[%s11 + $0x238] sm:$0xff]
        %v1068 = vld [vmem:[%s11 + $0x240] sm:$0xff]
        %v1069 = vld [vmem:[%s11 + $0x248] sm:$0xff]
        %v1070 = vld [vmem:[%s11 + $0x250] sm:$0xff]
        %v1071 = vld [vmem:[%s11 + $0x258] sm:$0xff]
        %v1072 = vld [vmem:[%s11 + $0x260] sm:$0xff]
        %v1073 = vld [vmem:[%s11 + $0x268] sm:$0xff]
        %v1074 = vld [vmem:[%s11 + $0x270] sm:$0xff]
        %v1075 = vld [vmem:[%s11 + $0x278] sm:$0xff]
        %v1076 = vld [vmem:[%s11 + $0x280] sm:$0xff]
        %v1077 = vld [vmem:[%s11 + $0x288] sm:$0xff]
        %v1078 = vld [vmem:[%s11 + $0x290] sm:$0xff]
        %v1079 = vld [vmem:[%s11 + $0x298] sm:$0xff]
        %v1080 = vld [vmem:[%s11 + $0x2a0] sm:$0xff]
        %v1081 = vld [vmem:[%s11 + $0x2a8] sm:$0xff]
        %v1082 = vld [vmem:[%s11 + $0x2b0] sm:$0xff]
        %v1083 = vld [vmem:[%s11 + $0x2b8] sm:$0xff]
        %v1084 = vld [vmem:[%s11 + $0x2c0] sm:$0xff]
        %v1085 = vld [vmem:[%s11 + $0x2c8] sm:$0xff]
        %v1086 = vld [vmem:[%s11 + $0x2d0] sm:$0xff]
        %v1087 = vld [vmem:[%s11 + $0x2d8] sm:$0xff]
        %v1088 = vld [vmem:[%s11 + $0x2e0] sm:$0xff]
        %v1089 = vld [vmem:[%s11 + $0x2e8] sm:$0xff]
        %v1090 = vld [vmem:[%s11 + $0x2f0] sm:$0xff]
        %v1091 = vld [vmem:[%s11 + $0x2f8] sm:$0xff]
        %v1092 = vld [vmem:[%s11 + $0x300] sm:$0xff]
        %v1093 = vld [vmem:[%s11 + $0x308] sm:$0xff]
        %v1094 = vld [vmem:[%s11 + $0x310] sm:$0xff]
        %v1095 = vld [vmem:[%s11 + $0x318] sm:$0xff]
        %v1096 = vld [vmem:[%s11 + $0x320] sm:$0xff]
        %v1097 = vld [vmem:[%s11 + $0x328] sm:$0xff]
        %v1098 = vld [vmem:[%s11 + $0x330] sm:$0xff]
        %v1099 = vld [vmem:[%s11 + $0x338] sm:$0xff]
        %v1100 = vld [vmem:[%s11 + $0x340] sm:$0xff]
        %v1101 = vld [vmem:[%s11 + $0x348] sm:$0xff]
        %v1102 = vld [vmem:[%s11 + $0x350] sm:$0xff]
        %v1103 = vld [vmem:[%s11 + $0x358] sm:$0xff]
        %v1104 = vld [vmem:[%s11 + $0x360] sm:$0xff]
        %v1105 = vld [vmem:[%s11 + $0x368] sm:$0xff]
        %v1106 = vld [vmem:[%s11 + $0x370] sm:$0xff]
        %v1107 = vld [vmem:[%s11 + $0x378] sm:$0xff]
        %v1108 = vld [vmem:[%s11 + $0x380] sm:$0xff]
        %v1109 = vld [vmem:[%s11 + $0x388] sm:$0xff]
        %v1110 = vld [vmem:[%s11 + $0x390] sm:$0xff]
        %v1111 = vld [vmem:[%s11 + $0x398] sm:$0xff]
        %v1112 = vld [vmem:[%s11 + $0x3a0] sm:$0xff]
        %v1113 = vld [vmem:[%s11 + $0x3a8] sm:$0xff]
        %v1114 = vld [vmem:[%s11 + $0x3b0] sm:$0xff]
        %v1115 = vld [vmem:[%s11 + $0x3b8] sm:$0xff]
        %v1116 = vld [vmem:[%s11 + $0x3c0] sm:$0xff]
        %v1117 = vld [vmem:[%s11 + $0x3c8] sm:$0xff]
        %v1118 = vld [vmem:[%s11 + $0x3d0] sm:$0xff]
        %v1119 = vld [vmem:[%s11 + $0x3d8] sm:$0xff]
        %v1120 = vld [vmem:[%s11 + $0x3e0] sm:$0xff]
        %v1121 = vld [vmem:[%s11 + $0x3e8] sm:$0xff]
        %v1122 = vld [vmem:[%s11 + $0x3f0] sm:$0xff]
        %v1123 = vld [vmem:[%s11 + $0x3f8] sm:$0xff]
        %v1124 = vld [vmem:[%s11 + $0x400] sm:$0xff]
        %v1125 = vld [vmem:[%s11 + $0x408] sm:$0xff]
        %v1126 = vld [vmem:[%s11 + $0x410] sm:$0xff]
        %v1127 = vld [vmem:[%s11 + $0x418] sm:$0xff]
        %v1128 = vld [vmem:[%s11 + $0x420] sm:$0xff]
        %v1129 = vld [vmem:[%s11 + $0x428] sm:$0xff]
        %v1130 = vld [vmem:[%s11 + $0x430] sm:$0xff]
        %v1131 = vld [vmem:[%s11 + $0x438] sm:$0xff]
        %v1132 = vld [vmem:[%s11 + $0x440] sm:$0xff]
        %v1133 = vld [vmem:[%s11 + $0x448] sm:$0xff]
        %v1134 = vld [vmem:[%s11 + $0x450] sm:$0xff]
        %v1135 = vld [vmem:[%s11 + $0x458] sm:$0xff]
        %v1136 = vld [vmem:[%s11 + $0x460] sm:$0xff]
        %v1137 = vld [vmem:[%s11 + $0x468] sm:$0xff]
        %v1138 = vld [vmem:[%s11 + $0x470] sm:$0xff]
        %v1139 = vld [vmem:[%s11 + $0x478] sm:$0xff]
        %v1140 = vld [vmem:[%s11 + $0x480] sm:$0xff]
        %v1141 = vld [vmem:[%s11 + $0x488] sm:$0xff]
        %v1142 = vld [vmem:[%s11 + $0x490] sm:$0xff]
        %v1143 = vld [vmem:[%s11 + $0x498] sm:$0xff]
        %v1144 = vld [vmem:[%s11 + $0x4a0] sm:$0xff]
        %v1145 = vld [vmem:[%s11 + $0x4a8] sm:$0xff]
        %v1146 = vld [vmem:[%s11 + $0x4b0] sm:$0xff]
        %v1147 = vld [vmem:[%s11 + $0x4b8] sm:$0xff]
        %v1148 = vld [vmem:[%s11 + $0x4c0] sm:$0xff]
        %v1149 = vld [vmem:[%s11 + $0x4c8] sm:$0xff]
        %v1150 = vld [vmem:[%s11 + $0x4d0] sm:$0xff]
        %v1151 = vld [vmem:[%s11 + $0x4d8] sm:$0xff]
        %v1152 = vld [vmem:[%s11 + $0x4e0] sm:$0xff]
        %v1153 = vld [vmem:[%s11 + $0x4e8] sm:$0xff]
        %v1154 = vld [vmem:[%s11 + $0x4f0] sm:$0xff]
        %v1155 = vld [vmem:[%s11 + $0x4f8] sm:$0xff]
        %v1156 = vld [vmem:[%s11 + $0x500] sm:$0xff]
        %v1157 = vld [vmem:[%s11 + $0x508] sm:$0xff]
        %v1158 = vld [vmem:[%s11 + $0x510] sm:$0xff]
        %v1159 = vld [vmem:[%s11 + $0x518] sm:$0xff]
        %v1160 = vld [vmem:[%s11 + $0x520] sm:$0xff]
        %v1161 = vld [vmem:[%s11 + $0x528] sm:$0xff]
        %v1162 = vld [vmem:[%s11 + $0x530] sm:$0xff]
        %v1163 = vld [vmem:[%s11 + $0x538] sm:$0xff]
        %v1164 = vld [vmem:[%s11 + $0x540] sm:$0xff]
        %v1165 = vld [vmem:[%s11 + $0x548] sm:$0xff]
        %v1166 = vld [vmem:[%s11 + $0x550] sm:$0xff]
        %v1167 = vld [vmem:[%s11 + $0x558] sm:$0xff]
        %v1168 = vld [vmem:[%s11 + $0x560] sm:$0xff]
        %v1169 = vld [vmem:[%s11 + $0x568] sm:$0xff]
        %v1170 = vld [vmem:[%s11 + $0x570] sm:$0xff]
        %v1171 = vld [vmem:[%s11 + $0x578] sm:$0xff]
        %v1172 = vld [vmem:[%s11 + $0x580] sm:$0xff]
        %v1173 = vld [vmem:[%s11 + $0x588] sm:$0xff]
        %v1174 = vld [vmem:[%s11 + $0x590] sm:$0xff]
        %v1175 = vld [vmem:[%s11 + $0x598] sm:$0xff]
        %v1176 = vld [vmem:[%s11 + $0x5a0] sm:$0xff]
        %v1177 = vld [vmem:[%s11 + $0x5a8] sm:$0xff]
        %v1178 = vld [vmem:[%s11 + $0x5b0] sm:$0xff]
        %v1179 = vld [vmem:[%s11 + $0x5b8] sm:$0xff]
        %v1180 = vld [vmem:[%s11 + $0x5c0] sm:$0xff]
        %v1181 = vld [vmem:[%s11 + $0x5c8] sm:$0xff]
        %v1182 = vld [vmem:[%s11 + $0x5d0] sm:$0xff]
        %v1183 = vld [vmem:[%s11 + $0x5d8] sm:$0xff]
        %v1184 = vld [vmem:[%s11 + $0x5e0] sm:$0xff]
        %v1185 = vld [vmem:[%s11 + $0x5e8] sm:$0xff]
        %v1186 = vld [vmem:[%s11 + $0x5f0] sm:$0xff]
        %v1187 = vld [vmem:[%s11 + $0x5f8] sm:$0xff]
        %v1188 = vld [vmem:[%s11 + $0x600] sm:$0xff]
        %v1189 = vld [vmem:[%s11 + $0x608] sm:$0xff]
        %v1190 = vld [vmem:[%s11 + $0x610] sm:$0xff]
        %v1191 = vld [vmem:[%s11 + $0x618] sm:$0xff]
        %v1192 = vld [vmem:[%s11 + $0x620] sm:$0xff]
        %v1193 = vld [vmem:[%s11 + $0x628] sm:$0xff]
        %v1194 = vld [vmem:[%s11 + $0x630] sm:$0xff]
        %v1195 = vld [vmem:[%s11 + $0x638] sm:$0xff]
        %v1196 = vld [vmem:[%s11 + $0x640] sm:$0xff]
        %v1197 = vld [vmem:[%s11 + $0x648] sm:$0xff]
        %v1198 = vld [vmem:[%s11 + $0x650] sm:$0xff]
        %v1199 = vld [vmem:[%s11 + $0x658] sm:$0xff]
        %v1200 = vld [vmem:[%s11 + $0x660] sm:$0xff]
        %v1201 = vld [vmem:[%s11 + $0x668] sm:$0xff]
        %v1202 = vld [vmem:[%s11 + $0x670] sm:$0xff]
        %v1203 = vld [vmem:[%s11 + $0x678] sm:$0xff]
        %v1204 = vld [vmem:[%s11 + $0x680] sm:$0xff]
        %v1205 = vld [vmem:[%s11 + $0x688] sm:$0xff]
        %v1206 = vld [vmem:[%s11 + $0x690] sm:$0xff]
        %v1207 = vld [vmem:[%s11 + $0x698] sm:$0xff]
        %v1208 = vld [vmem:[%s11 + $0x6a0] sm:$0xff]
        %v1209 = vld [vmem:[%s11 + $0x6a8] sm:$0xff]
        %v1210 = vld [vmem:[%s11 + $0x6b0] sm:$0xff]
        %v1211 = vld [vmem:[%s11 + $0x6b8] sm:$0xff]
        %v1212 = vld [vmem:[%s11 + $0x6c0] sm:$0xff]
        %v1213 = vld [vmem:[%s11 + $0x6c8] sm:$0xff]
        %v1214 = vld [vmem:[%s11 + $0x6d0] sm:$0xff]
        %v1215 = vld [vmem:[%s11 + $0x6d8] sm:$0xff]
        %v1216 = vld [vmem:[%s11 + $0x6e0] sm:$0xff]
        %v1217 = vld [vmem:[%s11 + $0x6e8] sm:$0xff]
        %v1218 = vld [vmem:[%s11 + $0x6f0] sm:$0xff]
        %v1219 = vld [vmem:[%s11 + $0x6f8] sm:$0xff]
        %v1220 = vld [vmem:[%s11 + $0x700] sm:$0xff]
        %v1221 = vld [vmem:[%s11 + $0x708] sm:$0xff]
        %v1222 = vld [vmem:[%s11 + $0x710] sm:$0xff]
        %v1223 = vld [vmem:[%s11 + $0x718] sm:$0xff]
        %v1224 = vld [vmem:[%s11 + $0x720] sm:$0xff]
        %v1225 = vld [vmem:[%s11 + $0x728] sm:$0xff]
        %v1226 = vld [vmem:[%s11 + $0x730] sm:$0xff]
        %v1227 = vld [vmem:[%s11 + $0x738] sm:$0xff]
        %v1228 = vld [vmem:[%s11 + $0x740] sm:$0xff]
        %v1229 = vld [vmem:[%s11 + $0x748] sm:$0xff]
        %v1230 = vld [vmem:[%s11 + $0x750] sm:$0xff]
        %v1231 = vld [vmem:[%s11 + $0x758] sm:$0xff]
        %v1232 = vld [vmem:[%s11 + $0x760] sm:$0xff]
        %v1233 = vld [vmem:[%s11 + $0x768] sm:$0xff]
        %v1234 = vld [vmem:[%s11 + $0x770] sm:$0xff]
        %v1235 = vld [vmem:[%s11 + $0x778] sm:$0xff]
        %v1236 = vld [vmem:[%s11 + $0x780] sm:$0xff]
        %v1237 = vld [vmem:[%s11 + $0x788] sm:$0xff]
        %v1238 = vld [vmem:[%s11 + $0x790] sm:$0xff]
        %v1239 = vld [vmem:[%s11 + $0x798] sm:$0xff]
        %v1240 = vld [vmem:[%s11 + $0x7a0] sm:$0xff]
        %v1241 = vld [vmem:[%s11 + $0x7a8] sm:$0xff]
        %v1242 = vld [vmem:[%s11 + $0x7b0] sm:$0xff]
        %v1243 = vld [vmem:[%s11 + $0x7b8] sm:$0xff]
        %v1244 = vld [vmem:[%s11 + $0x7c0] sm:$0xff]
        %v1245 = vld [vmem:[%s11 + $0x7c8] sm:$0xff]
        %v1246 = vld [vmem:[%s11 + $0x7d0] sm:$0xff]
        %v1247 = vld [vmem:[%s11 + $0x7d8] sm:$0xff]
        %v1248 = vld [vmem:[%s11 + $0x7e0] sm:$0xff]
        %v1249 = vld [vmem:[%s11 + $0x7e8] sm:$0xff]
        %v1250 = vld [vmem:[%s11 + $0x7f0] sm:$0xff]
        %v1251 = vld [vmem:[%s11 + $0x7f8] sm:$0xff]
        %v1252 = vld [vmem:[%s11 + $0x800] sm:$0xff]
        %v1253 = vld [vmem:[%s11 + $0x808] sm:$0xff]
        %v1254 = vld [vmem:[%s11 + $0x810] sm:$0xff]
        %v1255 = vld [vmem:[%s11 + $0x818] sm:$0xff]
        %v1256 = vld [vmem:[%s11 + $0x820] sm:$0xff]
        %v1257 = vld [vmem:[%s11 + $0x828] sm:$0xff]
        %v1258 = vld [vmem:[%s11 + $0x830] sm:$0xff]
        %v1259 = vld [vmem:[%s11 + $0x838] sm:$0xff]
        %v1260 = vld [vmem:[%s11 + $0x840] sm:$0xff]
        %v1261 = vld [vmem:[%s11 + $0x848] sm:$0xff]
        %v1262 = vld [vmem:[%s11 + $0x850] sm:$0xff]
        %v1263 = vld [vmem:[%s11 + $0x858] sm:$0xff]
        %v1264 = vld [vmem:[%s11 + $0x860] sm:$0xff]
        %v1265 = vld [vmem:[%s11 + $0x868] sm:$0xff]
        %v1266 = vld [vmem:[%s11 + $0x870] sm:$0xff]
        %v1267 = vld [vmem:[%s11 + $0x878] sm:$0xff]
        %v1268 = vld [vmem:[%s11 + $0x880] sm:$0xff]
        %v1269 = vld [vmem:[%s11 + $0x888] sm:$0xff]
        %v1270 = vld [vmem:[%s11 + $0x890] sm:$0xff]
        %v1271 = vld [vmem:[%s11 + $0x898] sm:$0xff]
        %v1272 = vld [vmem:[%s11 + $0x8a0] sm:$0xff]
        %v1273 = vld [vmem:[%s11 + $0x8a8] sm:$0xff]
        %v1274 = vld [vmem:[%s11 + $0x8b0] sm:$0xff]
        %v1275 = vld [vmem:[%s11 + $0x8b8] sm:$0x1]
        %v1276 = vld [vmem:[%s11 + $0x8c0] sm:$0x1]
        %v1277 = vld [vmem:[%s11 + $0x8c8] sm:$0x1]
        %1302 = vrot.lane.b32.xlu0 %v840, 127
        %v1303 = vpop.permute.xlu0 %1302
        %1304 = vrot.lane.b32.xlu0 %v869, 127
        %v1305 = vpop.permute.xlu0 %1304
        %1306 = vrot.lane.b32.xlu0 %v898, 127
        %v1307 = vpop.permute.xlu0 %1306
        %1308 = vrot.lane.b32.xlu0 %v927, 127
        %v1309 = vpop.permute.xlu0 %1308
        %1310 = vrot.lane.b32.xlu0 %v956, 127
        %v1311 = vpop.permute.xlu0 %1310
        %1312 = vrot.lane.b32.xlu0 %v985, 127
        %v1313 = vpop.permute.xlu0 %1312
        %1314 = vrot.lane.b32.xlu0 %v843, 127
        %v1315 = vpop.permute.xlu0 %1314
        %1316 = vrot.lane.b32.xlu0 %v872, 127
        %v1317 = vpop.permute.xlu0 %1316
        %1318 = vrot.lane.b32.xlu0 %v901, 127
        %v1319 = vpop.permute.xlu0 %1318
        %1320 = vrot.lane.b32.xlu0 %v930, 127
        %v1321 = vpop.permute.xlu0 %1320
        %1322 = vrot.lane.b32.xlu0 %v959, 127
        %v1323 = vpop.permute.xlu0 %1322
        %1324 = vrot.lane.b32.xlu0 %v988, 127
        %v1325 = vpop.permute.xlu0 %1324
        %1326 = vrot.lane.b32.xlu0 %v846, 127
        %v1327 = vpop.permute.xlu0 %1326
        %1328 = vrot.lane.b32.xlu0 %v875, 127
        %v1329 = vpop.permute.xlu0 %1328
        %1330 = vrot.lane.b32.xlu0 %v904, 127
        %v1331 = vpop.permute.xlu0 %1330
        %1332 = vrot.lane.b32.xlu0 %v933, 127
        %v1333 = vpop.permute.xlu0 %1332
        %1334 = vrot.lane.b32.xlu0 %v962, 127
        %v1335 = vpop.permute.xlu0 %1334
        %1336 = vrot.lane.b32.xlu0 %v991, 127
        %v1337 = vpop.permute.xlu0 %1336
        %1338 = vrot.lane.b32.xlu0 %v849, 127
        %v1339 = vpop.permute.xlu0 %1338
        %1340 = vrot.lane.b32.xlu0 %v878, 127
        %v1341 = vpop.permute.xlu0 %1340
        %1342 = vrot.lane.b32.xlu0 %v907, 127
        %v1343 = vpop.permute.xlu0 %1342
        %1344 = vrot.lane.b32.xlu0 %v936, 127
        %v1345 = vpop.permute.xlu0 %1344
        %1346 = vrot.lane.b32.xlu0 %v965, 127
        %v1347 = vpop.permute.xlu0 %1346
        %1348 = vrot.lane.b32.xlu0 %v994, 127
        %v1349 = vpop.permute.xlu0 %1348
        %v1350 = vsel %vm520, %v1303, %v1305
        %v1351 = vsel %vm520, %v1305, %v1307
        %v1352 = vsel %vm520, %v1307, %v1309
        %v1353 = vsel %vm520, %v1309, %v1311
        %v1354 = vsel %vm520, %v1311, %v1313
        %v1355 = vsel %vm520, %v1315, %v1317
        %v1356 = vsel %vm520, %v1317, %v1319
        %v1357 = vsel %vm520, %v1319, %v1321
        %v1358 = vsel %vm520, %v1321, %v1323
        %v1359 = vsel %vm520, %v1323, %v1325
        %v1360 = vsel %vm520, %v1327, %v1329
        %v1361 = vsel %vm520, %v1329, %v1331
        %v1362 = vsel %vm520, %v1331, %v1333
        %v1363 = vsel %vm520, %v1333, %v1335
        %v1364 = vsel %vm520, %v1335, %v1337
        %v1365 = vsel %vm520, %v1339, %v1341
        %v1366 = vsel %vm520, %v1341, %v1343
        %v1367 = vsel %vm520, %v1343, %v1345
        %v1368 = vsel %vm520, %v1345, %v1347
        %v1369 = vsel %vm520, %v1347, %v1349
        %v1394 = vmax.f32 %v840, %v1350
        %v1395 = vmax.f32 %v869, %v1351
        %v1396 = vmax.f32 %v898, %v1352
        %v1397 = vmax.f32 %v927, %v1353
        %v1398 = vmax.f32 %v956, %v1354
        %v1399 = vmax.f32 %v985, %v1313
        %v1400 = vmax.f32 %v843, %v1355
        %v1401 = vmax.f32 %v872, %v1356
        %v1402 = vmax.f32 %v901, %v1357
        %v1403 = vmax.f32 %v930, %v1358
        %v1404 = vmax.f32 %v959, %v1359
        %v1405 = vmax.f32 %v988, %v1325
        %v1406 = vmax.f32 %v846, %v1360
        %v1407 = vmax.f32 %v875, %v1361
        %v1408 = vmax.f32 %v904, %v1362
        %v1409 = vmax.f32 %v933, %v1363
        %v1410 = vmax.f32 %v962, %v1364
        %v1411 = vmax.f32 %v991, %v1337
        %v1412 = vmax.f32 %v849, %v1365
        %v1413 = vmax.f32 %v878, %v1366
        %v1414 = vmax.f32 %v907, %v1367
        %v1415 = vmax.f32 %v936, %v1368
        %v1416 = vmax.f32 %v965, %v1369
        %v1417 = vmax.f32 %v994, %v1349
        %vm1418 = vcmask 859136
        %v1420 = vsel %vm1418, %v1399, 0
        %v1423 = vsel %vm1418, %v1405, 0
        %v1426 = vsel %vm1418, %v1411, 0
        %v1429 = vsel %vm1418, %v1417, 0
        %v1432 = vsel %vm708, %v1275, 0
        %v1435 = vsel %vm708, %v1276, 0
        %v1438 = vsel %vm708, %v1277, 0
        %1440 = vmatpush.msra.mxu0 %v1041
        %1441 = vmatpush.msra.mxu0 %v1038
        %1442 = vmatpush.msra.mxu0 %v1035
        %1443 = vmatpush.msra.mxu0 %v1032
        %1444 = vmatpush.msra.mxu0 %v1029
        %1445 = vmatpush.msra.mxu0 %v1026
        %1446 = vmatpush.msra.mxu0 %v1023
        %1447 = vmatpush.msra.mxu0 %v1020
        %1448 = vmatpush.msra.mxu0 %v1017
        %1449 = vmatpush.msra.mxu0 %v1014
        %1450 = vmatpush.msra.mxu0 %v1011
        %1451 = vmatpush.msra.mxu0 %v1008
        %1452 = vmatpush.msra.mxu0 %v1005
        %1453 = vmatpush.msra.mxu0 %v1002
        %1454 = vmatpush.msra.mxu0 %v999
        %1455 = vmatpush.msra.mxu0 %v996
        %1456 = vmatmul.f32.gmra.mxu0 %v1394
        %v1457 = vpop.f32.mrf.mxu0
        %v1458 = vadd.f32 0.0, %v1457
        %1459 = vmatmul.f32.gmra.mxu0 %v1400
        %v1460 = vpop.f32.mrf.mxu0
        %v1461 = vadd.f32 0.0, %v1460
        %1462 = vmatmul.f32.gmra.mxu0 %v1406
        %v1463 = vpop.f32.mrf.mxu0
        %v1464 = vadd.f32 0.0, %v1463
        %1465 = vmatmul.f32.gmra.mxu0 %v1412
        %v1466 = vpop.f32.mrf.mxu0
        %v1467 = vadd.f32 0.0, %v1466
        %1468 = vdwg.mxu0
        %1469 = vmatpush.msra.mxu0 %v1089
        %1470 = vmatpush.msra.mxu0 %v1086
        %1471 = vmatpush.msra.mxu0 %v1083
        %1472 = vmatpush.msra.mxu0 %v1080
        %1473 = vmatpush.msra.mxu0 %v1077
        %1474 = vmatpush.msra.mxu0 %v1074
        %1475 = vmatpush.msra.mxu0 %v1071
        %1476 = vmatpush.msra.mxu0 %v1068
        %1477 = vmatpush.msra.mxu0 %v1065
        %1478 = vmatpush.msra.mxu0 %v1062
        %1479 = vmatpush.msra.mxu0 %v1059
        %1480 = vmatpush.msra.mxu0 %v1056
        %1481 = vmatpush.msra.mxu0 %v1053
        %1482 = vmatpush.msra.mxu0 %v1050
        %1483 = vmatpush.msra.mxu0 %v1047
        %1484 = vmatpush.msra.mxu0 %v1044
        %1485 = vmatmul.f32.gmra.mxu0 %v1395
        %v1486 = vpop.f32.mrf.mxu0
        %v1487 = vadd.f32 %v1458, %v1486
        %1488 = vmatmul.f32.gmra.mxu0 %v1401
        %v1489 = vpop.f32.mrf.mxu0
        %v1490 = vadd.f32 %v1461, %v1489
        %1491 = vmatmul.f32.gmra.mxu0 %v1407
        %v1492 = vpop.f32.mrf.mxu0
        %v1493 = vadd.f32 %v1464, %v1492
        %1494 = vmatmul.f32.gmra.mxu0 %v1413
        %v1495 = vpop.f32.mrf.mxu0
        %v1496 = vadd.f32 %v1467, %v1495
        %1497 = vdwg.mxu0
        %1498 = vmatpush.msra.mxu0 %v1137
        %1499 = vmatpush.msra.mxu0 %v1134
        %1500 = vmatpush.msra.mxu0 %v1131
        %1501 = vmatpush.msra.mxu0 %v1128
        %1502 = vmatpush.msra.mxu0 %v1125
        %1503 = vmatpush.msra.mxu0 %v1122
        %1504 = vmatpush.msra.mxu0 %v1119
        %1505 = vmatpush.msra.mxu0 %v1116
        %1506 = vmatpush.msra.mxu0 %v1113
        %1507 = vmatpush.msra.mxu0 %v1110
        %1508 = vmatpush.msra.mxu0 %v1107
        %1509 = vmatpush.msra.mxu0 %v1104
        %1510 = vmatpush.msra.mxu0 %v1101
        %1511 = vmatpush.msra.mxu0 %v1098
        %1512 = vmatpush.msra.mxu0 %v1095
        %1513 = vmatpush.msra.mxu0 %v1092
        %1514 = vmatmul.f32.gmra.mxu0 %v1396
        %v1515 = vpop.f32.mrf.mxu0
        %v1516 = vadd.f32 %v1487, %v1515
        %1517 = vmatmul.f32.gmra.mxu0 %v1402
        %v1518 = vpop.f32.mrf.mxu0
        %v1519 = vadd.f32 %v1490, %v1518
        %1520 = vmatmul.f32.gmra.mxu0 %v1408
        %v1521 = vpop.f32.mrf.mxu0
        %v1522 = vadd.f32 %v1493, %v1521
        %1523 = vmatmul.f32.gmra.mxu0 %v1414
        %v1524 = vpop.f32.mrf.mxu0
        %v1525 = vadd.f32 %v1496, %v1524
        %1526 = vdwg.mxu0
        %1527 = vmatpush.msra.mxu0 %v1185
        %1528 = vmatpush.msra.mxu0 %v1182
        %1529 = vmatpush.msra.mxu0 %v1179
        %1530 = vmatpush.msra.mxu0 %v1176
        %1531 = vmatpush.msra.mxu0 %v1173
        %1532 = vmatpush.msra.mxu0 %v1170
        %1533 = vmatpush.msra.mxu0 %v1167
        %1534 = vmatpush.msra.mxu0 %v1164
        %1535 = vmatpush.msra.mxu0 %v1161
        %1536 = vmatpush.msra.mxu0 %v1158
        %1537 = vmatpush.msra.mxu0 %v1155
        %1538 = vmatpush.msra.mxu0 %v1152
        %1539 = vmatpush.msra.mxu0 %v1149
        %1540 = vmatpush.msra.mxu0 %v1146
        %1541 = vmatpush.msra.mxu0 %v1143
        %1542 = vmatpush.msra.mxu0 %v1140
        %1543 = vmatmul.f32.gmra.mxu0 %v1397
        %v1544 = vpop.f32.mrf.mxu0
        %v1545 = vadd.f32 %v1516, %v1544
        %1546 = vmatmul.f32.gmra.mxu0 %v1403
        %v1547 = vpop.f32.mrf.mxu0
        %v1548 = vadd.f32 %v1519, %v1547
        %1549 = vmatmul.f32.gmra.mxu0 %v1409
        %v1550 = vpop.f32.mrf.mxu0
        %v1551 = vadd.f32 %v1522, %v1550
        %1552 = vmatmul.f32.gmra.mxu0 %v1415
        %v1553 = vpop.f32.mrf.mxu0
        %v1554 = vadd.f32 %v1525, %v1553
        %1555 = vdwg.mxu0
        %1556 = vmatpush.msra.mxu0 %v1233
        %1557 = vmatpush.msra.mxu0 %v1230
        %1558 = vmatpush.msra.mxu0 %v1227
        %1559 = vmatpush.msra.mxu0 %v1224
        %1560 = vmatpush.msra.mxu0 %v1221
        %1561 = vmatpush.msra.mxu0 %v1218
        %1562 = vmatpush.msra.mxu0 %v1215
        %1563 = vmatpush.msra.mxu0 %v1212
        %1564 = vmatpush.msra.mxu0 %v1209
        %1565 = vmatpush.msra.mxu0 %v1206
        %1566 = vmatpush.msra.mxu0 %v1203
        %1567 = vmatpush.msra.mxu0 %v1200
        %1568 = vmatpush.msra.mxu0 %v1197
        %1569 = vmatpush.msra.mxu0 %v1194
        %1570 = vmatpush.msra.mxu0 %v1191
        %1571 = vmatpush.msra.mxu0 %v1188
        %1572 = vmatmul.f32.gmra.mxu0 %v1398
        %v1573 = vpop.f32.mrf.mxu0
        %v1574 = vadd.f32 %v1545, %v1573
        %1575 = vmatmul.f32.gmra.mxu0 %v1404
        %v1576 = vpop.f32.mrf.mxu0
        %v1577 = vadd.f32 %v1548, %v1576
        %1578 = vmatmul.f32.gmra.mxu0 %v1410
        %v1579 = vpop.f32.mrf.mxu0
        %v1580 = vadd.f32 %v1551, %v1579
        %1581 = vmatmul.f32.gmra.mxu0 %v1416
        %v1582 = vpop.f32.mrf.mxu0
        %v1583 = vadd.f32 %v1554, %v1582
        %1584 = vdwg.mxu0
        %1585 = vmatpush.msra.mxu0 0.0
        %1586 = vmatpush.msra.mxu0 0.0
        %1587 = vmatpush.msra.mxu0 %v1432
        %1588 = vmatpush.msra.mxu0 %v1272
        %1589 = vmatpush.msra.mxu0 %v1269
        %1590 = vmatpush.msra.mxu0 %v1266
        %1591 = vmatpush.msra.mxu0 %v1263
        %1592 = vmatpush.msra.mxu0 %v1260
        %1593 = vmatpush.msra.mxu0 %v1257
        %1594 = vmatpush.msra.mxu0 %v1254
        %1595 = vmatpush.msra.mxu0 %v1251
        %1596 = vmatpush.msra.mxu0 %v1248
        %1597 = vmatpush.msra.mxu0 %v1245
        %1598 = vmatpush.msra.mxu0 %v1242
        %1599 = vmatpush.msra.mxu0 %v1239
        %1600 = vmatpush.msra.mxu0 %v1236
        %1601 = vmatmul.f32.gmra.mxu0 %v1420
        %v1602 = vpop.f32.mrf.mxu0
        %v1603 = vadd.f32 %v1574, %v1602
        %1604 = vmatmul.f32.gmra.mxu0 %v1423
        %v1605 = vpop.f32.mrf.mxu0
        %v1606 = vadd.f32 %v1577, %v1605
        %1607 = vmatmul.f32.gmra.mxu0 %v1426
        %v1608 = vpop.f32.mrf.mxu0
        %v1609 = vadd.f32 %v1580, %v1608
        %1610 = vmatmul.f32.gmra.mxu0 %v1429
        %v1611 = vpop.f32.mrf.mxu0
        %v1612 = vadd.f32 %v1583, %v1611
        %1613 = vdwg.mxu0
        %1614 = vmatpush.msra.mxu0 %v1042
        %1615 = vmatpush.msra.mxu0 %v1039
        %1616 = vmatpush.msra.mxu0 %v1036
        %1617 = vmatpush.msra.mxu0 %v1033
        %1618 = vmatpush.msra.mxu0 %v1030
        %1619 = vmatpush.msra.mxu0 %v1027
        %1620 = vmatpush.msra.mxu0 %v1024
        %1621 = vmatpush.msra.mxu0 %v1021
        %1622 = vmatpush.msra.mxu0 %v1018
        %1623 = vmatpush.msra.mxu0 %v1015
        %1624 = vmatpush.msra.mxu0 %v1012
        %1625 = vmatpush.msra.mxu0 %v1009
        %1626 = vmatpush.msra.mxu0 %v1006
        %1627 = vmatpush.msra.mxu0 %v1003
        %1628 = vmatpush.msra.mxu0 %v1000
        %1629 = vmatpush.msra.mxu0 %v997
        %1630 = vmatmul.f32.gmra.mxu0 %v1394
        %v1631 = vpop.f32.mrf.mxu0
        %v1632 = vadd.f32 0.0, %v1631
        %1633 = vmatmul.f32.gmra.mxu0 %v1400
        %v1634 = vpop.f32.mrf.mxu0
        %v1635 = vadd.f32 0.0, %v1634
        %1636 = vmatmul.f32.gmra.mxu0 %v1406
        %v1637 = vpop.f32.mrf.mxu0
        %v1638 = vadd.f32 0.0, %v1637
        %1639 = vmatmul.f32.gmra.mxu0 %v1412
        %v1640 = vpop.f32.mrf.mxu0
        %v1641 = vadd.f32 0.0, %v1640
        %1642 = vdwg.mxu0
        %1643 = vmatpush.msra.mxu0 %v1090
        %1644 = vmatpush.msra.mxu0 %v1087
        %1645 = vmatpush.msra.mxu0 %v1084
        %1646 = vmatpush.msra.mxu0 %v1081
        %1647 = vmatpush.msra.mxu0 %v1078
        %1648 = vmatpush.msra.mxu0 %v1075
        %1649 = vmatpush.msra.mxu0 %v1072
        %1650 = vmatpush.msra.mxu0 %v1069
        %1651 = vmatpush.msra.mxu0 %v1066
        %1652 = vmatpush.msra.mxu0 %v1063
        %1653 = vmatpush.msra.mxu0 %v1060
        %1654 = vmatpush.msra.mxu0 %v1057
        %1655 = vmatpush.msra.mxu0 %v1054
        %1656 = vmatpush.msra.mxu0 %v1051
        %1657 = vmatpush.msra.mxu0 %v1048
        %1658 = vmatpush.msra.mxu0 %v1045
        %1659 = vmatmul.f32.gmra.mxu0 %v1395
        %v1660 = vpop.f32.mrf.mxu0
        %v1661 = vadd.f32 %v1632, %v1660
        %1662 = vmatmul.f32.gmra.mxu0 %v1401
        %v1663 = vpop.f32.mrf.mxu0
        %v1664 = vadd.f32 %v1635, %v1663
        %1665 = vmatmul.f32.gmra.mxu0 %v1407
        %v1666 = vpop.f32.mrf.mxu0
        %v1667 = vadd.f32 %v1638, %v1666
        %1668 = vmatmul.f32.gmra.mxu0 %v1413
        %v1669 = vpop.f32.mrf.mxu0
        %v1670 = vadd.f32 %v1641, %v1669
        %1671 = vdwg.mxu0
        %1672 = vmatpush.msra.mxu0 %v1138
        %1673 = vmatpush.msra.mxu0 %v1135
        %1674 = vmatpush.msra.mxu0 %v1132
        %1675 = vmatpush.msra.mxu0 %v1129
        %1676 = vmatpush.msra.mxu0 %v1126
        %1677 = vmatpush.msra.mxu0 %v1123
        %1678 = vmatpush.msra.mxu0 %v1120
        %1679 = vmatpush.msra.mxu0 %v1117
        %1680 = vmatpush.msra.mxu0 %v1114
        %1681 = vmatpush.msra.mxu0 %v1111
        %1682 = vmatpush.msra.mxu0 %v1108
        %1683 = vmatpush.msra.mxu0 %v1105
        %1684 = vmatpush.msra.mxu0 %v1102
        %1685 = vmatpush.msra.mxu0 %v1099
        %1686 = vmatpush.msra.mxu0 %v1096
        %1687 = vmatpush.msra.mxu0 %v1093
        %1688 = vmatmul.f32.gmra.mxu0 %v1396
        %v1689 = vpop.f32.mrf.mxu0
        %v1690 = vadd.f32 %v1661, %v1689
        %1691 = vmatmul.f32.gmra.mxu0 %v1402
        %v1692 = vpop.f32.mrf.mxu0
        %v1693 = vadd.f32 %v1664, %v1692
        %1694 = vmatmul.f32.gmra.mxu0 %v1408
        %v1695 = vpop.f32.mrf.mxu0
        %v1696 = vadd.f32 %v1667, %v1695
        %1697 = vmatmul.f32.gmra.mxu0 %v1414
        %v1698 = vpop.f32.mrf.mxu0
        %v1699 = vadd.f32 %v1670, %v1698
        %1700 = vdwg.mxu0
        %1701 = vmatpush.msra.mxu0 %v1186
        %1702 = vmatpush.msra.mxu0 %v1183
        %1703 = vmatpush.msra.mxu0 %v1180
        %1704 = vmatpush.msra.mxu0 %v1177
        %1705 = vmatpush.msra.mxu0 %v1174
        %1706 = vmatpush.msra.mxu0 %v1171
        %1707 = vmatpush.msra.mxu0 %v1168
        %1708 = vmatpush.msra.mxu0 %v1165
        %1709 = vmatpush.msra.mxu0 %v1162
        %1710 = vmatpush.msra.mxu0 %v1159
        %1711 = vmatpush.msra.mxu0 %v1156
        %1712 = vmatpush.msra.mxu0 %v1153
        %1713 = vmatpush.msra.mxu0 %v1150
        %1714 = vmatpush.msra.mxu0 %v1147
        %1715 = vmatpush.msra.mxu0 %v1144
        %1716 = vmatpush.msra.mxu0 %v1141
        %1717 = vmatmul.f32.gmra.mxu0 %v1397
        %v1718 = vpop.f32.mrf.mxu0
        %v1719 = vadd.f32 %v1690, %v1718
        %1720 = vmatmul.f32.gmra.mxu0 %v1403
        %v1721 = vpop.f32.mrf.mxu0
        %v1722 = vadd.f32 %v1693, %v1721
        %1723 = vmatmul.f32.gmra.mxu0 %v1409
        %v1724 = vpop.f32.mrf.mxu0
        %v1725 = vadd.f32 %v1696, %v1724
        %1726 = vmatmul.f32.gmra.mxu0 %v1415
        %v1727 = vpop.f32.mrf.mxu0
        %v1728 = vadd.f32 %v1699, %v1727
        %1729 = vdwg.mxu0
        %1730 = vmatpush.msra.mxu0 %v1234
        %1731 = vmatpush.msra.mxu0 %v1231
        %1732 = vmatpush.msra.mxu0 %v1228
        %1733 = vmatpush.msra.mxu0 %v1225
        %1734 = vmatpush.msra.mxu0 %v1222
        %1735 = vmatpush.msra.mxu0 %v1219
        %1736 = vmatpush.msra.mxu0 %v1216
        %1737 = vmatpush.msra.mxu0 %v1213
        %1738 = vmatpush.msra.mxu0 %v1210
        %1739 = vmatpush.msra.mxu0 %v1207
        %1740 = vmatpush.msra.mxu0 %v1204
        %1741 = vmatpush.msra.mxu0 %v1201
        %1742 = vmatpush.msra.mxu0 %v1198
        %1743 = vmatpush.msra.mxu0 %v1195
        %1744 = vmatpush.msra.mxu0 %v1192
        %1745 = vmatpush.msra.mxu0 %v1189
        %1746 = vmatmul.f32.gmra.mxu0 %v1398
        %v1747 = vpop.f32.mrf.mxu0
        %v1748 = vadd.f32 %v1719, %v1747
        %1749 = vmatmul.f32.gmra.mxu0 %v1404
        %v1750 = vpop.f32.mrf.mxu0
        %v1751 = vadd.f32 %v1722, %v1750
        %1752 = vmatmul.f32.gmra.mxu0 %v1410
        %v1753 = vpop.f32.mrf.mxu0
        %v1754 = vadd.f32 %v1725, %v1753
        %1755 = vmatmul.f32.gmra.mxu0 %v1416
        %v1756 = vpop.f32.mrf.mxu0
        %v1757 = vadd.f32 %v1728, %v1756
        %1758 = vdwg.mxu0
        %1759 = vmatpush.msra.mxu0 0.0
        %1760 = vmatpush.msra.mxu0 0.0
        %1761 = vmatpush.msra.mxu0 %v1435
        %1762 = vmatpush.msra.mxu0 %v1273
        %1763 = vmatpush.msra.mxu0 %v1270
        %1764 = vmatpush.msra.mxu0 %v1267
        %1765 = vmatpush.msra.mxu0 %v1264
        %1766 = vmatpush.msra.mxu0 %v1261
        %1767 = vmatpush.msra.mxu0 %v1258
        %1768 = vmatpush.msra.mxu0 %v1255
        %1769 = vmatpush.msra.mxu0 %v1252
        %1770 = vmatpush.msra.mxu0 %v1249
        %1771 = vmatpush.msra.mxu0 %v1246
        %1772 = vmatpush.msra.mxu0 %v1243
        %1773 = vmatpush.msra.mxu0 %v1240
        %1774 = vmatpush.msra.mxu0 %v1237
        %1775 = vmatmul.f32.gmra.mxu0 %v1420
        %v1776 = vpop.f32.mrf.mxu0
        %v1777 = vadd.f32 %v1748, %v1776
        %1778 = vmatmul.f32.gmra.mxu0 %v1423
        %v1779 = vpop.f32.mrf.mxu0
        %v1780 = vadd.f32 %v1751, %v1779
        %1781 = vmatmul.f32.gmra.mxu0 %v1426
        %v1782 = vpop.f32.mrf.mxu0
        %v1783 = vadd.f32 %v1754, %v1782
        %1784 = vmatmul.f32.gmra.mxu0 %v1429
        %v1785 = vpop.f32.mrf.mxu0
        %v1786 = vadd.f32 %v1757, %v1785
        %1787 = vdwg.mxu0
        %1788 = vmatpush.msra.mxu0 %v1043
        %1789 = vmatpush.msra.mxu0 %v1040
        %1790 = vmatpush.msra.mxu0 %v1037
        %1791 = vmatpush.msra.mxu0 %v1034
        %1792 = vmatpush.msra.mxu0 %v1031
        %1793 = vmatpush.msra.mxu0 %v1028
        %1794 = vmatpush.msra.mxu0 %v1025
        %1795 = vmatpush.msra.mxu0 %v1022
        %1796 = vmatpush.msra.mxu0 %v1019
        %1797 = vmatpush.msra.mxu0 %v1016
        %1798 = vmatpush.msra.mxu0 %v1013
        %1799 = vmatpush.msra.mxu0 %v1010
        %1800 = vmatpush.msra.mxu0 %v1007
        %1801 = vmatpush.msra.mxu0 %v1004
        %1802 = vmatpush.msra.mxu0 %v1001
        %1803 = vmatpush.msra.mxu0 %v998
        %1804 = vmatmul.f32.gmra.mxu0 %v1394
        %v1805 = vpop.f32.mrf.mxu0
        %v1806 = vadd.f32 0.0, %v1805
        %1807 = vmatmul.f32.gmra.mxu0 %v1400
        %v1808 = vpop.f32.mrf.mxu0
        %v1809 = vadd.f32 0.0, %v1808
        %1810 = vmatmul.f32.gmra.mxu0 %v1406
        %v1811 = vpop.f32.mrf.mxu0
        %v1812 = vadd.f32 0.0, %v1811
        %1813 = vmatmul.f32.gmra.mxu0 %v1412
        %v1814 = vpop.f32.mrf.mxu0
        %v1815 = vadd.f32 0.0, %v1814
        %1816 = vdwg.mxu0
        %1817 = vmatpush.msra.mxu0 %v1091
        %1818 = vmatpush.msra.mxu0 %v1088
        %1819 = vmatpush.msra.mxu0 %v1085
        %1820 = vmatpush.msra.mxu0 %v1082
        %1821 = vmatpush.msra.mxu0 %v1079
        %1822 = vmatpush.msra.mxu0 %v1076
        %1823 = vmatpush.msra.mxu0 %v1073
        %1824 = vmatpush.msra.mxu0 %v1070
        %1825 = vmatpush.msra.mxu0 %v1067
        %1826 = vmatpush.msra.mxu0 %v1064
        %1827 = vmatpush.msra.mxu0 %v1061
        %1828 = vmatpush.msra.mxu0 %v1058
        %1829 = vmatpush.msra.mxu0 %v1055
        %1830 = vmatpush.msra.mxu0 %v1052
        %1831 = vmatpush.msra.mxu0 %v1049
        %1832 = vmatpush.msra.mxu0 %v1046
        %1833 = vmatmul.f32.gmra.mxu0 %v1395
        %v1834 = vpop.f32.mrf.mxu0
        %v1835 = vadd.f32 %v1806, %v1834
        %1836 = vmatmul.f32.gmra.mxu0 %v1401
        %v1837 = vpop.f32.mrf.mxu0
        %v1838 = vadd.f32 %v1809, %v1837
        %1839 = vmatmul.f32.gmra.mxu0 %v1407
        %v1840 = vpop.f32.mrf.mxu0
        %v1841 = vadd.f32 %v1812, %v1840
        %1842 = vmatmul.f32.gmra.mxu0 %v1413
        %v1843 = vpop.f32.mrf.mxu0
        %v1844 = vadd.f32 %v1815, %v1843
        %1845 = vdwg.mxu0
        %1846 = vmatpush.msra.mxu0 %v1139
        %1847 = vmatpush.msra.mxu0 %v1136
        %1848 = vmatpush.msra.mxu0 %v1133
        %1849 = vmatpush.msra.mxu0 %v1130
        %1850 = vmatpush.msra.mxu0 %v1127
        %1851 = vmatpush.msra.mxu0 %v1124
        %1852 = vmatpush.msra.mxu0 %v1121
        %1853 = vmatpush.msra.mxu0 %v1118
        %1854 = vmatpush.msra.mxu0 %v1115
        %1855 = vmatpush.msra.mxu0 %v1112
        %1856 = vmatpush.msra.mxu0 %v1109
        %1857 = vmatpush.msra.mxu0 %v1106
        %1858 = vmatpush.msra.mxu0 %v1103
        %1859 = vmatpush.msra.mxu0 %v1100
        %1860 = vmatpush.msra.mxu0 %v1097
        %1861 = vmatpush.msra.mxu0 %v1094
        %1862 = vmatmul.f32.gmra.mxu0 %v1396
        %v1863 = vpop.f32.mrf.mxu0
        %v1864 = vadd.f32 %v1835, %v1863
        %1865 = vmatmul.f32.gmra.mxu0 %v1402
        %v1866 = vpop.f32.mrf.mxu0
        %v1867 = vadd.f32 %v1838, %v1866
        %1868 = vmatmul.f32.gmra.mxu0 %v1408
        %v1869 = vpop.f32.mrf.mxu0
        %v1870 = vadd.f32 %v1841, %v1869
        %1871 = vmatmul.f32.gmra.mxu0 %v1414
        %v1872 = vpop.f32.mrf.mxu0
        %v1873 = vadd.f32 %v1844, %v1872
        %1874 = vdwg.mxu0
        %1875 = vmatpush.msra.mxu0 %v1187
        %1876 = vmatpush.msra.mxu0 %v1184
        %1877 = vmatpush.msra.mxu0 %v1181
        %1878 = vmatpush.msra.mxu0 %v1178
        %1879 = vmatpush.msra.mxu0 %v1175
        %1880 = vmatpush.msra.mxu0 %v1172
        %1881 = vmatpush.msra.mxu0 %v1169
        %1882 = vmatpush.msra.mxu0 %v1166
        %1883 = vmatpush.msra.mxu0 %v1163
        %1884 = vmatpush.msra.mxu0 %v1160
        %1885 = vmatpush.msra.mxu0 %v1157
        %1886 = vmatpush.msra.mxu0 %v1154
        %1887 = vmatpush.msra.mxu0 %v1151
        %1888 = vmatpush.msra.mxu0 %v1148
        %1889 = vmatpush.msra.mxu0 %v1145
        %1890 = vmatpush.msra.mxu0 %v1142
        %1891 = vmatmul.f32.gmra.mxu0 %v1397
        %v1892 = vpop.f32.mrf.mxu0
        %v1893 = vadd.f32 %v1864, %v1892
        %1894 = vmatmul.f32.gmra.mxu0 %v1403
        %v1895 = vpop.f32.mrf.mxu0
        %v1896 = vadd.f32 %v1867, %v1895
        %1897 = vmatmul.f32.gmra.mxu0 %v1409
        %v1898 = vpop.f32.mrf.mxu0
        %v1899 = vadd.f32 %v1870, %v1898
        %1900 = vmatmul.f32.gmra.mxu0 %v1415
        %v1901 = vpop.f32.mrf.mxu0
        %v1902 = vadd.f32 %v1873, %v1901
        %1903 = vdwg.mxu0
        %1904 = vmatpush.msra.mxu0 %v1235
        %1905 = vmatpush.msra.mxu0 %v1232
        %1906 = vmatpush.msra.mxu0 %v1229
        %1907 = vmatpush.msra.mxu0 %v1226
        %1908 = vmatpush.msra.mxu0 %v1223
        %1909 = vmatpush.msra.mxu0 %v1220
        %1910 = vmatpush.msra.mxu0 %v1217
        %1911 = vmatpush.msra.mxu0 %v1214
        %1912 = vmatpush.msra.mxu0 %v1211
        %1913 = vmatpush.msra.mxu0 %v1208
        %1914 = vmatpush.msra.mxu0 %v1205
        %1915 = vmatpush.msra.mxu0 %v1202
        %1916 = vmatpush.msra.mxu0 %v1199
        %1917 = vmatpush.msra.mxu0 %v1196
        %1918 = vmatpush.msra.mxu0 %v1193
        %1919 = vmatpush.msra.mxu0 %v1190
        %1920 = vmatmul.f32.gmra.mxu0 %v1398
        %v1921 = vpop.f32.mrf.mxu0
        %v1922 = vadd.f32 %v1893, %v1921
        %1923 = vmatmul.f32.gmra.mxu0 %v1404
        %v1924 = vpop.f32.mrf.mxu0
        %v1925 = vadd.f32 %v1896, %v1924
        %1926 = vmatmul.f32.gmra.mxu0 %v1410
        %v1927 = vpop.f32.mrf.mxu0
        %v1928 = vadd.f32 %v1899, %v1927
        %1929 = vmatmul.f32.gmra.mxu0 %v1416
        %v1930 = vpop.f32.mrf.mxu0
        %v1931 = vadd.f32 %v1902, %v1930
        %1932 = vdwg.mxu0
        %1933 = vmatpush.msra.mxu0 0.0
        %1934 = vmatpush.msra.mxu0 0.0
        %1935 = vmatpush.msra.mxu0 %v1438
        %1936 = vmatpush.msra.mxu0 %v1274
        %1937 = vmatpush.msra.mxu0 %v1271
        %1938 = vmatpush.msra.mxu0 %v1268
        %1939 = vmatpush.msra.mxu0 %v1265
        %1940 = vmatpush.msra.mxu0 %v1262
        %1941 = vmatpush.msra.mxu0 %v1259
        %1942 = vmatpush.msra.mxu0 %v1256
        %1943 = vmatpush.msra.mxu0 %v1253
        %1944 = vmatpush.msra.mxu0 %v1250
        %1945 = vmatpush.msra.mxu0 %v1247
        %1946 = vmatpush.msra.mxu0 %v1244
        %1947 = vmatpush.msra.mxu0 %v1241
        %1948 = vmatpush.msra.mxu0 %v1238
        %1949 = vmatmul.f32.gmra.mxu0 %v1420
        %v1950 = vpop.f32.mrf.mxu0
        %v1951 = vadd.f32 %v1922, %v1950
        %1952 = vmatmul.f32.gmra.mxu0 %v1423
        %v1953 = vpop.f32.mrf.mxu0
        %v1954 = vadd.f32 %v1925, %v1953
        %1955 = vmatmul.f32.gmra.mxu0 %v1426
        %v1956 = vpop.f32.mrf.mxu0
        %v1957 = vadd.f32 %v1928, %v1956
        %1958 = vmatmul.f32.gmra.mxu0 %v1429
        %v1959 = vpop.f32.mrf.mxu0
        %v1960 = vadd.f32 %v1931, %v1959
        %1961 = vdwg.mxu0
        %vm1962 = vcmp.gt.f32.partialorder %v1603, 0.0
        %vm1963 = vcmp.gt.f32.partialorder %v1777, 0.0
        %vm1964 = vcmp.gt.f32.partialorder %v1951, 0.0
        %vm1965 = vcmp.gt.f32.partialorder %v1606, 0.0
        %vm1966 = vcmp.gt.f32.partialorder %v1780, 0.0
        %vm1967 = vcmp.gt.f32.partialorder %v1954, 0.0
        %vm1968 = vcmp.gt.f32.partialorder %v1609, 0.0
        %vm1969 = vcmp.gt.f32.partialorder %v1783, 0.0
        %vm1970 = vcmp.gt.f32.partialorder %v1957, 0.0
        %vm1971 = vcmp.gt.f32.partialorder %v1612, 0.0
        %vm1972 = vcmp.gt.f32.partialorder %v1786, 0.0
        %vm1973 = vcmp.gt.f32.partialorder %v1960, 0.0
        %v1974 = vmin.f32 %v1603, 0.0
        %v1975 = vmin.f32 %v1777, 0.0
        %v1976 = vmin.f32 %v1951, 0.0
        %v1977 = vmin.f32 %v1606, 0.0
        %v1978 = vmin.f32 %v1780, 0.0
        %v1979 = vmin.f32 %v1954, 0.0
        %v1980 = vmin.f32 %v1609, 0.0
        %v1981 = vmin.f32 %v1783, 0.0
        %v1982 = vmin.f32 %v1957, 0.0
        %v1983 = vmin.f32 %v1612, 0.0
        %v1984 = vmin.f32 %v1786, 0.0
        %v1985 = vmin.f32 %v1960, 0.0
        %v1986 = vmul.f32 %v1974, 1.442695
        %v1987 = vpow.pop %v1986
        %v1988 = vmul.f32 %v1975, 1.442695
        %v1989 = vpow.pop %v1988
        %v1990 = vmul.f32 %v1976, 1.442695
        %v1991 = vpow.pop %v1990
        %v1992 = vmul.f32 %v1977, 1.442695
        %v1993 = vpow.pop %v1992
        %v1994 = vmul.f32 %v1978, 1.442695
        %v1995 = vpow.pop %v1994
        %v1996 = vmul.f32 %v1979, 1.442695
        %v1997 = vpow.pop %v1996
        %v1998 = vmul.f32 %v1980, 1.442695
        %v1999 = vpow.pop %v1998
        %v2000 = vmul.f32 %v1981, 1.442695
        %v2001 = vpow.pop %v2000
        %v2002 = vmul.f32 %v1982, 1.442695
        %v2003 = vpow.pop %v2002
        %v2004 = vmul.f32 %v1983, 1.442695
        %v2005 = vpow.pop %v2004
        %v2006 = vmul.f32 %v1984, 1.442695
        %v2007 = vpow.pop %v2006
        %v2008 = vmul.f32 %v1985, 1.442695
        %v2009 = vpow.pop %v2008
        %v2010 = vsub.f32 %v1987, 1.0
        %v2011 = vsub.f32 %v1989, 1.0
        %v2012 = vsub.f32 %v1991, 1.0
        %v2013 = vsub.f32 %v1993, 1.0
        %v2014 = vsub.f32 %v1995, 1.0
        %v2015 = vsub.f32 %v1997, 1.0
        %v2016 = vsub.f32 %v1999, 1.0
        %v2017 = vsub.f32 %v2001, 1.0
        %v2018 = vsub.f32 %v2003, 1.0
        %v2019 = vsub.f32 %v2005, 1.0
        %v2020 = vsub.f32 %v2007, 1.0
        %v2021 = vsub.f32 %v2009, 1.0
        %v2022 = vsel %vm1962, %v1603, %v2010
        %v2023 = vsel %vm1963, %v1777, %v2011
        %v2024 = vsel %vm1964, %v1951, %v2012
        %v2025 = vsel %vm1965, %v1606, %v2013
        %v2026 = vsel %vm1966, %v1780, %v2014
        %v2027 = vsel %vm1967, %v1954, %v2015
        %v2028 = vsel %vm1968, %v1609, %v2016
        %v2029 = vsel %vm1969, %v1783, %v2017
        %v2030 = vsel %vm1970, %v1957, %v2018
        %v2031 = vsel %vm1971, %v1612, %v2019
        %v2032 = vsel %vm1972, %v1786, %v2020
        %v2033 = vsel %vm1973, %v1960, %v2021
        %v2046 = vrot.slane %v2022, 7
        %v2047 = vrot.slane %v2023, 7
        %v2048 = vrot.slane %v2024, 7
        %v2049 = vrot.slane %v2025, 7
        %v2050 = vsel %vm708, %v2046, %v2049
        %v2051 = vrot.slane %v2026, 7
        %v2052 = vsel %vm708, %v2047, %v2051
        %v2053 = vrot.slane %v2027, 7
        %v2054 = vsel %vm708, %v2048, %v2053
        %v2055 = vrot.slane %v2028, 7
        %v2056 = vsel %vm708, %v2049, %v2055
        %v2057 = vrot.slane %v2029, 7
        %v2058 = vsel %vm708, %v2051, %v2057
        %v2059 = vrot.slane %v2030, 7
        %v2060 = vsel %vm708, %v2053, %v2059
        %v2061 = vrot.slane %v2031, 7
        %v2062 = vsel %vm708, %v2055, %v2061
        %v2063 = vrot.slane %v2032, 7
        %v2064 = vsel %vm708, %v2057, %v2063
        %v2065 = vrot.slane %v2033, 7
        %v2066 = vsel %vm708, %v2059, %v2065
        %2067 = vrot.lane.b32.xlu0 %v2046, 127
        %v2068 = vpop.permute.xlu0 %2067
        %2069 = vrot.lane.b32.xlu0 %v2047, 127
        %v2070 = vpop.permute.xlu0 %2069
        %2071 = vrot.lane.b32.xlu0 %v2048, 127
        %v2072 = vpop.permute.xlu0 %2071
        %2073 = vrot.lane.b32.xlu0 %v2050, 127
        %v2074 = vpop.permute.xlu0 %2073
        %2075 = vrot.lane.b32.xlu0 %v2052, 127
        %v2076 = vpop.permute.xlu0 %2075
        %2077 = vrot.lane.b32.xlu0 %v2054, 127
        %v2078 = vpop.permute.xlu0 %2077
        %2079 = vrot.lane.b32.xlu0 %v2056, 127
        %v2080 = vpop.permute.xlu0 %2079
        %2081 = vrot.lane.b32.xlu0 %v2058, 127
        %v2082 = vpop.permute.xlu0 %2081
        %2083 = vrot.lane.b32.xlu0 %v2060, 127
        %v2084 = vpop.permute.xlu0 %2083
        %2085 = vrot.lane.b32.xlu0 %v2062, 127
        %v2086 = vpop.permute.xlu0 %2085
        %2087 = vrot.lane.b32.xlu0 %v2064, 127
        %v2088 = vpop.permute.xlu0 %2087
        %2089 = vrot.lane.b32.xlu0 %v2066, 127
        %v2090 = vpop.permute.xlu0 %2089
        %v2091 = vsel %vm520, %v2068, %v2070
        %v2092 = vsel %vm520, %v2070, %v2072
        %v2093 = vsel %vm520, %v2074, %v2076
        %v2094 = vsel %vm520, %v2076, %v2078
        %v2095 = vsel %vm520, %v2080, %v2082
        %v2096 = vsel %vm520, %v2082, %v2084
        %v2097 = vsel %vm520, %v2086, %v2088
        %v2098 = vsel %vm520, %v2088, %v2090
        %v2111 = vrot.slane %v2022, 6
        %v2112 = vrot.slane %v2023, 6
        %v2113 = vrot.slane %v2024, 6
        %v2114 = vrot.slane %v2025, 6
        %v2115 = vsel %vm715, %v2111, %v2114
        %v2116 = vrot.slane %v2026, 6
        %v2117 = vsel %vm715, %v2112, %v2116
        %v2118 = vrot.slane %v2027, 6
        %v2119 = vsel %vm715, %v2113, %v2118
        %v2120 = vrot.slane %v2028, 6
        %v2121 = vsel %vm715, %v2114, %v2120
        %v2122 = vrot.slane %v2029, 6
        %v2123 = vsel %vm715, %v2116, %v2122
        %v2124 = vrot.slane %v2030, 6
        %v2125 = vsel %vm715, %v2118, %v2124
        %v2126 = vrot.slane %v2031, 6
        %v2127 = vsel %vm715, %v2120, %v2126
        %v2128 = vrot.slane %v2032, 6
        %v2129 = vsel %vm715, %v2122, %v2128
        %v2130 = vrot.slane %v2033, 6
        %v2131 = vsel %vm715, %v2124, %v2130
        %2132 = vrot.lane.b32.xlu0 %v2111, 126
        %v2133 = vpop.permute.xlu0 %2132
        %2134 = vrot.lane.b32.xlu0 %v2112, 126
        %v2135 = vpop.permute.xlu0 %2134
        %2136 = vrot.lane.b32.xlu0 %v2113, 126
        %v2137 = vpop.permute.xlu0 %2136
        %2138 = vrot.lane.b32.xlu0 %v2115, 126
        %v2139 = vpop.permute.xlu0 %2138
        %2140 = vrot.lane.b32.xlu0 %v2117, 126
        %v2141 = vpop.permute.xlu0 %2140
        %2142 = vrot.lane.b32.xlu0 %v2119, 126
        %v2143 = vpop.permute.xlu0 %2142
        %2144 = vrot.lane.b32.xlu0 %v2121, 126
        %v2145 = vpop.permute.xlu0 %2144
        %2146 = vrot.lane.b32.xlu0 %v2123, 126
        %v2147 = vpop.permute.xlu0 %2146
        %2148 = vrot.lane.b32.xlu0 %v2125, 126
        %v2149 = vpop.permute.xlu0 %2148
        %2150 = vrot.lane.b32.xlu0 %v2127, 126
        %v2151 = vpop.permute.xlu0 %2150
        %2152 = vrot.lane.b32.xlu0 %v2129, 126
        %v2153 = vpop.permute.xlu0 %2152
        %2154 = vrot.lane.b32.xlu0 %v2131, 126
        %v2155 = vpop.permute.xlu0 %2154
        %v2156 = vsel %vm544, %v2133, %v2135
        %v2157 = vsel %vm544, %v2135, %v2137
        %v2158 = vsel %vm544, %v2139, %v2141
        %v2159 = vsel %vm544, %v2141, %v2143
        %v2160 = vsel %vm544, %v2145, %v2147
        %v2161 = vsel %vm544, %v2147, %v2149
        %v2162 = vsel %vm544, %v2151, %v2153
        %v2163 = vsel %vm544, %v2153, %v2155
        %v2176 = vrot.slane %v2022, 5
        %v2177 = vrot.slane %v2023, 5
        %v2178 = vrot.slane %v2024, 5
        %v2179 = vrot.slane %v2025, 5
        %v2180 = vsel %vm722, %v2176, %v2179
        %v2181 = vrot.slane %v2026, 5
        %v2182 = vsel %vm722, %v2177, %v2181
        %v2183 = vrot.slane %v2027, 5
        %v2184 = vsel %vm722, %v2178, %v2183
        %v2185 = vrot.slane %v2028, 5
        %v2186 = vsel %vm722, %v2179, %v2185
        %v2187 = vrot.slane %v2029, 5
        %v2188 = vsel %vm722, %v2181, %v2187
        %v2189 = vrot.slane %v2030, 5
        %v2190 = vsel %vm722, %v2183, %v2189
        %v2191 = vrot.slane %v2031, 5
        %v2192 = vsel %vm722, %v2185, %v2191
        %v2193 = vrot.slane %v2032, 5
        %v2194 = vsel %vm722, %v2187, %v2193
        %v2195 = vrot.slane %v2033, 5
        %v2196 = vsel %vm722, %v2189, %v2195
        %2197 = vrot.lane.b32.xlu0 %v2176, 125
        %v2198 = vpop.permute.xlu0 %2197
        %2199 = vrot.lane.b32.xlu0 %v2177, 125
        %v2200 = vpop.permute.xlu0 %2199
        %2201 = vrot.lane.b32.xlu0 %v2178, 125
        %v2202 = vpop.permute.xlu0 %2201
        %2203 = vrot.lane.b32.xlu0 %v2180, 125
        %v2204 = vpop.permute.xlu0 %2203
        %2205 = vrot.lane.b32.xlu0 %v2182, 125
        %v2206 = vpop.permute.xlu0 %2205
        %2207 = vrot.lane.b32.xlu0 %v2184, 125
        %v2208 = vpop.permute.xlu0 %2207
        %2209 = vrot.lane.b32.xlu0 %v2186, 125
        %v2210 = vpop.permute.xlu0 %2209
        %2211 = vrot.lane.b32.xlu0 %v2188, 125
        %v2212 = vpop.permute.xlu0 %2211
        %2213 = vrot.lane.b32.xlu0 %v2190, 125
        %v2214 = vpop.permute.xlu0 %2213
        %2215 = vrot.lane.b32.xlu0 %v2192, 125
        %v2216 = vpop.permute.xlu0 %2215
        %2217 = vrot.lane.b32.xlu0 %v2194, 125
        %v2218 = vpop.permute.xlu0 %2217
        %2219 = vrot.lane.b32.xlu0 %v2196, 125
        %v2220 = vpop.permute.xlu0 %2219
        %v2221 = vsel %vm568, %v2198, %v2200
        %v2222 = vsel %vm568, %v2200, %v2202
        %v2223 = vsel %vm568, %v2204, %v2206
        %v2224 = vsel %vm568, %v2206, %v2208
        %v2225 = vsel %vm568, %v2210, %v2212
        %v2226 = vsel %vm568, %v2212, %v2214
        %v2227 = vsel %vm568, %v2216, %v2218
        %v2228 = vsel %vm568, %v2218, %v2220
        %v2241 = vrot.slane %v2022, 4
        %v2242 = vrot.slane %v2023, 4
        %v2243 = vrot.slane %v2024, 4
        %v2244 = vrot.slane %v2025, 4
        %v2245 = vsel %vm729, %v2241, %v2244
        %v2246 = vrot.slane %v2026, 4
        %v2247 = vsel %vm729, %v2242, %v2246
        %v2248 = vrot.slane %v2027, 4
        %v2249 = vsel %vm729, %v2243, %v2248
        %v2250 = vrot.slane %v2028, 4
        %v2251 = vsel %vm729, %v2244, %v2250
        %v2252 = vrot.slane %v2029, 4
        %v2253 = vsel %vm729, %v2246, %v2252
        %v2254 = vrot.slane %v2030, 4
        %v2255 = vsel %vm729, %v2248, %v2254
        %v2256 = vrot.slane %v2031, 4
        %v2257 = vsel %vm729, %v2250, %v2256
        %v2258 = vrot.slane %v2032, 4
        %v2259 = vsel %vm729, %v2252, %v2258
        %v2260 = vrot.slane %v2033, 4
        %v2261 = vsel %vm729, %v2254, %v2260
        %2262 = vrot.lane.b32.xlu0 %v2241, 124
        %v2263 = vpop.permute.xlu0 %2262
        %2264 = vrot.lane.b32.xlu0 %v2242, 124
        %v2265 = vpop.permute.xlu0 %2264
        %2266 = vrot.lane.b32.xlu0 %v2243, 124
        %v2267 = vpop.permute.xlu0 %2266
        %2268 = vrot.lane.b32.xlu0 %v2245, 124
        %v2269 = vpop.permute.xlu0 %2268
        %2270 = vrot.lane.b32.xlu0 %v2247, 124
        %v2271 = vpop.permute.xlu0 %2270
        %2272 = vrot.lane.b32.xlu0 %v2249, 124
        %v2273 = vpop.permute.xlu0 %2272
        %2274 = vrot.lane.b32.xlu0 %v2251, 124
        %v2275 = vpop.permute.xlu0 %2274
        %2276 = vrot.lane.b32.xlu0 %v2253, 124
        %v2277 = vpop.permute.xlu0 %2276
        %2278 = vrot.lane.b32.xlu0 %v2255, 124
        %v2279 = vpop.permute.xlu0 %2278
        %2280 = vrot.lane.b32.xlu0 %v2257, 124
        %v2281 = vpop.permute.xlu0 %2280
        %2282 = vrot.lane.b32.xlu0 %v2259, 124
        %v2283 = vpop.permute.xlu0 %2282
        %2284 = vrot.lane.b32.xlu0 %v2261, 124
        %v2285 = vpop.permute.xlu0 %2284
        %v2286 = vsel %vm592, %v2263, %v2265
        %v2287 = vsel %vm592, %v2265, %v2267
        %v2288 = vsel %vm592, %v2269, %v2271
        %v2289 = vsel %vm592, %v2271, %v2273
        %v2290 = vsel %vm592, %v2275, %v2277
        %v2291 = vsel %vm592, %v2277, %v2279
        %v2292 = vsel %vm592, %v2281, %v2283
        %v2293 = vsel %vm592, %v2283, %v2285
        %v2303 = vsel %vm708, %v2031, %v2091
        %v2304 = vsel %vm708, %v2032, %v2092
        %v2305 = vsel %vm708, %v2033, %v2072
        %v2306 = vsel %vm715, %v2097, %v2156
        %v2307 = vsel %vm715, %v2098, %v2157
        %v2308 = vsel %vm715, %v2090, %v2137
        %v2309 = vsel %vm722, %v2162, %v2221
        %v2310 = vsel %vm722, %v2163, %v2222
        %v2311 = vsel %vm722, %v2155, %v2202
        %v2312 = vsel %vm729, %v2227, %v2286
        %v2313 = vsel %vm729, %v2228, %v2287
        %v2314 = vsel %vm729, %v2220, %v2267
        %v2315 = vld [vmem:[%s3] sm:$0xff]
        %v2316 = vld [vmem:[%s3 + $0x8] sm:$0xff]
        %v2317 = vld [vmem:[%s3 + $0x10] sm:$0xff]
        %v2318 = vld [vmem:[%s3 + $0x18] sm:$0xff]
        %v2319 = vld [vmem:[%s3 + $0x20] sm:$0xff]
        %v2320 = vld [vmem:[%s3 + $0x28] sm:$0xff]
        %v2321 = vld [vmem:[%s3 + $0x30] sm:$0x3]
        %v2322 = vld [vmem:[%s4] sm:$0xff]
        %v2323 = vld [vmem:[%s4 + $0x8] sm:$0xff]
        %v2324 = vld [vmem:[%s4 + $0x10] sm:$0xff]
        %v2325 = vld [vmem:[%s4 + $0x18] sm:$0xff]
        %v2326 = vld [vmem:[%s4 + $0x20] sm:$0xff]
        %v2327 = vld [vmem:[%s4 + $0x28] sm:$0xff]
        %v2328 = vld [vmem:[%s4 + $0x30] sm:$0x3]
        %2330 = vset.pattern.permute.xlu0 0
        %2331 = vperm.xlu0 %2330, %v2322
        %v2332 = vpop.permute.xlu0 %2331
        %2335 = vset.pattern.permute.xlu0 0
        %2336 = vperm.xlu0 %2335, %v2323
        %v2337 = vpop.permute.xlu0 %2336
        %2340 = vset.pattern.permute.xlu0 0
        %2341 = vperm.xlu0 %2340, %v2324
        %v2342 = vpop.permute.xlu0 %2341
        %2345 = vset.pattern.permute.xlu0 0
        %2346 = vperm.xlu0 %2345, %v2325
        %v2347 = vpop.permute.xlu0 %2346
        %2350 = vset.pattern.permute.xlu0 0
        %2351 = vperm.xlu0 %2350, %v2326
        %v2352 = vpop.permute.xlu0 %2351
        %2355 = vset.pattern.permute.xlu0 0
        %2356 = vperm.xlu0 %2355, %v2327
        %v2357 = vpop.permute.xlu0 %2356
        %2360 = vset.pattern.permute.xlu0 0
        %2361 = vperm.xlu0 %2360, %v2328
        %v2362 = vpop.permute.xlu0 %2361
        %v2365 = vsel %vm568, %v2315, 0
        %v2368 = vsel %vm568, %v2316, 0
        %v2371 = vsel %vm568, %v2317, 0
        %v2374 = vsel %vm568, %v2318, 0
        %v2377 = vsel %vm568, %v2319, 0
        %v2380 = vsel %vm568, %v2320, 0
        %v2383 = vsel %vm568, %v2321, 0
        %v2385 = vsel %vm736, %v2292, 0
        %v2387 = vsel %vm736, %v2293, 0
        %v2389 = vsel %vm736, %v2285, 0
        %2391 = vmatpush.msra.mxu0 %v2385
        %2392 = vmatpush.msra.mxu0 %v2290
        %2393 = vmatpush.msra.mxu0 %v2288
        %2394 = vmatpush.msra.mxu0 %v2312
        %2395 = vmatpush.msra.mxu0 %v2225
        %2396 = vmatpush.msra.mxu0 %v2223
        %2397 = vmatpush.msra.mxu0 %v2309
        %2398 = vmatpush.msra.mxu0 %v2160
        %2399 = vmatpush.msra.mxu0 %v2158
        %2400 = vmatpush.msra.mxu0 %v2306
        %2401 = vmatpush.msra.mxu0 %v2095
        %2402 = vmatpush.msra.mxu0 %v2093
        %2403 = vmatpush.msra.mxu0 %v2303
        %2404 = vmatpush.msra.mxu0 %v2028
        %2405 = vmatpush.msra.mxu0 %v2025
        %2406 = vmatpush.msra.mxu0 %v2022
        %2407 = vmatmul.f32.gmra.mxu0 %v2365
        %v2408 = vpop.f32.mrf.mxu0
        %v2409 = vadd.f32 %v2332, %v2408
        %2410 = vmatmul.f32.gmra.mxu0 %v2368
        %v2411 = vpop.f32.mrf.mxu0
        %v2412 = vadd.f32 %v2337, %v2411
        %2413 = vmatmul.f32.gmra.mxu0 %v2371
        %v2414 = vpop.f32.mrf.mxu0
        %v2415 = vadd.f32 %v2342, %v2414
        %2416 = vmatmul.f32.gmra.mxu0 %v2374
        %v2417 = vpop.f32.mrf.mxu0
        %v2418 = vadd.f32 %v2347, %v2417
        %2419 = vmatmul.f32.gmra.mxu0 %v2377
        %v2420 = vpop.f32.mrf.mxu0
        %v2421 = vadd.f32 %v2352, %v2420
        %2422 = vmatmul.f32.gmra.mxu0 %v2380
        %v2423 = vpop.f32.mrf.mxu0
        %v2424 = vadd.f32 %v2357, %v2423
        %2425 = vmatmul.f32.gmra.mxu0 %v2383
        %v2426 = vpop.f32.mrf.mxu0
        %v2427 = vadd.f32 %v2362, %v2426
        %2428 = vdwg.mxu0
        %2429 = vmatpush.msra.mxu0 %v2387
        %2430 = vmatpush.msra.mxu0 %v2291
        %2431 = vmatpush.msra.mxu0 %v2289
        %2432 = vmatpush.msra.mxu0 %v2313
        %2433 = vmatpush.msra.mxu0 %v2226
        %2434 = vmatpush.msra.mxu0 %v2224
        %2435 = vmatpush.msra.mxu0 %v2310
        %2436 = vmatpush.msra.mxu0 %v2161
        %2437 = vmatpush.msra.mxu0 %v2159
        %2438 = vmatpush.msra.mxu0 %v2307
        %2439 = vmatpush.msra.mxu0 %v2096
        %2440 = vmatpush.msra.mxu0 %v2094
        %2441 = vmatpush.msra.mxu0 %v2304
        %2442 = vmatpush.msra.mxu0 %v2029
        %2443 = vmatpush.msra.mxu0 %v2026
        %2444 = vmatpush.msra.mxu0 %v2023
        %2445 = vmatmul.f32.gmra.mxu0 %v2365
        %v2446 = vpop.f32.mrf.mxu0
        %v2447 = vadd.f32 %v2332, %v2446
        %2448 = vmatmul.f32.gmra.mxu0 %v2368
        %v2449 = vpop.f32.mrf.mxu0
        %v2450 = vadd.f32 %v2337, %v2449
        %2451 = vmatmul.f32.gmra.mxu0 %v2371
        %v2452 = vpop.f32.mrf.mxu0
        %v2453 = vadd.f32 %v2342, %v2452
        %2454 = vmatmul.f32.gmra.mxu0 %v2374
        %v2455 = vpop.f32.mrf.mxu0
        %v2456 = vadd.f32 %v2347, %v2455
        %2457 = vmatmul.f32.gmra.mxu0 %v2377
        %v2458 = vpop.f32.mrf.mxu0
        %v2459 = vadd.f32 %v2352, %v2458
        %2460 = vmatmul.f32.gmra.mxu0 %v2380
        %v2461 = vpop.f32.mrf.mxu0
        %v2462 = vadd.f32 %v2357, %v2461
        %2463 = vmatmul.f32.gmra.mxu0 %v2383
        %v2464 = vpop.f32.mrf.mxu0
        %v2465 = vadd.f32 %v2362, %v2464
        %2466 = vdwg.mxu0
        %2467 = vmatpush.msra.mxu0 %v2389
        %2468 = vmatpush.msra.mxu0 %v2279
        %2469 = vmatpush.msra.mxu0 %v2273
        %2470 = vmatpush.msra.mxu0 %v2314
        %2471 = vmatpush.msra.mxu0 %v2214
        %2472 = vmatpush.msra.mxu0 %v2208
        %2473 = vmatpush.msra.mxu0 %v2311
        %2474 = vmatpush.msra.mxu0 %v2149
        %2475 = vmatpush.msra.mxu0 %v2143
        %2476 = vmatpush.msra.mxu0 %v2308
        %2477 = vmatpush.msra.mxu0 %v2084
        %2478 = vmatpush.msra.mxu0 %v2078
        %2479 = vmatpush.msra.mxu0 %v2305
        %2480 = vmatpush.msra.mxu0 %v2030
        %2481 = vmatpush.msra.mxu0 %v2027
        %2482 = vmatpush.msra.mxu0 %v2024
        %2483 = vmatmul.f32.gmra.mxu0 %v2365
        %v2484 = vpop.f32.mrf.mxu0
        %v2485 = vadd.f32 %v2332, %v2484
        %2486 = vmatmul.f32.gmra.mxu0 %v2368
        %v2487 = vpop.f32.mrf.mxu0
        %v2488 = vadd.f32 %v2337, %v2487
        %2489 = vmatmul.f32.gmra.mxu0 %v2371
        %v2490 = vpop.f32.mrf.mxu0
        %v2491 = vadd.f32 %v2342, %v2490
        %2492 = vmatmul.f32.gmra.mxu0 %v2374
        %v2493 = vpop.f32.mrf.mxu0
        %v2494 = vadd.f32 %v2347, %v2493
        %2495 = vmatmul.f32.gmra.mxu0 %v2377
        %v2496 = vpop.f32.mrf.mxu0
        %v2497 = vadd.f32 %v2352, %v2496
        %2498 = vmatmul.f32.gmra.mxu0 %v2380
        %v2499 = vpop.f32.mrf.mxu0
        %v2500 = vadd.f32 %v2357, %v2499
        %2501 = vmatmul.f32.gmra.mxu0 %v2383
        %v2502 = vpop.f32.mrf.mxu0
        %v2503 = vadd.f32 %v2362, %v2502
        %2504 = vdwg.mxu0
        %v2505 = vld [vmem:[%s12] sm:$0xff]
        %v2506 = vld [vmem:[%s12 + $0x8] sm:$0xff]
        %v2507 = vld [vmem:[%s12 + $0x10] sm:$0xff]
        %v2508 = vld [vmem:[%s12 + $0x18] sm:$0xff]
        %v2509 = vld [vmem:[%s12 + $0x20] sm:$0xff]
        %v2510 = vld [vmem:[%s12 + $0x28] sm:$0xff]
        %v2511 = vld [vmem:[%s12 + $0x30] sm:$0xff]
        %v2512 = vld [vmem:[%s12 + $0x38] sm:$0xff]
        %v2513 = vld [vmem:[%s12 + $0x40] sm:$0xff]
        %v2514 = vld [vmem:[%s12 + $0x48] sm:$0xff]
        %v2515 = vld [vmem:[%s12 + $0x50] sm:$0xff]
        %v2516 = vld [vmem:[%s12 + $0x58] sm:$0xff]
        %v2517 = vld [vmem:[%s12 + $0x60] sm:$0xff]
        %v2518 = vld [vmem:[%s12 + $0x68] sm:$0xff]
        %v2519 = vld [vmem:[%s12 + $0x70] sm:$0xff]
        %v2520 = vld [vmem:[%s12 + $0x78] sm:$0xff]
        %v2521 = vld [vmem:[%s12 + $0x80] sm:$0xff]
        %v2522 = vld [vmem:[%s12 + $0x88] sm:$0xff]
        %v2523 = vld [vmem:[%s12 + $0x90] sm:$0xff]
        %v2524 = vld [vmem:[%s12 + $0x98] sm:$0xff]
        %v2525 = vld [vmem:[%s12 + $0xa0] sm:$0xff]
        %v2526 = vld [vmem:[%s12 + $0xa8] sm:$0xff]
        %v2527 = vld [vmem:[%s12 + $0xb0] sm:$0xff]
        %v2528 = vld [vmem:[%s12 + $0xb8] sm:$0xff]
        %v2529 = vld [vmem:[%s12 + $0xc0] sm:$0xff]
        %v2530 = vld [vmem:[%s12 + $0xc8] sm:$0xff]
        %v2531 = vld [vmem:[%s12 + $0xd0] sm:$0xff]
        %v2532 = vld [vmem:[%s12 + $0xd8] sm:$0xff]
        %v2533 = vld [vmem:[%s12 + $0xe0] sm:$0xff]
        %v2534 = vld [vmem:[%s12 + $0xe8] sm:$0xff]
        %v2535 = vld [vmem:[%s12 + $0xf0] sm:$0xff]
        %v2536 = vld [vmem:[%s12 + $0xf8] sm:$0xff]
        %v2537 = vld [vmem:[%s12 + $0x100] sm:$0xff]
        %v2538 = vld [vmem:[%s12 + $0x108] sm:$0xff]
        %v2539 = vld [vmem:[%s12 + $0x110] sm:$0xff]
        %v2540 = vld [vmem:[%s12 + $0x118] sm:$0xff]
        %v2541 = vld [vmem:[%s12 + $0x120] sm:$0xff]
        %v2542 = vld [vmem:[%s12 + $0x128] sm:$0xff]
        %v2543 = vld [vmem:[%s12 + $0x130] sm:$0xff]
        %v2544 = vld [vmem:[%s12 + $0x138] sm:$0xff]
        %v2545 = vld [vmem:[%s12 + $0x140] sm:$0xff]
        %v2546 = vld [vmem:[%s12 + $0x148] sm:$0xff]
        %v2547 = vld [vmem:[%s12 + $0x150] sm:$0xff]
        %v2548 = vld [vmem:[%s12 + $0x158] sm:$0xff]
        %v2549 = vld [vmem:[%s12 + $0x160] sm:$0xff]
        %v2550 = vld [vmem:[%s12 + $0x168] sm:$0xff]
        %v2551 = vld [vmem:[%s12 + $0x170] sm:$0xff]
        %v2552 = vld [vmem:[%s12 + $0x178] sm:$0xff]
        %v2553 = vld [vmem:[%s12 + $0x180] sm:$0xff]
        %v2554 = vld [vmem:[%s12 + $0x188] sm:$0xff]
        %v2555 = vld [vmem:[%s12 + $0x190] sm:$0xff]
        %v2556 = vld [vmem:[%s12 + $0x198] sm:$0xff]
        %v2557 = vld [vmem:[%s12 + $0x1a0] sm:$0xff]
        %v2558 = vld [vmem:[%s12 + $0x1a8] sm:$0xff]
        %v2559 = vld [vmem:[%s12 + $0x1b0] sm:$0xff]
        %v2560 = vld [vmem:[%s12 + $0x1b8] sm:$0xff]
        %v2561 = vld [vmem:[%s12 + $0x1c0] sm:$0xff]
        %v2562 = vld [vmem:[%s12 + $0x1c8] sm:$0xff]
        %v2563 = vld [vmem:[%s12 + $0x1d0] sm:$0xff]
        %v2564 = vld [vmem:[%s12 + $0x1d8] sm:$0xff]
        %v2565 = vld [vmem:[%s12 + $0x1e0] sm:$0xff]
        %v2566 = vld [vmem:[%s12 + $0x1e8] sm:$0xff]
        %v2567 = vld [vmem:[%s12 + $0x1f0] sm:$0xff]
        %v2568 = vld [vmem:[%s12 + $0x1f8] sm:$0xff]
        %v2569 = vld [vmem:[%s12 + $0x200] sm:$0xff]
        %v2570 = vld [vmem:[%s12 + $0x208] sm:$0xff]
        %v2571 = vld [vmem:[%s12 + $0x210] sm:$0xff]
        %v2572 = vld [vmem:[%s12 + $0x218] sm:$0xff]
        %v2573 = vld [vmem:[%s12 + $0x220] sm:$0xff]
        %v2574 = vld [vmem:[%s12 + $0x228] sm:$0xff]
        %v2575 = vld [vmem:[%s12 + $0x230] sm:$0xff]
        %v2576 = vld [vmem:[%s12 + $0x238] sm:$0xff]
        %v2577 = vld [vmem:[%s12 + $0x240] sm:$0xff]
        %v2578 = vld [vmem:[%s12 + $0x248] sm:$0xff]
        %v2579 = vld [vmem:[%s12 + $0x250] sm:$0xff]
        %v2580 = vld [vmem:[%s12 + $0x258] sm:$0xff]
        %v2581 = vld [vmem:[%s12 + $0x260] sm:$0xff]
        %v2582 = vld [vmem:[%s12 + $0x268] sm:$0xff]
        %v2583 = vld [vmem:[%s12 + $0x270] sm:$0xff]
        %v2584 = vld [vmem:[%s12 + $0x278] sm:$0xff]
        %v2585 = vld [vmem:[%s12 + $0x280] sm:$0xff]
        %v2586 = vld [vmem:[%s12 + $0x288] sm:$0xff]
        %v2587 = vld [vmem:[%s12 + $0x290] sm:$0xff]
        %v2588 = vld [vmem:[%s12 + $0x298] sm:$0xff]
        %v2589 = vld [vmem:[%s12 + $0x2a0] sm:$0xff]
        %v2590 = vld [vmem:[%s12 + $0x2a8] sm:$0xff]
        %v2591 = vld [vmem:[%s12 + $0x2b0] sm:$0xff]
        %v2592 = vld [vmem:[%s12 + $0x2b8] sm:$0xff]
        %v2593 = vld [vmem:[%s12 + $0x2c0] sm:$0xff]
        %v2594 = vld [vmem:[%s12 + $0x2c8] sm:$0xff]
        %v2595 = vld [vmem:[%s12 + $0x2d0] sm:$0xff]
        %v2596 = vld [vmem:[%s12 + $0x2d8] sm:$0xff]
        %2618 = vrot.lane.b32.xlu0 %v2409, 127
        %v2619 = vpop.permute.xlu0 %2618
        %2620 = vrot.lane.b32.xlu0 %v2447, 127
        %v2621 = vpop.permute.xlu0 %2620
        %2622 = vrot.lane.b32.xlu0 %v2485, 127
        %v2623 = vpop.permute.xlu0 %2622
        %2624 = vrot.lane.b32.xlu0 %v2412, 127
        %v2625 = vpop.permute.xlu0 %2624
        %2626 = vrot.lane.b32.xlu0 %v2450, 127
        %v2627 = vpop.permute.xlu0 %2626
        %2628 = vrot.lane.b32.xlu0 %v2488, 127
        %v2629 = vpop.permute.xlu0 %2628
        %2630 = vrot.lane.b32.xlu0 %v2415, 127
        %v2631 = vpop.permute.xlu0 %2630
        %2632 = vrot.lane.b32.xlu0 %v2453, 127
        %v2633 = vpop.permute.xlu0 %2632
        %2634 = vrot.lane.b32.xlu0 %v2491, 127
        %v2635 = vpop.permute.xlu0 %2634
        %2636 = vrot.lane.b32.xlu0 %v2418, 127
        %v2637 = vpop.permute.xlu0 %2636
        %2638 = vrot.lane.b32.xlu0 %v2456, 127
        %v2639 = vpop.permute.xlu0 %2638
        %2640 = vrot.lane.b32.xlu0 %v2494, 127
        %v2641 = vpop.permute.xlu0 %2640
        %2642 = vrot.lane.b32.xlu0 %v2421, 127
        %v2643 = vpop.permute.xlu0 %2642
        %2644 = vrot.lane.b32.xlu0 %v2459, 127
        %v2645 = vpop.permute.xlu0 %2644
        %2646 = vrot.lane.b32.xlu0 %v2497, 127
        %v2647 = vpop.permute.xlu0 %2646
        %2648 = vrot.lane.b32.xlu0 %v2424, 127
        %v2649 = vpop.permute.xlu0 %2648
        %2650 = vrot.lane.b32.xlu0 %v2462, 127
        %v2651 = vpop.permute.xlu0 %2650
        %2652 = vrot.lane.b32.xlu0 %v2500, 127
        %v2653 = vpop.permute.xlu0 %2652
        %2654 = vrot.lane.b32.xlu0 %v2427, 127
        %v2655 = vpop.permute.xlu0 %2654
        %2656 = vrot.lane.b32.xlu0 %v2465, 127
        %v2657 = vpop.permute.xlu0 %2656
        %2658 = vrot.lane.b32.xlu0 %v2503, 127
        %v2659 = vpop.permute.xlu0 %2658
        %v2660 = vsel %vm520, %v2619, %v2621
        %v2661 = vsel %vm520, %v2621, %v2623
        %v2662 = vsel %vm520, %v2625, %v2627
        %v2663 = vsel %vm520, %v2627, %v2629
        %v2664 = vsel %vm520, %v2631, %v2633
        %v2665 = vsel %vm520, %v2633, %v2635
        %v2666 = vsel %vm520, %v2637, %v2639
        %v2667 = vsel %vm520, %v2639, %v2641
        %v2668 = vsel %vm520, %v2643, %v2645
        %v2669 = vsel %vm520, %v2645, %v2647
        %v2670 = vsel %vm520, %v2649, %v2651
        %v2671 = vsel %vm520, %v2651, %v2653
        %v2672 = vsel %vm520, %v2655, %v2657
        %v2673 = vsel %vm520, %v2657, %v2659
        %v2695 = vmax.f32 %v2409, %v2660
        %v2696 = vmax.f32 %v2447, %v2661
        %v2697 = vmax.f32 %v2485, %v2623
        %v2698 = vmax.f32 %v2412, %v2662
        %v2699 = vmax.f32 %v2450, %v2663
        %v2700 = vmax.f32 %v2488, %v2629
        %v2701 = vmax.f32 %v2415, %v2664
        %v2702 = vmax.f32 %v2453, %v2665
        %v2703 = vmax.f32 %v2491, %v2635
        %v2704 = vmax.f32 %v2418, %v2666
        %v2705 = vmax.f32 %v2456, %v2667
        %v2706 = vmax.f32 %v2494, %v2641
        %v2707 = vmax.f32 %v2421, %v2668
        %v2708 = vmax.f32 %v2459, %v2669
        %v2709 = vmax.f32 %v2497, %v2647
        %v2710 = vmax.f32 %v2424, %v2670
        %v2711 = vmax.f32 %v2462, %v2671
        %v2712 = vmax.f32 %v2500, %v2653
        %v2713 = vmax.f32 %v2427, %v2672
        %v2714 = vmax.f32 %v2465, %v2673
        %v2715 = vmax.f32 %v2503, %v2659
        %vm2716 = vcmask 916480
        %v2718 = vsel %vm2716, %v2697, 0
        %v2721 = vsel %vm2716, %v2700, 0
        %v2724 = vsel %vm2716, %v2703, 0
        %v2727 = vsel %vm2716, %v2706, 0
        %v2730 = vsel %vm2716, %v2709, 0
        %v2733 = vsel %vm2716, %v2712, 0
        %v2736 = vsel %vm2716, %v2715, 0
        %2738 = vmatpush.msra.mxu0 %v2535
        %2739 = vmatpush.msra.mxu0 %v2533
        %2740 = vmatpush.msra.mxu0 %v2531
        %2741 = vmatpush.msra.mxu0 %v2529
        %2742 = vmatpush.msra.mxu0 %v2527
        %2743 = vmatpush.msra.mxu0 %v2525
        %2744 = vmatpush.msra.mxu0 %v2523
        %2745 = vmatpush.msra.mxu0 %v2521
        %2746 = vmatpush.msra.mxu0 %v2519
        %2747 = vmatpush.msra.mxu0 %v2517
        %2748 = vmatpush.msra.mxu0 %v2515
        %2749 = vmatpush.msra.mxu0 %v2513
        %2750 = vmatpush.msra.mxu0 %v2511
        %2751 = vmatpush.msra.mxu0 %v2509
        %2752 = vmatpush.msra.mxu0 %v2507
        %2753 = vmatpush.msra.mxu0 %v2505
        %2754 = vmatmul.f32.gmra.mxu0 %v2695
        %v2755 = vpop.f32.mrf.mxu0
        %v2756 = vadd.f32 0.0, %v2755
        %2757 = vmatmul.f32.gmra.mxu0 %v2698
        %v2758 = vpop.f32.mrf.mxu0
        %v2759 = vadd.f32 0.0, %v2758
        %2760 = vmatmul.f32.gmra.mxu0 %v2701
        %v2761 = vpop.f32.mrf.mxu0
        %v2762 = vadd.f32 0.0, %v2761
        %2763 = vmatmul.f32.gmra.mxu0 %v2704
        %v2764 = vpop.f32.mrf.mxu0
        %v2765 = vadd.f32 0.0, %v2764
        %2766 = vmatmul.f32.gmra.mxu0 %v2707
        %v2767 = vpop.f32.mrf.mxu0
        %v2768 = vadd.f32 0.0, %v2767
        %2769 = vmatmul.f32.gmra.mxu0 %v2710
        %v2770 = vpop.f32.mrf.mxu0
        %v2771 = vadd.f32 0.0, %v2770
        %2772 = vmatmul.f32.gmra.mxu0 %v2713
        %v2773 = vpop.f32.mrf.mxu0
        %v2774 = vadd.f32 0.0, %v2773
        %2775 = vdwg.mxu0
        %2776 = vmatpush.msra.mxu0 %v2567
        %2777 = vmatpush.msra.mxu0 %v2565
        %2778 = vmatpush.msra.mxu0 %v2563
        %2779 = vmatpush.msra.mxu0 %v2561
        %2780 = vmatpush.msra.mxu0 %v2559
        %2781 = vmatpush.msra.mxu0 %v2557
        %2782 = vmatpush.msra.mxu0 %v2555
        %2783 = vmatpush.msra.mxu0 %v2553
        %2784 = vmatpush.msra.mxu0 %v2551
        %2785 = vmatpush.msra.mxu0 %v2549
        %2786 = vmatpush.msra.mxu0 %v2547
        %2787 = vmatpush.msra.mxu0 %v2545
        %2788 = vmatpush.msra.mxu0 %v2543
        %2789 = vmatpush.msra.mxu0 %v2541
        %2790 = vmatpush.msra.mxu0 %v2539
        %2791 = vmatpush.msra.mxu0 %v2537
        %2792 = vmatmul.f32.gmra.mxu0 %v2696
        %v2793 = vpop.f32.mrf.mxu0
        %v2794 = vadd.f32 %v2756, %v2793
        %2795 = vmatmul.f32.gmra.mxu0 %v2699
        %v2796 = vpop.f32.mrf.mxu0
        %v2797 = vadd.f32 %v2759, %v2796
        %2798 = vmatmul.f32.gmra.mxu0 %v2702
        %v2799 = vpop.f32.mrf.mxu0
        %v2800 = vadd.f32 %v2762, %v2799
        %2801 = vmatmul.f32.gmra.mxu0 %v2705
        %v2802 = vpop.f32.mrf.mxu0
        %v2803 = vadd.f32 %v2765, %v2802
        %2804 = vmatmul.f32.gmra.mxu0 %v2708
        %v2805 = vpop.f32.mrf.mxu0
        %v2806 = vadd.f32 %v2768, %v2805
        %2807 = vmatmul.f32.gmra.mxu0 %v2711
        %v2808 = vpop.f32.mrf.mxu0
        %v2809 = vadd.f32 %v2771, %v2808
        %2810 = vmatmul.f32.gmra.mxu0 %v2714
        %v2811 = vpop.f32.mrf.mxu0
        %v2812 = vadd.f32 %v2774, %v2811
        %2813 = vdwg.mxu0
        %2814 = vmatpush.msra.mxu0 0.0
        %2815 = vmatpush.msra.mxu0 0.0
        %2816 = vmatpush.msra.mxu0 %v2595
        %2817 = vmatpush.msra.mxu0 %v2593
        %2818 = vmatpush.msra.mxu0 %v2591
        %2819 = vmatpush.msra.mxu0 %v2589
        %2820 = vmatpush.msra.mxu0 %v2587
        %2821 = vmatpush.msra.mxu0 %v2585
        %2822 = vmatpush.msra.mxu0 %v2583
        %2823 = vmatpush.msra.mxu0 %v2581
        %2824 = vmatpush.msra.mxu0 %v2579
        %2825 = vmatpush.msra.mxu0 %v2577
        %2826 = vmatpush.msra.mxu0 %v2575
        %2827 = vmatpush.msra.mxu0 %v2573
        %2828 = vmatpush.msra.mxu0 %v2571
        %2829 = vmatpush.msra.mxu0 %v2569
        %2830 = vmatmul.f32.gmra.mxu0 %v2718
        %v2831 = vpop.f32.mrf.mxu0
        %v2832 = vadd.f32 %v2794, %v2831
        %2833 = vmatmul.f32.gmra.mxu0 %v2721
        %v2834 = vpop.f32.mrf.mxu0
        %v2835 = vadd.f32 %v2797, %v2834
        %2836 = vmatmul.f32.gmra.mxu0 %v2724
        %v2837 = vpop.f32.mrf.mxu0
        %v2838 = vadd.f32 %v2800, %v2837
        %2839 = vmatmul.f32.gmra.mxu0 %v2727
        %v2840 = vpop.f32.mrf.mxu0
        %v2841 = vadd.f32 %v2803, %v2840
        %2842 = vmatmul.f32.gmra.mxu0 %v2730
        %v2843 = vpop.f32.mrf.mxu0
        %v2844 = vadd.f32 %v2806, %v2843
        %2845 = vmatmul.f32.gmra.mxu0 %v2733
        %v2846 = vpop.f32.mrf.mxu0
        %v2847 = vadd.f32 %v2809, %v2846
        %2848 = vmatmul.f32.gmra.mxu0 %v2736
        %v2849 = vpop.f32.mrf.mxu0
        %v2850 = vadd.f32 %v2812, %v2849
        %2851 = vdwg.mxu0
        %2852 = vmatpush.msra.mxu0 %v2536
        %2853 = vmatpush.msra.mxu0 %v2534
        %2854 = vmatpush.msra.mxu0 %v2532
        %2855 = vmatpush.msra.mxu0 %v2530
        %2856 = vmatpush.msra.mxu0 %v2528
        %2857 = vmatpush.msra.mxu0 %v2526
        %2858 = vmatpush.msra.mxu0 %v2524
        %2859 = vmatpush.msra.mxu0 %v2522
        %2860 = vmatpush.msra.mxu0 %v2520
        %2861 = vmatpush.msra.mxu0 %v2518
        %2862 = vmatpush.msra.mxu0 %v2516
        %2863 = vmatpush.msra.mxu0 %v2514
        %2864 = vmatpush.msra.mxu0 %v2512
        %2865 = vmatpush.msra.mxu0 %v2510
        %2866 = vmatpush.msra.mxu0 %v2508
        %2867 = vmatpush.msra.mxu0 %v2506
        %2868 = vmatmul.f32.gmra.mxu0 %v2695
        %v2869 = vpop.f32.mrf.mxu0
        %v2870 = vadd.f32 0.0, %v2869
        %2871 = vmatmul.f32.gmra.mxu0 %v2698
        %v2872 = vpop.f32.mrf.mxu0
        %v2873 = vadd.f32 0.0, %v2872
        %2874 = vmatmul.f32.gmra.mxu0 %v2701
        %v2875 = vpop.f32.mrf.mxu0
        %v2876 = vadd.f32 0.0, %v2875
        %2877 = vmatmul.f32.gmra.mxu0 %v2704
        %v2878 = vpop.f32.mrf.mxu0
        %v2879 = vadd.f32 0.0, %v2878
        %2880 = vmatmul.f32.gmra.mxu0 %v2707
        %v2881 = vpop.f32.mrf.mxu0
        %v2882 = vadd.f32 0.0, %v2881
        %2883 = vmatmul.f32.gmra.mxu0 %v2710
        %v2884 = vpop.f32.mrf.mxu0
        %v2885 = vadd.f32 0.0, %v2884
        %2886 = vmatmul.f32.gmra.mxu0 %v2713
        %v2887 = vpop.f32.mrf.mxu0
        %v2888 = vadd.f32 0.0, %v2887
        %2889 = vdwg.mxu0
        %2890 = vmatpush.msra.mxu0 %v2568
        %2891 = vmatpush.msra.mxu0 %v2566
        %2892 = vmatpush.msra.mxu0 %v2564
        %2893 = vmatpush.msra.mxu0 %v2562
        %2894 = vmatpush.msra.mxu0 %v2560
        %2895 = vmatpush.msra.mxu0 %v2558
        %2896 = vmatpush.msra.mxu0 %v2556
        %2897 = vmatpush.msra.mxu0 %v2554
        %2898 = vmatpush.msra.mxu0 %v2552
        %2899 = vmatpush.msra.mxu0 %v2550
        %2900 = vmatpush.msra.mxu0 %v2548
        %2901 = vmatpush.msra.mxu0 %v2546
        %2902 = vmatpush.msra.mxu0 %v2544
        %2903 = vmatpush.msra.mxu0 %v2542
        %2904 = vmatpush.msra.mxu0 %v2540
        %2905 = vmatpush.msra.mxu0 %v2538
        %2906 = vmatmul.f32.gmra.mxu0 %v2696
        %v2907 = vpop.f32.mrf.mxu0
        %v2908 = vadd.f32 %v2870, %v2907
        %2909 = vmatmul.f32.gmra.mxu0 %v2699
        %v2910 = vpop.f32.mrf.mxu0
        %v2911 = vadd.f32 %v2873, %v2910
        %2912 = vmatmul.f32.gmra.mxu0 %v2702
        %v2913 = vpop.f32.mrf.mxu0
        %v2914 = vadd.f32 %v2876, %v2913
        %2915 = vmatmul.f32.gmra.mxu0 %v2705
        %v2916 = vpop.f32.mrf.mxu0
        %v2917 = vadd.f32 %v2879, %v2916
        %2918 = vmatmul.f32.gmra.mxu0 %v2708
        %v2919 = vpop.f32.mrf.mxu0
        %v2920 = vadd.f32 %v2882, %v2919
        %2921 = vmatmul.f32.gmra.mxu0 %v2711
        %v2922 = vpop.f32.mrf.mxu0
        %v2923 = vadd.f32 %v2885, %v2922
        %2924 = vmatmul.f32.gmra.mxu0 %v2714
        %v2925 = vpop.f32.mrf.mxu0
        %v2926 = vadd.f32 %v2888, %v2925
        %2927 = vdwg.mxu0
        %2928 = vmatpush.msra.mxu0 0.0
        %2929 = vmatpush.msra.mxu0 0.0
        %2930 = vmatpush.msra.mxu0 %v2596
        %2931 = vmatpush.msra.mxu0 %v2594
        %2932 = vmatpush.msra.mxu0 %v2592
        %2933 = vmatpush.msra.mxu0 %v2590
        %2934 = vmatpush.msra.mxu0 %v2588
        %2935 = vmatpush.msra.mxu0 %v2586
        %2936 = vmatpush.msra.mxu0 %v2584
        %2937 = vmatpush.msra.mxu0 %v2582
        %2938 = vmatpush.msra.mxu0 %v2580
        %2939 = vmatpush.msra.mxu0 %v2578
        %2940 = vmatpush.msra.mxu0 %v2576
        %2941 = vmatpush.msra.mxu0 %v2574
        %2942 = vmatpush.msra.mxu0 %v2572
        %2943 = vmatpush.msra.mxu0 %v2570
        %2944 = vmatmul.f32.gmra.mxu0 %v2718
        %v2945 = vpop.f32.mrf.mxu0
        %v2946 = vadd.f32 %v2908, %v2945
        %2947 = vmatmul.f32.gmra.mxu0 %v2721
        %v2948 = vpop.f32.mrf.mxu0
        %v2949 = vadd.f32 %v2911, %v2948
        %2950 = vmatmul.f32.gmra.mxu0 %v2724
        %v2951 = vpop.f32.mrf.mxu0
        %v2952 = vadd.f32 %v2914, %v2951
        %2953 = vmatmul.f32.gmra.mxu0 %v2727
        %v2954 = vpop.f32.mrf.mxu0
        %v2955 = vadd.f32 %v2917, %v2954
        %2956 = vmatmul.f32.gmra.mxu0 %v2730
        %v2957 = vpop.f32.mrf.mxu0
        %v2958 = vadd.f32 %v2920, %v2957
        %2959 = vmatmul.f32.gmra.mxu0 %v2733
        %v2960 = vpop.f32.mrf.mxu0
        %v2961 = vadd.f32 %v2923, %v2960
        %2962 = vmatmul.f32.gmra.mxu0 %v2736
        %v2963 = vpop.f32.mrf.mxu0
        %v2964 = vadd.f32 %v2926, %v2963
        %2965 = vdwg.mxu0
        %vm2966 = vcmp.gt.f32.partialorder %v2832, 0.0
        %vm2967 = vcmp.gt.f32.partialorder %v2946, 0.0
        %vm2968 = vcmp.gt.f32.partialorder %v2835, 0.0
        %vm2969 = vcmp.gt.f32.partialorder %v2949, 0.0
        %vm2970 = vcmp.gt.f32.partialorder %v2838, 0.0
        %vm2971 = vcmp.gt.f32.partialorder %v2952, 0.0
        %vm2972 = vcmp.gt.f32.partialorder %v2841, 0.0
        %vm2973 = vcmp.gt.f32.partialorder %v2955, 0.0
        %vm2974 = vcmp.gt.f32.partialorder %v2844, 0.0
        %vm2975 = vcmp.gt.f32.partialorder %v2958, 0.0
        %vm2976 = vcmp.gt.f32.partialorder %v2847, 0.0
        %vm2977 = vcmp.gt.f32.partialorder %v2961, 0.0
        %vm2978 = vcmp.gt.f32.partialorder %v2850, 0.0
        %vm2979 = vcmp.gt.f32.partialorder %v2964, 0.0
        %v2980 = vmin.f32 %v2832, 0.0
        %v2981 = vmin.f32 %v2946, 0.0
        %v2982 = vmin.f32 %v2835, 0.0
        %v2983 = vmin.f32 %v2949, 0.0
        %v2984 = vmin.f32 %v2838, 0.0
        %v2985 = vmin.f32 %v2952, 0.0
        %v2986 = vmin.f32 %v2841, 0.0
        %v2987 = vmin.f32 %v2955, 0.0
        %v2988 = vmin.f32 %v2844, 0.0
        %v2989 = vmin.f32 %v2958, 0.0
        %v2990 = vmin.f32 %v2847, 0.0
        %v2991 = vmin.f32 %v2961, 0.0
        %v2992 = vmin.f32 %v2850, 0.0
        %v2993 = vmin.f32 %v2964, 0.0
        %v2994 = vmul.f32 %v2980, 1.442695
        %v2995 = vpow.pop %v2994
        %v2996 = vmul.f32 %v2981, 1.442695
        %v2997 = vpow.pop %v2996
        %v2998 = vmul.f32 %v2982, 1.442695
        %v2999 = vpow.pop %v2998
        %v3000 = vmul.f32 %v2983, 1.442695
        %v3001 = vpow.pop %v3000
        %v3002 = vmul.f32 %v2984, 1.442695
        %v3003 = vpow.pop %v3002
        %v3004 = vmul.f32 %v2985, 1.442695
        %v3005 = vpow.pop %v3004
        %v3006 = vmul.f32 %v2986, 1.442695
        %v3007 = vpow.pop %v3006
        %v3008 = vmul.f32 %v2987, 1.442695
        %v3009 = vpow.pop %v3008
        %v3010 = vmul.f32 %v2988, 1.442695
        %v3011 = vpow.pop %v3010
        %v3012 = vmul.f32 %v2989, 1.442695
        %v3013 = vpow.pop %v3012
        %v3014 = vmul.f32 %v2990, 1.442695
        %v3015 = vpow.pop %v3014
        %v3016 = vmul.f32 %v2991, 1.442695
        %v3017 = vpow.pop %v3016
        %v3018 = vmul.f32 %v2992, 1.442695
        %v3019 = vpow.pop %v3018
        %v3020 = vmul.f32 %v2993, 1.442695
        %v3021 = vpow.pop %v3020
        %v3022 = vsub.f32 %v2995, 1.0
        %v3023 = vsub.f32 %v2997, 1.0
        %v3024 = vsub.f32 %v2999, 1.0
        %v3025 = vsub.f32 %v3001, 1.0
        %v3026 = vsub.f32 %v3003, 1.0
        %v3027 = vsub.f32 %v3005, 1.0
        %v3028 = vsub.f32 %v3007, 1.0
        %v3029 = vsub.f32 %v3009, 1.0
        %v3030 = vsub.f32 %v3011, 1.0
        %v3031 = vsub.f32 %v3013, 1.0
        %v3032 = vsub.f32 %v3015, 1.0
        %v3033 = vsub.f32 %v3017, 1.0
        %v3034 = vsub.f32 %v3019, 1.0
        %v3035 = vsub.f32 %v3021, 1.0
        %v3036 = vsel %vm2966, %v2832, %v3022
        %v3037 = vsel %vm2967, %v2946, %v3023
        %v3038 = vsel %vm2968, %v2835, %v3024
        %v3039 = vsel %vm2969, %v2949, %v3025
        %v3040 = vsel %vm2970, %v2838, %v3026
        %v3041 = vsel %vm2971, %v2952, %v3027
        %v3042 = vsel %vm2972, %v2841, %v3028
        %v3043 = vsel %vm2973, %v2955, %v3029
        %v3044 = vsel %vm2974, %v2844, %v3030
        %v3045 = vsel %vm2975, %v2958, %v3031
        %v3046 = vsel %vm2976, %v2847, %v3032
        %v3047 = vsel %vm2977, %v2961, %v3033
        %v3048 = vsel %vm2978, %v2850, %v3034
        %v3049 = vsel %vm2979, %v2964, %v3035
        %v3064 = vrot.slane %v3036, 6
        %v3065 = vrot.slane %v3037, 6
        %v3066 = vrot.slane %v3038, 6
        %v3067 = vsel %vm715, %v3064, %v3066
        %v3068 = vrot.slane %v3039, 6
        %v3069 = vsel %vm715, %v3065, %v3068
        %v3070 = vrot.slane %v3040, 6
        %v3071 = vsel %vm715, %v3066, %v3070
        %v3072 = vrot.slane %v3041, 6
        %v3073 = vsel %vm715, %v3068, %v3072
        %v3074 = vrot.slane %v3042, 6
        %v3075 = vsel %vm715, %v3070, %v3074
        %v3076 = vrot.slane %v3043, 6
        %v3077 = vsel %vm715, %v3072, %v3076
        %v3078 = vrot.slane %v3044, 6
        %v3079 = vsel %vm715, %v3074, %v3078
        %v3080 = vrot.slane %v3045, 6
        %v3081 = vsel %vm715, %v3076, %v3080
        %v3082 = vrot.slane %v3046, 6
        %v3083 = vsel %vm715, %v3078, %v3082
        %v3084 = vrot.slane %v3047, 6
        %v3085 = vsel %vm715, %v3080, %v3084
        %v3086 = vrot.slane %v3048, 6
        %v3087 = vsel %vm715, %v3082, %v3086
        %v3088 = vrot.slane %v3049, 6
        %v3089 = vsel %vm715, %v3084, %v3088
        %3090 = vrot.lane.b32.xlu0 %v3064, 127
        %v3091 = vpop.permute.xlu0 %3090
        %3092 = vrot.lane.b32.xlu0 %v3065, 127
        %v3093 = vpop.permute.xlu0 %3092
        %3094 = vrot.lane.b32.xlu0 %v3067, 127
        %v3095 = vpop.permute.xlu0 %3094
        %3096 = vrot.lane.b32.xlu0 %v3069, 127
        %v3097 = vpop.permute.xlu0 %3096
        %3098 = vrot.lane.b32.xlu0 %v3071, 127
        %v3099 = vpop.permute.xlu0 %3098
        %3100 = vrot.lane.b32.xlu0 %v3073, 127
        %v3101 = vpop.permute.xlu0 %3100
        %3102 = vrot.lane.b32.xlu0 %v3075, 127
        %v3103 = vpop.permute.xlu0 %3102
        %3104 = vrot.lane.b32.xlu0 %v3077, 127
        %v3105 = vpop.permute.xlu0 %3104
        %3106 = vrot.lane.b32.xlu0 %v3079, 127
        %v3107 = vpop.permute.xlu0 %3106
        %3108 = vrot.lane.b32.xlu0 %v3081, 127
        %v3109 = vpop.permute.xlu0 %3108
        %3110 = vrot.lane.b32.xlu0 %v3083, 127
        %v3111 = vpop.permute.xlu0 %3110
        %3112 = vrot.lane.b32.xlu0 %v3085, 127
        %v3113 = vpop.permute.xlu0 %3112
        %3114 = vrot.lane.b32.xlu0 %v3087, 127
        %v3115 = vpop.permute.xlu0 %3114
        %3116 = vrot.lane.b32.xlu0 %v3089, 127
        %v3117 = vpop.permute.xlu0 %3116
        %v3118 = vsel %vm520, %v3091, %v3093
        %v3119 = vsel %vm520, %v3095, %v3097
        %v3120 = vsel %vm520, %v3099, %v3101
        %v3121 = vsel %vm520, %v3103, %v3105
        %v3122 = vsel %vm520, %v3107, %v3109
        %v3123 = vsel %vm520, %v3111, %v3113
        %v3124 = vsel %vm520, %v3115, %v3117
        %v3139 = vrot.slane %v3036, 4
        %v3140 = vrot.slane %v3037, 4
        %v3141 = vrot.slane %v3038, 4
        %v3142 = vsel %vm729, %v3139, %v3141
        %v3143 = vrot.slane %v3039, 4
        %v3144 = vsel %vm729, %v3140, %v3143
        %v3145 = vrot.slane %v3040, 4
        %v3146 = vsel %vm729, %v3141, %v3145
        %v3147 = vrot.slane %v3041, 4
        %v3148 = vsel %vm729, %v3143, %v3147
        %v3149 = vrot.slane %v3042, 4
        %v3150 = vsel %vm729, %v3145, %v3149
        %v3151 = vrot.slane %v3043, 4
        %v3152 = vsel %vm729, %v3147, %v3151
        %v3153 = vrot.slane %v3044, 4
        %v3154 = vsel %vm729, %v3149, %v3153
        %v3155 = vrot.slane %v3045, 4
        %v3156 = vsel %vm729, %v3151, %v3155
        %v3157 = vrot.slane %v3046, 4
        %v3158 = vsel %vm729, %v3153, %v3157
        %v3159 = vrot.slane %v3047, 4
        %v3160 = vsel %vm729, %v3155, %v3159
        %v3161 = vrot.slane %v3048, 4
        %v3162 = vsel %vm729, %v3157, %v3161
        %v3163 = vrot.slane %v3049, 4
        %v3164 = vsel %vm729, %v3159, %v3163
        %3165 = vrot.lane.b32.xlu0 %v3139, 126
        %v3166 = vpop.permute.xlu0 %3165
        %3167 = vrot.lane.b32.xlu0 %v3140, 126
        %v3168 = vpop.permute.xlu0 %3167
        %3169 = vrot.lane.b32.xlu0 %v3142, 126
        %v3170 = vpop.permute.xlu0 %3169
        %3171 = vrot.lane.b32.xlu0 %v3144, 126
        %v3172 = vpop.permute.xlu0 %3171
        %3173 = vrot.lane.b32.xlu0 %v3146, 126
        %v3174 = vpop.permute.xlu0 %3173
        %3175 = vrot.lane.b32.xlu0 %v3148, 126
        %v3176 = vpop.permute.xlu0 %3175
        %3177 = vrot.lane.b32.xlu0 %v3150, 126
        %v3178 = vpop.permute.xlu0 %3177
        %3179 = vrot.lane.b32.xlu0 %v3152, 126
        %v3180 = vpop.permute.xlu0 %3179
        %3181 = vrot.lane.b32.xlu0 %v3154, 126
        %v3182 = vpop.permute.xlu0 %3181
        %3183 = vrot.lane.b32.xlu0 %v3156, 126
        %v3184 = vpop.permute.xlu0 %3183
        %3185 = vrot.lane.b32.xlu0 %v3158, 126
        %v3186 = vpop.permute.xlu0 %3185
        %3187 = vrot.lane.b32.xlu0 %v3160, 126
        %v3188 = vpop.permute.xlu0 %3187
        %3189 = vrot.lane.b32.xlu0 %v3162, 126
        %v3190 = vpop.permute.xlu0 %3189
        %3191 = vrot.lane.b32.xlu0 %v3164, 126
        %v3192 = vpop.permute.xlu0 %3191
        %v3193 = vsel %vm544, %v3166, %v3168
        %v3194 = vsel %vm544, %v3170, %v3172
        %v3195 = vsel %vm544, %v3174, %v3176
        %v3196 = vsel %vm544, %v3178, %v3180
        %v3197 = vsel %vm544, %v3182, %v3184
        %v3198 = vsel %vm544, %v3186, %v3188
        %v3199 = vsel %vm544, %v3190, %v3192
        %v3214 = vrot.slane %v3036, 2
        %v3215 = vrot.slane %v3037, 2
        %v3216 = vrot.slane %v3038, 2
        %v3217 = vsel %vm743, %v3214, %v3216
        %v3218 = vrot.slane %v3039, 2
        %v3219 = vsel %vm743, %v3215, %v3218
        %v3220 = vrot.slane %v3040, 2
        %v3221 = vsel %vm743, %v3216, %v3220
        %v3222 = vrot.slane %v3041, 2
        %v3223 = vsel %vm743, %v3218, %v3222
        %v3224 = vrot.slane %v3042, 2
        %v3225 = vsel %vm743, %v3220, %v3224
        %v3226 = vrot.slane %v3043, 2
        %v3227 = vsel %vm743, %v3222, %v3226
        %v3228 = vrot.slane %v3044, 2
        %v3229 = vsel %vm743, %v3224, %v3228
        %v3230 = vrot.slane %v3045, 2
        %v3231 = vsel %vm743, %v3226, %v3230
        %v3232 = vrot.slane %v3046, 2
        %v3233 = vsel %vm743, %v3228, %v3232
        %v3234 = vrot.slane %v3047, 2
        %v3235 = vsel %vm743, %v3230, %v3234
        %v3236 = vrot.slane %v3048, 2
        %v3237 = vsel %vm743, %v3232, %v3236
        %v3238 = vrot.slane %v3049, 2
        %v3239 = vsel %vm743, %v3234, %v3238
        %3240 = vrot.lane.b32.xlu0 %v3214, 125
        %v3241 = vpop.permute.xlu0 %3240
        %3242 = vrot.lane.b32.xlu0 %v3215, 125
        %v3243 = vpop.permute.xlu0 %3242
        %3244 = vrot.lane.b32.xlu0 %v3217, 125
        %v3245 = vpop.permute.xlu0 %3244
        %3246 = vrot.lane.b32.xlu0 %v3219, 125
        %v3247 = vpop.permute.xlu0 %3246
        %3248 = vrot.lane.b32.xlu0 %v3221, 125
        %v3249 = vpop.permute.xlu0 %3248
        %3250 = vrot.lane.b32.xlu0 %v3223, 125
        %v3251 = vpop.permute.xlu0 %3250
        %3252 = vrot.lane.b32.xlu0 %v3225, 125
        %v3253 = vpop.permute.xlu0 %3252
        %3254 = vrot.lane.b32.xlu0 %v3227, 125
        %v3255 = vpop.permute.xlu0 %3254
        %3256 = vrot.lane.b32.xlu0 %v3229, 125
        %v3257 = vpop.permute.xlu0 %3256
        %3258 = vrot.lane.b32.xlu0 %v3231, 125
        %v3259 = vpop.permute.xlu0 %3258
        %3260 = vrot.lane.b32.xlu0 %v3233, 125
        %v3261 = vpop.permute.xlu0 %3260
        %3262 = vrot.lane.b32.xlu0 %v3235, 125
        %v3263 = vpop.permute.xlu0 %3262
        %3264 = vrot.lane.b32.xlu0 %v3237, 125
        %v3265 = vpop.permute.xlu0 %3264
        %3266 = vrot.lane.b32.xlu0 %v3239, 125
        %v3267 = vpop.permute.xlu0 %3266
        %v3268 = vsel %vm568, %v3241, %v3243
        %v3269 = vsel %vm568, %v3245, %v3247
        %v3270 = vsel %vm568, %v3249, %v3251
        %v3271 = vsel %vm568, %v3253, %v3255
        %v3272 = vsel %vm568, %v3257, %v3259
        %v3273 = vsel %vm568, %v3261, %v3263
        %v3274 = vsel %vm568, %v3265, %v3267
        %3289 = vrot.lane.b32.xlu0 %v3036, 124
        %v3290 = vpop.permute.xlu0 %3289
        %3291 = vrot.lane.b32.xlu0 %v3037, 124
        %v3292 = vpop.permute.xlu0 %3291
        %3293 = vrot.lane.b32.xlu0 %v3038, 124
        %v3294 = vpop.permute.xlu0 %3293
        %3295 = vrot.lane.b32.xlu0 %v3039, 124
        %v3296 = vpop.permute.xlu0 %3295
        %3297 = vrot.lane.b32.xlu0 %v3040, 124
        %v3298 = vpop.permute.xlu0 %3297
        %3299 = vrot.lane.b32.xlu0 %v3041, 124
        %v3300 = vpop.permute.xlu0 %3299
        %3301 = vrot.lane.b32.xlu0 %v3042, 124
        %v3302 = vpop.permute.xlu0 %3301
        %3303 = vrot.lane.b32.xlu0 %v3043, 124
        %v3304 = vpop.permute.xlu0 %3303
        %3305 = vrot.lane.b32.xlu0 %v3044, 124
        %v3306 = vpop.permute.xlu0 %3305
        %3307 = vrot.lane.b32.xlu0 %v3045, 124
        %v3308 = vpop.permute.xlu0 %3307
        %3309 = vrot.lane.b32.xlu0 %v3046, 124
        %v3310 = vpop.permute.xlu0 %3309
        %3311 = vrot.lane.b32.xlu0 %v3047, 124
        %v3312 = vpop.permute.xlu0 %3311
        %3313 = vrot.lane.b32.xlu0 %v3048, 124
        %v3314 = vpop.permute.xlu0 %3313
        %3315 = vrot.lane.b32.xlu0 %v3049, 124
        %v3316 = vpop.permute.xlu0 %3315
        %v3317 = vsel %vm592, %v3290, %v3292
        %v3318 = vsel %vm592, %v3294, %v3296
        %v3319 = vsel %vm592, %v3298, %v3300
        %v3320 = vsel %vm592, %v3302, %v3304
        %v3321 = vsel %vm592, %v3306, %v3308
        %v3322 = vsel %vm592, %v3310, %v3312
        %v3323 = vsel %vm592, %v3314, %v3316
        %v3336 = vsel %vm715, %v3048, %v3118
        %v3337 = vsel %vm715, %v3049, %v3093
        %v3338 = vsel %vm729, %v3124, %v3193
        %v3339 = vsel %vm729, %v3117, %v3168
        %v3340 = vsel %vm743, %v3199, %v3268
        %v3341 = vsel %vm743, %v3192, %v3243
        %v3342 = vld [vmem:[%s5] sm:$0xff]
        %v3343 = vld [vmem:[%s5 + $0x8] sm:$0xff]
        %v3344 = vld [vmem:[%s5 + $0x10] sm:$0xff]
        %v3345 = vld [vmem:[%s5 + $0x18] sm:$0xff]
        %v3346 = vld [vmem:[%s5 + $0x20] sm:$0xff]
        %v3347 = vld [vmem:[%s5 + $0x28] sm:$0xff]
        %v3348 = vld [vmem:[%s5 + $0x30] sm:$0xff]
        %v3349 = vld [vmem:[%s5 + $0x38] sm:$0xff]
        %v3350 = vld [vmem:[%s5 + $0x40] sm:$0xff]
        %v3351 = vld [vmem:[%s5 + $0x48] sm:$0xff]
        %v3352 = vld [vmem:[%s5 + $0x50] sm:$0xff]
        %v3353 = vld [vmem:[%s5 + $0x58] sm:$0xff]
        %v3354 = vld [vmem:[%s5 + $0x60] sm:$0xff]
        %v3355 = vld [vmem:[%s5 + $0x68] sm:$0xff]
        %v3356 = vld [vmem:[%s5 + $0x70] sm:$0xff]
        %v3357 = vld [vmem:[%s5 + $0x78] sm:$0xff]
        %v3358 = vld [vmem:[%s5 + $0x80] sm:$0xff]
        %v3359 = vld [vmem:[%s5 + $0x88] sm:$0xff]
        %v3360 = vld [vmem:[%s5 + $0x90] sm:$0xff]
        %v3361 = vld [vmem:[%s5 + $0x98] sm:$0xff]
        %v3362 = vld [vmem:[%s5 + $0xa0] sm:$0xff]
        %v3363 = vld [vmem:[%s5 + $0xa8] sm:$0xff]
        %v3364 = vld [vmem:[%s5 + $0xb0] sm:$0xff]
        %v3365 = vld [vmem:[%s5 + $0xb8] sm:$0xff]
        %v3366 = vld [vmem:[%s5 + $0xc0] sm:$0xf]
        %v3367 = vld [vmem:[%s5 + $0xc8] sm:$0xf]
        %v3368 = vld [vmem:[%s6] sm:$0xff]
        %v3369 = vld [vmem:[%s6 + $0x8] sm:$0xff]
        %v3370 = vld [vmem:[%s6 + $0x10] sm:$0xff]
        %v3371 = vld [vmem:[%s6 + $0x18] sm:$0xff]
        %v3372 = vld [vmem:[%s6 + $0x20] sm:$0xff]
        %v3373 = vld [vmem:[%s6 + $0x28] sm:$0xff]
        %v3374 = vld [vmem:[%s6 + $0x30] sm:$0xff]
        %v3375 = vld [vmem:[%s6 + $0x38] sm:$0xff]
        %v3376 = vld [vmem:[%s6 + $0x40] sm:$0xff]
        %v3377 = vld [vmem:[%s6 + $0x48] sm:$0xff]
        %v3378 = vld [vmem:[%s6 + $0x50] sm:$0xff]
        %v3379 = vld [vmem:[%s6 + $0x58] sm:$0xff]
        %v3380 = vld [vmem:[%s6 + $0x60] sm:$0xf]
        %3382 = vset.pattern.permute.xlu0 0
        %3383 = vperm.xlu0 %3382, %v3368
        %v3384 = vpop.permute.xlu0 %3383
        %3387 = vset.pattern.permute.xlu0 0
        %3388 = vperm.xlu0 %3387, %v3369
        %v3389 = vpop.permute.xlu0 %3388
        %3392 = vset.pattern.permute.xlu0 0
        %3393 = vperm.xlu0 %3392, %v3370
        %v3394 = vpop.permute.xlu0 %3393
        %3397 = vset.pattern.permute.xlu0 0
        %3398 = vperm.xlu0 %3397, %v3371
        %v3399 = vpop.permute.xlu0 %3398
        %3402 = vset.pattern.permute.xlu0 0
        %3403 = vperm.xlu0 %3402, %v3372
        %v3404 = vpop.permute.xlu0 %3403
        %3407 = vset.pattern.permute.xlu0 0
        %3408 = vperm.xlu0 %3407, %v3373
        %v3409 = vpop.permute.xlu0 %3408
        %3412 = vset.pattern.permute.xlu0 0
        %3413 = vperm.xlu0 %3412, %v3374
        %v3414 = vpop.permute.xlu0 %3413
        %3417 = vset.pattern.permute.xlu0 0
        %3418 = vperm.xlu0 %3417, %v3375
        %v3419 = vpop.permute.xlu0 %3418
        %3422 = vset.pattern.permute.xlu0 0
        %3423 = vperm.xlu0 %3422, %v3376
        %v3424 = vpop.permute.xlu0 %3423
        %3427 = vset.pattern.permute.xlu0 0
        %3428 = vperm.xlu0 %3427, %v3377
        %v3429 = vpop.permute.xlu0 %3428
        %3432 = vset.pattern.permute.xlu0 0
        %3433 = vperm.xlu0 %3432, %v3378
        %v3434 = vpop.permute.xlu0 %3433
        %3437 = vset.pattern.permute.xlu0 0
        %3438 = vperm.xlu0 %3437, %v3379
        %v3439 = vpop.permute.xlu0 %3438
        %3442 = vset.pattern.permute.xlu0 0
        %3443 = vperm.xlu0 %3442, %v3380
        %v3444 = vpop.permute.xlu0 %3443
        %vm3446 = vcmask 998400
        %v3448 = vsel %vm3446, %v3343, 0
        %v3451 = vsel %vm3446, %v3345, 0
        %v3454 = vsel %vm3446, %v3347, 0
        %v3457 = vsel %vm3446, %v3349, 0
        %v3460 = vsel %vm3446, %v3351, 0
        %v3463 = vsel %vm3446, %v3353, 0
        %v3466 = vsel %vm3446, %v3355, 0
        %v3469 = vsel %vm3446, %v3357, 0
        %v3472 = vsel %vm3446, %v3359, 0
        %v3475 = vsel %vm3446, %v3361, 0
        %v3478 = vsel %vm3446, %v3363, 0
        %v3481 = vsel %vm3446, %v3365, 0
        %v3484 = vsel %vm3446, %v3367, 0
        %v3486 = vsel %vm715, %v3323, 0
        %v3488 = vsel %vm715, %v3316, 0
        %3490 = vmatpush.msra.mxu0 %v3196
        %3491 = vmatpush.msra.mxu0 %v3195
        %3492 = vmatpush.msra.mxu0 %v3194
        %3493 = vmatpush.msra.mxu0 %v3338
        %3494 = vmatpush.msra.mxu0 %v3123
        %3495 = vmatpush.msra.mxu0 %v3122
        %3496 = vmatpush.msra.mxu0 %v3121
        %3497 = vmatpush.msra.mxu0 %v3120
        %3498 = vmatpush.msra.mxu0 %v3119
        %3499 = vmatpush.msra.mxu0 %v3336
        %3500 = vmatpush.msra.mxu0 %v3046
        %3501 = vmatpush.msra.mxu0 %v3044
        %3502 = vmatpush.msra.mxu0 %v3042
        %3503 = vmatpush.msra.mxu0 %v3040
        %3504 = vmatpush.msra.mxu0 %v3038
        %3505 = vmatpush.msra.mxu0 %v3036
        %3506 = vmatmul.f32.gmra.mxu0 %v3342
        %v3507 = vpop.f32.mrf.mxu0
        %v3508 = vadd.f32 %v3384, %v3507
        %3509 = vmatmul.f32.gmra.mxu0 %v3344
        %v3510 = vpop.f32.mrf.mxu0
        %v3511 = vadd.f32 %v3389, %v3510
        %3512 = vmatmul.f32.gmra.mxu0 %v3346
        %v3513 = vpop.f32.mrf.mxu0
        %v3514 = vadd.f32 %v3394, %v3513
        %3515 = vmatmul.f32.gmra.mxu0 %v3348
        %v3516 = vpop.f32.mrf.mxu0
        %v3517 = vadd.f32 %v3399, %v3516
        %3518 = vmatmul.f32.gmra.mxu0 %v3350
        %v3519 = vpop.f32.mrf.mxu0
        %v3520 = vadd.f32 %v3404, %v3519
        %3521 = vmatmul.f32.gmra.mxu0 %v3352
        %v3522 = vpop.f32.mrf.mxu0
        %v3523 = vadd.f32 %v3409, %v3522
        %3524 = vmatmul.f32.gmra.mxu0 %v3354
        %v3525 = vpop.f32.mrf.mxu0
        %v3526 = vadd.f32 %v3414, %v3525
        %3527 = vmatmul.f32.gmra.mxu0 %v3356
        %v3528 = vpop.f32.mrf.mxu0
        %v3529 = vadd.f32 %v3419, %v3528
        %3530 = vmatmul.f32.gmra.mxu0 %v3358
        %v3531 = vpop.f32.mrf.mxu0
        %v3532 = vadd.f32 %v3424, %v3531
        %3533 = vmatmul.f32.gmra.mxu0 %v3360
        %v3534 = vpop.f32.mrf.mxu0
        %v3535 = vadd.f32 %v3429, %v3534
        %3536 = vmatmul.f32.gmra.mxu0 %v3362
        %v3537 = vpop.f32.mrf.mxu0
        %v3538 = vadd.f32 %v3434, %v3537
        %3539 = vmatmul.f32.gmra.mxu0 %v3364
        %v3540 = vpop.f32.mrf.mxu0
        %v3541 = vadd.f32 %v3439, %v3540
        %3542 = vmatmul.f32.gmra.mxu0 %v3366
        %v3543 = vpop.f32.mrf.mxu0
        %v3544 = vadd.f32 %v3444, %v3543
        %3545 = vdwg.mxu0
        %3546 = vmatpush.msra.mxu0 %v3486
        %3547 = vmatpush.msra.mxu0 %v3322
        %3548 = vmatpush.msra.mxu0 %v3321
        %3549 = vmatpush.msra.mxu0 %v3320
        %3550 = vmatpush.msra.mxu0 %v3319
        %3551 = vmatpush.msra.mxu0 %v3318
        %3552 = vmatpush.msra.mxu0 %v3317
        %3553 = vmatpush.msra.mxu0 %v3274
        %3554 = vmatpush.msra.mxu0 %v3273
        %3555 = vmatpush.msra.mxu0 %v3272
        %3556 = vmatpush.msra.mxu0 %v3271
        %3557 = vmatpush.msra.mxu0 %v3270
        %3558 = vmatpush.msra.mxu0 %v3269
        %3559 = vmatpush.msra.mxu0 %v3340
        %3560 = vmatpush.msra.mxu0 %v3198
        %3561 = vmatpush.msra.mxu0 %v3197
        %3562 = vmatmul.f32.gmra.mxu0 %v3448
        %v3563 = vpop.f32.mrf.mxu0
        %v3564 = vadd.f32 %v3508, %v3563
        %3565 = vmatmul.f32.gmra.mxu0 %v3451
        %v3566 = vpop.f32.mrf.mxu0
        %v3567 = vadd.f32 %v3511, %v3566
        %3568 = vmatmul.f32.gmra.mxu0 %v3454
        %v3569 = vpop.f32.mrf.mxu0
        %v3570 = vadd.f32 %v3514, %v3569
        %3571 = vmatmul.f32.gmra.mxu0 %v3457
        %v3572 = vpop.f32.mrf.mxu0
        %v3573 = vadd.f32 %v3517, %v3572
        %3574 = vmatmul.f32.gmra.mxu0 %v3460
        %v3575 = vpop.f32.mrf.mxu0
        %v3576 = vadd.f32 %v3520, %v3575
        %3577 = vmatmul.f32.gmra.mxu0 %v3463
        %v3578 = vpop.f32.mrf.mxu0
        %v3579 = vadd.f32 %v3523, %v3578
        %3580 = vmatmul.f32.gmra.mxu0 %v3466
        %v3581 = vpop.f32.mrf.mxu0
        %v3582 = vadd.f32 %v3526, %v3581
        %3583 = vmatmul.f32.gmra.mxu0 %v3469
        %v3584 = vpop.f32.mrf.mxu0
        %v3585 = vadd.f32 %v3529, %v3584
        %3586 = vmatmul.f32.gmra.mxu0 %v3472
        %v3587 = vpop.f32.mrf.mxu0
        %v3588 = vadd.f32 %v3532, %v3587
        %3589 = vmatmul.f32.gmra.mxu0 %v3475
        %v3590 = vpop.f32.mrf.mxu0
        %v3591 = vadd.f32 %v3535, %v3590
        %3592 = vmatmul.f32.gmra.mxu0 %v3478
        %v3593 = vpop.f32.mrf.mxu0
        %v3594 = vadd.f32 %v3538, %v3593
        %3595 = vmatmul.f32.gmra.mxu0 %v3481
        %v3596 = vpop.f32.mrf.mxu0
        %v3597 = vadd.f32 %v3541, %v3596
        %3598 = vmatmul.f32.gmra.mxu0 %v3484
        %v3599 = vpop.f32.mrf.mxu0
        %v3600 = vadd.f32 %v3544, %v3599
        %3601 = vdwg.mxu0
        %3602 = vmatpush.msra.mxu0 %v3180
        %3603 = vmatpush.msra.mxu0 %v3176
        %3604 = vmatpush.msra.mxu0 %v3172
        %3605 = vmatpush.msra.mxu0 %v3339
        %3606 = vmatpush.msra.mxu0 %v3113
        %3607 = vmatpush.msra.mxu0 %v3109
        %3608 = vmatpush.msra.mxu0 %v3105
        %3609 = vmatpush.msra.mxu0 %v3101
        %3610 = vmatpush.msra.mxu0 %v3097
        %3611 = vmatpush.msra.mxu0 %v3337
        %3612 = vmatpush.msra.mxu0 %v3047
        %3613 = vmatpush.msra.mxu0 %v3045
        %3614 = vmatpush.msra.mxu0 %v3043
        %3615 = vmatpush.msra.mxu0 %v3041
        %3616 = vmatpush.msra.mxu0 %v3039
        %3617 = vmatpush.msra.mxu0 %v3037
        %3618 = vmatmul.f32.gmra.mxu0 %v3342
        %v3619 = vpop.f32.mrf.mxu0
        %v3620 = vadd.f32 %v3384, %v3619
        %3621 = vmatmul.f32.gmra.mxu0 %v3344
        %v3622 = vpop.f32.mrf.mxu0
        %v3623 = vadd.f32 %v3389, %v3622
        %3624 = vmatmul.f32.gmra.mxu0 %v3346
        %v3625 = vpop.f32.mrf.mxu0
        %v3626 = vadd.f32 %v3394, %v3625
        %3627 = vmatmul.f32.gmra.mxu0 %v3348
        %v3628 = vpop.f32.mrf.mxu0
        %v3629 = vadd.f32 %v3399, %v3628
        %3630 = vmatmul.f32.gmra.mxu0 %v3350
        %v3631 = vpop.f32.mrf.mxu0
        %v3632 = vadd.f32 %v3404, %v3631
        %3633 = vmatmul.f32.gmra.mxu0 %v3352
        %v3634 = vpop.f32.mrf.mxu0
        %v3635 = vadd.f32 %v3409, %v3634
        %3636 = vmatmul.f32.gmra.mxu0 %v3354
        %v3637 = vpop.f32.mrf.mxu0
        %v3638 = vadd.f32 %v3414, %v3637
        %3639 = vmatmul.f32.gmra.mxu0 %v3356
        %v3640 = vpop.f32.mrf.mxu0
        %v3641 = vadd.f32 %v3419, %v3640
        %3642 = vmatmul.f32.gmra.mxu0 %v3358
        %v3643 = vpop.f32.mrf.mxu0
        %v3644 = vadd.f32 %v3424, %v3643
        %3645 = vmatmul.f32.gmra.mxu0 %v3360
        %v3646 = vpop.f32.mrf.mxu0
        %v3647 = vadd.f32 %v3429, %v3646
        %3648 = vmatmul.f32.gmra.mxu0 %v3362
        %v3649 = vpop.f32.mrf.mxu0
        %v3650 = vadd.f32 %v3434, %v3649
        %3651 = vmatmul.f32.gmra.mxu0 %v3364
        %v3652 = vpop.f32.mrf.mxu0
        %v3653 = vadd.f32 %v3439, %v3652
        %3654 = vmatmul.f32.gmra.mxu0 %v3366
        %v3655 = vpop.f32.mrf.mxu0
        %v3656 = vadd.f32 %v3444, %v3655
        %3657 = vdwg.mxu0
        %3658 = vmatpush.msra.mxu0 %v3488
        %3659 = vmatpush.msra.mxu0 %v3312
        %3660 = vmatpush.msra.mxu0 %v3308
        %3661 = vmatpush.msra.mxu0 %v3304
        %3662 = vmatpush.msra.mxu0 %v3300
        %3663 = vmatpush.msra.mxu0 %v3296
        %3664 = vmatpush.msra.mxu0 %v3292
        %3665 = vmatpush.msra.mxu0 %v3267
        %3666 = vmatpush.msra.mxu0 %v3263
        %3667 = vmatpush.msra.mxu0 %v3259
        %3668 = vmatpush.msra.mxu0 %v3255
        %3669 = vmatpush.msra.mxu0 %v3251
        %3670 = vmatpush.msra.mxu0 %v3247
        %3671 = vmatpush.msra.mxu0 %v3341
        %3672 = vmatpush.msra.mxu0 %v3188
        %3673 = vmatpush.msra.mxu0 %v3184
        %3674 = vmatmul.f32.gmra.mxu0 %v3448
        %v3675 = vpop.f32.mrf.mxu0
        %v3676 = vadd.f32 %v3620, %v3675
        %3677 = vmatmul.f32.gmra.mxu0 %v3451
        %v3678 = vpop.f32.mrf.mxu0
        %v3679 = vadd.f32 %v3623, %v3678
        %3680 = vmatmul.f32.gmra.mxu0 %v3454
        %v3681 = vpop.f32.mrf.mxu0
        %v3682 = vadd.f32 %v3626, %v3681
        %3683 = vmatmul.f32.gmra.mxu0 %v3457
        %v3684 = vpop.f32.mrf.mxu0
        %v3685 = vadd.f32 %v3629, %v3684
        %3686 = vmatmul.f32.gmra.mxu0 %v3460
        %v3687 = vpop.f32.mrf.mxu0
        %v3688 = vadd.f32 %v3632, %v3687
        %3689 = vmatmul.f32.gmra.mxu0 %v3463
        %v3690 = vpop.f32.mrf.mxu0
        %v3691 = vadd.f32 %v3635, %v3690
        %3692 = vmatmul.f32.gmra.mxu0 %v3466
        %v3693 = vpop.f32.mrf.mxu0
        %v3694 = vadd.f32 %v3638, %v3693
        %3695 = vmatmul.f32.gmra.mxu0 %v3469
        %v3696 = vpop.f32.mrf.mxu0
        %v3697 = vadd.f32 %v3641, %v3696
        %3698 = vmatmul.f32.gmra.mxu0 %v3472
        %v3699 = vpop.f32.mrf.mxu0
        %v3700 = vadd.f32 %v3644, %v3699
        %3701 = vmatmul.f32.gmra.mxu0 %v3475
        %v3702 = vpop.f32.mrf.mxu0
        %v3703 = vadd.f32 %v3647, %v3702
        %3704 = vmatmul.f32.gmra.mxu0 %v3478
        %v3705 = vpop.f32.mrf.mxu0
        %v3706 = vadd.f32 %v3650, %v3705
        %3707 = vmatmul.f32.gmra.mxu0 %v3481
        %v3708 = vpop.f32.mrf.mxu0
        %v3709 = vadd.f32 %v3653, %v3708
        %3710 = vmatmul.f32.gmra.mxu0 %v3484
        %v3711 = vpop.f32.mrf.mxu0
        %v3712 = vadd.f32 %v3656, %v3711
        %3713 = vdwg.mxu0
        %v3714 = vld [vmem:[%s13] sm:$0xff]
        %v3715 = vld [vmem:[%s13 + $0x8] sm:$0xff]
        %v3716 = vld [vmem:[%s13 + $0x10] sm:$0xff]
        %v3717 = vld [vmem:[%s13 + $0x18] sm:$0xff]
        %v3718 = vld [vmem:[%s13 + $0x20] sm:$0xff]
        %v3719 = vld [vmem:[%s13 + $0x28] sm:$0xff]
        %v3720 = vld [vmem:[%s13 + $0x30] sm:$0xff]
        %v3721 = vld [vmem:[%s13 + $0x38] sm:$0xff]
        %v3722 = vld [vmem:[%s13 + $0x40] sm:$0xff]
        %v3723 = vld [vmem:[%s13 + $0x48] sm:$0xff]
        %v3724 = vld [vmem:[%s13 + $0x50] sm:$0xff]
        %v3725 = vld [vmem:[%s13 + $0x58] sm:$0xff]
        %v3726 = vld [vmem:[%s13 + $0x60] sm:$0xff]
        %v3727 = vld [vmem:[%s13 + $0x68] sm:$0xff]
        %v3728 = vld [vmem:[%s13 + $0x70] sm:$0xff]
        %v3729 = vld [vmem:[%s13 + $0x78] sm:$0xff]
        %v3730 = vld [vmem:[%s13 + $0x80] sm:$0xff]
        %v3731 = vld [vmem:[%s13 + $0x88] sm:$0xff]
        %v3732 = vld [vmem:[%s13 + $0x90] sm:$0xff]
        %v3733 = vld [vmem:[%s13 + $0x98] sm:$0xff]
        %v3734 = vld [vmem:[%s13 + $0xa0] sm:$0xff]
        %v3735 = vld [vmem:[%s13 + $0xa8] sm:$0xff]
        %v3736 = vld [vmem:[%s13 + $0xb0] sm:$0x7]
        %3763 = vrot.lane.b32.xlu0 %v3564, 127
        %v3764 = vpop.permute.xlu0 %3763
        %3765 = vrot.lane.b32.xlu0 %v3676, 127
        %v3766 = vpop.permute.xlu0 %3765
        %3767 = vrot.lane.b32.xlu0 %v3567, 127
        %v3768 = vpop.permute.xlu0 %3767
        %3769 = vrot.lane.b32.xlu0 %v3679, 127
        %v3770 = vpop.permute.xlu0 %3769
        %3771 = vrot.lane.b32.xlu0 %v3570, 127
        %v3772 = vpop.permute.xlu0 %3771
        %3773 = vrot.lane.b32.xlu0 %v3682, 127
        %v3774 = vpop.permute.xlu0 %3773
        %3775 = vrot.lane.b32.xlu0 %v3573, 127
        %v3776 = vpop.permute.xlu0 %3775
        %3777 = vrot.lane.b32.xlu0 %v3685, 127
        %v3778 = vpop.permute.xlu0 %3777
        %3779 = vrot.lane.b32.xlu0 %v3576, 127
        %v3780 = vpop.permute.xlu0 %3779
        %3781 = vrot.lane.b32.xlu0 %v3688, 127
        %v3782 = vpop.permute.xlu0 %3781
        %3783 = vrot.lane.b32.xlu0 %v3579, 127
        %v3784 = vpop.permute.xlu0 %3783
        %3785 = vrot.lane.b32.xlu0 %v3691, 127
        %v3786 = vpop.permute.xlu0 %3785
        %3787 = vrot.lane.b32.xlu0 %v3582, 127
        %v3788 = vpop.permute.xlu0 %3787
        %3789 = vrot.lane.b32.xlu0 %v3694, 127
        %v3790 = vpop.permute.xlu0 %3789
        %3791 = vrot.lane.b32.xlu0 %v3585, 127
        %v3792 = vpop.permute.xlu0 %3791
        %3793 = vrot.lane.b32.xlu0 %v3697, 127
        %v3794 = vpop.permute.xlu0 %3793
        %3795 = vrot.lane.b32.xlu0 %v3588, 127
        %v3796 = vpop.permute.xlu0 %3795
        %3797 = vrot.lane.b32.xlu0 %v3700, 127
        %v3798 = vpop.permute.xlu0 %3797
        %3799 = vrot.lane.b32.xlu0 %v3591, 127
        %v3800 = vpop.permute.xlu0 %3799
        %3801 = vrot.lane.b32.xlu0 %v3703, 127
        %v3802 = vpop.permute.xlu0 %3801
        %3803 = vrot.lane.b32.xlu0 %v3594, 127
        %v3804 = vpop.permute.xlu0 %3803
        %3805 = vrot.lane.b32.xlu0 %v3706, 127
        %v3806 = vpop.permute.xlu0 %3805
        %3807 = vrot.lane.b32.xlu0 %v3597, 127
        %v3808 = vpop.permute.xlu0 %3807
        %3809 = vrot.lane.b32.xlu0 %v3709, 127
        %v3810 = vpop.permute.xlu0 %3809
        %3811 = vrot.lane.b32.xlu0 %v3600, 127
        %v3812 = vpop.permute.xlu0 %3811
        %3813 = vrot.lane.b32.xlu0 %v3712, 127
        %v3814 = vpop.permute.xlu0 %3813
        %v3815 = vsel %vm520, %v3764, %v3766
        %v3816 = vsel %vm520, %v3768, %v3770
        %v3817 = vsel %vm520, %v3772, %v3774
        %v3818 = vsel %vm520, %v3776, %v3778
        %v3819 = vsel %vm520, %v3780, %v3782
        %v3820 = vsel %vm520, %v3784, %v3786
        %v3821 = vsel %vm520, %v3788, %v3790
        %v3822 = vsel %vm520, %v3792, %v3794
        %v3823 = vsel %vm520, %v3796, %v3798
        %v3824 = vsel %vm520, %v3800, %v3802
        %v3825 = vsel %vm520, %v3804, %v3806
        %v3826 = vsel %vm520, %v3808, %v3810
        %v3827 = vsel %vm520, %v3812, %v3814
        %v3854 = vmax.f32 %v3564, %v3815
        %v3855 = vmax.f32 %v3676, %v3766
        %v3856 = vmax.f32 %v3567, %v3816
        %v3857 = vmax.f32 %v3679, %v3770
        %v3858 = vmax.f32 %v3570, %v3817
        %v3859 = vmax.f32 %v3682, %v3774
        %v3860 = vmax.f32 %v3573, %v3818
        %v3861 = vmax.f32 %v3685, %v3778
        %v3862 = vmax.f32 %v3576, %v3819
        %v3863 = vmax.f32 %v3688, %v3782
        %v3864 = vmax.f32 %v3579, %v3820
        %v3865 = vmax.f32 %v3691, %v3786
        %v3866 = vmax.f32 %v3582, %v3821
        %v3867 = vmax.f32 %v3694, %v3790
        %v3868 = vmax.f32 %v3585, %v3822
        %v3869 = vmax.f32 %v3697, %v3794
        %v3870 = vmax.f32 %v3588, %v3823
        %v3871 = vmax.f32 %v3700, %v3798
        %v3872 = vmax.f32 %v3591, %v3824
        %v3873 = vmax.f32 %v3703, %v3802
        %v3874 = vmax.f32 %v3594, %v3825
        %v3875 = vmax.f32 %v3706, %v3806
        %v3876 = vmax.f32 %v3597, %v3826
        %v3877 = vmax.f32 %v3709, %v3810
        %v3878 = vmax.f32 %v3600, %v3827
        %v3879 = vmax.f32 %v3712, %v3814
        %vm3880 = vcmask 416768
        %v3882 = vsel %vm3880, %v3855, 0
        %v3885 = vsel %vm3880, %v3857, 0
        %v3888 = vsel %vm3880, %v3859, 0
        %v3891 = vsel %vm3880, %v3861, 0
        %v3894 = vsel %vm3880, %v3863, 0
        %v3897 = vsel %vm3880, %v3865, 0
        %v3900 = vsel %vm3880, %v3867, 0
        %v3903 = vsel %vm3880, %v3869, 0
        %v3906 = vsel %vm3880, %v3871, 0
        %v3909 = vsel %vm3880, %v3873, 0
        %v3912 = vsel %vm3880, %v3875, 0
        %v3915 = vsel %vm3880, %v3877, 0
        %v3918 = vsel %vm3880, %v3879, 0
        %v3921 = vsel %vm722, %v3736, 0
        %3923 = vmatpush.msra.mxu0 %v3729
        %3924 = vmatpush.msra.mxu0 %v3728
        %3925 = vmatpush.msra.mxu0 %v3727
        %3926 = vmatpush.msra.mxu0 %v3726
        %3927 = vmatpush.msra.mxu0 %v3725
        %3928 = vmatpush.msra.mxu0 %v3724
        %3929 = vmatpush.msra.mxu0 %v3723
        %3930 = vmatpush.msra.mxu0 %v3722
        %3931 = vmatpush.msra.mxu0 %v3721
        %3932 = vmatpush.msra.mxu0 %v3720
        %3933 = vmatpush.msra.mxu0 %v3719
        %3934 = vmatpush.msra.mxu0 %v3718
        %3935 = vmatpush.msra.mxu0 %v3717
        %3936 = vmatpush.msra.mxu0 %v3716
        %3937 = vmatpush.msra.mxu0 %v3715
        %3938 = vmatpush.msra.mxu0 %v3714
        %3939 = vmatmul.f32.gmra.mxu0 %v3854
        %v3940 = vpop.f32.mrf.mxu0
        %v3941 = vadd.f32 0.0, %v3940
        %3942 = vmatmul.f32.gmra.mxu0 %v3856
        %v3943 = vpop.f32.mrf.mxu0
        %v3944 = vadd.f32 0.0, %v3943
        %3945 = vmatmul.f32.gmra.mxu0 %v3858
        %v3946 = vpop.f32.mrf.mxu0
        %v3947 = vadd.f32 0.0, %v3946
        %3948 = vmatmul.f32.gmra.mxu0 %v3860
        %v3949 = vpop.f32.mrf.mxu0
        %v3950 = vadd.f32 0.0, %v3949
        %3951 = vmatmul.f32.gmra.mxu0 %v3862
        %v3952 = vpop.f32.mrf.mxu0
        %v3953 = vadd.f32 0.0, %v3952
        %3954 = vmatmul.f32.gmra.mxu0 %v3864
        %v3955 = vpop.f32.mrf.mxu0
        %v3956 = vadd.f32 0.0, %v3955
        %3957 = vmatmul.f32.gmra.mxu0 %v3866
        %v3958 = vpop.f32.mrf.mxu0
        %v3959 = vadd.f32 0.0, %v3958
        %3960 = vmatmul.f32.gmra.mxu0 %v3868
        %v3961 = vpop.f32.mrf.mxu0
        %v3962 = vadd.f32 0.0, %v3961
        %3963 = vmatmul.f32.gmra.mxu0 %v3870
        %v3964 = vpop.f32.mrf.mxu0
        %v3965 = vadd.f32 0.0, %v3964
        %3966 = vmatmul.f32.gmra.mxu0 %v3872
        %v3967 = vpop.f32.mrf.mxu0
        %v3968 = vadd.f32 0.0, %v3967
        %3969 = vmatmul.f32.gmra.mxu0 %v3874
        %v3970 = vpop.f32.mrf.mxu0
        %v3971 = vadd.f32 0.0, %v3970
        %3972 = vmatmul.f32.gmra.mxu0 %v3876
        %v3973 = vpop.f32.mrf.mxu0
        %v3974 = vadd.f32 0.0, %v3973
        %3975 = vmatmul.f32.gmra.mxu0 %v3878
        %v3976 = vpop.f32.mrf.mxu0
        %v3977 = vadd.f32 0.0, %v3976
        %3978 = vdwg.mxu0
        %3979 = vmatpush.msra.mxu0 0.0
        %3980 = vmatpush.msra.mxu0 0.0
        %3981 = vmatpush.msra.mxu0 0.0
        %3982 = vmatpush.msra.mxu0 0.0
        %3983 = vmatpush.msra.mxu0 0.0
        %3984 = vmatpush.msra.mxu0 0.0
        %3985 = vmatpush.msra.mxu0 0.0
        %3986 = vmatpush.msra.mxu0 0.0
        %3987 = vmatpush.msra.mxu0 0.0
        %3988 = vmatpush.msra.mxu0 %v3921
        %3989 = vmatpush.msra.mxu0 %v3735
        %3990 = vmatpush.msra.mxu0 %v3734
        %3991 = vmatpush.msra.mxu0 %v3733
        %3992 = vmatpush.msra.mxu0 %v3732
        %3993 = vmatpush.msra.mxu0 %v3731
        %3994 = vmatpush.msra.mxu0 %v3730
        %3995 = vmatmul.f32.gmra.mxu0 %v3882
        %v3996 = vpop.f32.mrf.mxu0
        %v3997 = vadd.f32 %v3941, %v3996
        %3998 = vmatmul.f32.gmra.mxu0 %v3885
        %v3999 = vpop.f32.mrf.mxu0
        %v4000 = vadd.f32 %v3944, %v3999
        %4001 = vmatmul.f32.gmra.mxu0 %v3888
        %v4002 = vpop.f32.mrf.mxu0
        %v4003 = vadd.f32 %v3947, %v4002
        %4004 = vmatmul.f32.gmra.mxu0 %v3891
        %v4005 = vpop.f32.mrf.mxu0
        %v4006 = vadd.f32 %v3950, %v4005
        %4007 = vmatmul.f32.gmra.mxu0 %v3894
        %v4008 = vpop.f32.mrf.mxu0
        %v4009 = vadd.f32 %v3953, %v4008
        %4010 = vmatmul.f32.gmra.mxu0 %v3897
        %v4011 = vpop.f32.mrf.mxu0
        %v4012 = vadd.f32 %v3956, %v4011
        %4013 = vmatmul.f32.gmra.mxu0 %v3900
        %v4014 = vpop.f32.mrf.mxu0
        %v4015 = vadd.f32 %v3959, %v4014
        %4016 = vmatmul.f32.gmra.mxu0 %v3903
        %v4017 = vpop.f32.mrf.mxu0
        %v4018 = vadd.f32 %v3962, %v4017
        %4019 = vmatmul.f32.gmra.mxu0 %v3906
        %v4020 = vpop.f32.mrf.mxu0
        %v4021 = vadd.f32 %v3965, %v4020
        %4022 = vmatmul.f32.gmra.mxu0 %v3909
        %v4023 = vpop.f32.mrf.mxu0
        %v4024 = vadd.f32 %v3968, %v4023
        %4025 = vmatmul.f32.gmra.mxu0 %v3912
        %v4026 = vpop.f32.mrf.mxu0
        %v4027 = vadd.f32 %v3971, %v4026
        %4028 = vmatmul.f32.gmra.mxu0 %v3915
        %v4029 = vpop.f32.mrf.mxu0
        %v4030 = vadd.f32 %v3974, %v4029
        %4031 = vmatmul.f32.gmra.mxu0 %v3918
        %v4032 = vpop.f32.mrf.mxu0
        %v4033 = vadd.f32 %v3977, %v4032
        %4034 = vdwg.mxu0
        %vm4035 = vcmp.gt.f32.partialorder %v3997, 0.0
        %vm4036 = vcmp.gt.f32.partialorder %v4000, 0.0
        %vm4037 = vcmp.gt.f32.partialorder %v4003, 0.0
        %vm4038 = vcmp.gt.f32.partialorder %v4006, 0.0
        %vm4039 = vcmp.gt.f32.partialorder %v4009, 0.0
        %vm4040 = vcmp.gt.f32.partialorder %v4012, 0.0
        %vm4041 = vcmp.gt.f32.partialorder %v4015, 0.0
        %vm4042 = vcmp.gt.f32.partialorder %v4018, 0.0
        %vm4043 = vcmp.gt.f32.partialorder %v4021, 0.0
        %vm4044 = vcmp.gt.f32.partialorder %v4024, 0.0
        %vm4045 = vcmp.gt.f32.partialorder %v4027, 0.0
        %vm4046 = vcmp.gt.f32.partialorder %v4030, 0.0
        %vm4047 = vcmp.gt.f32.partialorder %v4033, 0.0
        %v4048 = vmin.f32 %v3997, 0.0
        %v4049 = vmin.f32 %v4000, 0.0
        %v4050 = vmin.f32 %v4003, 0.0
        %v4051 = vmin.f32 %v4006, 0.0
        %v4052 = vmin.f32 %v4009, 0.0
        %v4053 = vmin.f32 %v4012, 0.0
        %v4054 = vmin.f32 %v4015, 0.0
        %v4055 = vmin.f32 %v4018, 0.0
        %v4056 = vmin.f32 %v4021, 0.0
        %v4057 = vmin.f32 %v4024, 0.0
        %v4058 = vmin.f32 %v4027, 0.0
        %v4059 = vmin.f32 %v4030, 0.0
        %v4060 = vmin.f32 %v4033, 0.0
        %v4061 = vmul.f32 %v4048, 1.442695
        %v4062 = vpow.pop %v4061
        %v4063 = vmul.f32 %v4049, 1.442695
        %v4064 = vpow.pop %v4063
        %v4065 = vmul.f32 %v4050, 1.442695
        %v4066 = vpow.pop %v4065
        %v4067 = vmul.f32 %v4051, 1.442695
        %v4068 = vpow.pop %v4067
        %v4069 = vmul.f32 %v4052, 1.442695
        %v4070 = vpow.pop %v4069
        %v4071 = vmul.f32 %v4053, 1.442695
        %v4072 = vpow.pop %v4071
        %v4073 = vmul.f32 %v4054, 1.442695
        %v4074 = vpow.pop %v4073
        %v4075 = vmul.f32 %v4055, 1.442695
        %v4076 = vpow.pop %v4075
        %v4077 = vmul.f32 %v4056, 1.442695
        %v4078 = vpow.pop %v4077
        %v4079 = vmul.f32 %v4057, 1.442695
        %v4080 = vpow.pop %v4079
        %v4081 = vmul.f32 %v4058, 1.442695
        %v4082 = vpow.pop %v4081
        %v4083 = vmul.f32 %v4059, 1.442695
        %v4084 = vpow.pop %v4083
        %v4085 = vmul.f32 %v4060, 1.442695
        %v4086 = vpow.pop %v4085
        %v4087 = vsub.f32 %v4062, 1.0
        %v4088 = vsub.f32 %v4064, 1.0
        %v4089 = vsub.f32 %v4066, 1.0
        %v4090 = vsub.f32 %v4068, 1.0
        %v4091 = vsub.f32 %v4070, 1.0
        %v4092 = vsub.f32 %v4072, 1.0
        %v4093 = vsub.f32 %v4074, 1.0
        %v4094 = vsub.f32 %v4076, 1.0
        %v4095 = vsub.f32 %v4078, 1.0
        %v4096 = vsub.f32 %v4080, 1.0
        %v4097 = vsub.f32 %v4082, 1.0
        %v4098 = vsub.f32 %v4084, 1.0
        %v4099 = vsub.f32 %v4086, 1.0
        %v4100 = vsel %vm4035, %v3997, %v4087
        %v4101 = vsel %vm4036, %v4000, %v4088
        %v4102 = vsel %vm4037, %v4003, %v4089
        %v4103 = vsel %vm4038, %v4006, %v4090
        %v4104 = vsel %vm4039, %v4009, %v4091
        %v4105 = vsel %vm4040, %v4012, %v4092
        %v4106 = vsel %vm4041, %v4015, %v4093
        %v4107 = vsel %vm4042, %v4018, %v4094
        %v4108 = vsel %vm4043, %v4021, %v4095
        %v4109 = vsel %vm4044, %v4024, %v4096
        %v4110 = vsel %vm4045, %v4027, %v4097
        %v4111 = vsel %vm4046, %v4030, %v4098
        %v4112 = vsel %vm4047, %v4033, %v4099
        %v4126 = vrot.slane %v4100, 4
        %v4127 = vrot.slane %v4101, 4
        %v4128 = vsel %vm729, %v4126, %v4127
        %v4129 = vrot.slane %v4102, 4
        %v4130 = vsel %vm729, %v4127, %v4129
        %v4131 = vrot.slane %v4103, 4
        %v4132 = vsel %vm729, %v4129, %v4131
        %v4133 = vrot.slane %v4104, 4
        %v4134 = vsel %vm729, %v4131, %v4133
        %v4135 = vrot.slane %v4105, 4
        %v4136 = vsel %vm729, %v4133, %v4135
        %v4137 = vrot.slane %v4106, 4
        %v4138 = vsel %vm729, %v4135, %v4137
        %v4139 = vrot.slane %v4107, 4
        %v4140 = vsel %vm729, %v4137, %v4139
        %v4141 = vrot.slane %v4108, 4
        %v4142 = vsel %vm729, %v4139, %v4141
        %v4143 = vrot.slane %v4109, 4
        %v4144 = vsel %vm729, %v4141, %v4143
        %v4145 = vrot.slane %v4110, 4
        %v4146 = vsel %vm729, %v4143, %v4145
        %v4147 = vrot.slane %v4111, 4
        %v4148 = vsel %vm729, %v4145, %v4147
        %v4149 = vrot.slane %v4112, 4
        %v4150 = vsel %vm729, %v4147, %v4149
        %4151 = vrot.lane.b32.xlu0 %v4126, 127
        %v4152 = vpop.permute.xlu0 %4151
        %4153 = vrot.lane.b32.xlu0 %v4128, 127
        %v4154 = vpop.permute.xlu0 %4153
        %4155 = vrot.lane.b32.xlu0 %v4130, 127
        %v4156 = vpop.permute.xlu0 %4155
        %4157 = vrot.lane.b32.xlu0 %v4132, 127
        %v4158 = vpop.permute.xlu0 %4157
        %4159 = vrot.lane.b32.xlu0 %v4134, 127
        %v4160 = vpop.permute.xlu0 %4159
        %4161 = vrot.lane.b32.xlu0 %v4136, 127
        %v4162 = vpop.permute.xlu0 %4161
        %4163 = vrot.lane.b32.xlu0 %v4138, 127
        %v4164 = vpop.permute.xlu0 %4163
        %4165 = vrot.lane.b32.xlu0 %v4140, 127
        %v4166 = vpop.permute.xlu0 %4165
        %4167 = vrot.lane.b32.xlu0 %v4142, 127
        %v4168 = vpop.permute.xlu0 %4167
        %4169 = vrot.lane.b32.xlu0 %v4144, 127
        %v4170 = vpop.permute.xlu0 %4169
        %4171 = vrot.lane.b32.xlu0 %v4146, 127
        %v4172 = vpop.permute.xlu0 %4171
        %4173 = vrot.lane.b32.xlu0 %v4148, 127
        %v4174 = vpop.permute.xlu0 %4173
        %4175 = vrot.lane.b32.xlu0 %v4150, 127
        %v4176 = vpop.permute.xlu0 %4175
        %4190 = vrot.lane.b32.xlu0 %v4100, 126
        %v4191 = vpop.permute.xlu0 %4190
        %4192 = vrot.lane.b32.xlu0 %v4101, 126
        %v4193 = vpop.permute.xlu0 %4192
        %4194 = vrot.lane.b32.xlu0 %v4102, 126
        %v4195 = vpop.permute.xlu0 %4194
        %4196 = vrot.lane.b32.xlu0 %v4103, 126
        %v4197 = vpop.permute.xlu0 %4196
        %4198 = vrot.lane.b32.xlu0 %v4104, 126
        %v4199 = vpop.permute.xlu0 %4198
        %4200 = vrot.lane.b32.xlu0 %v4105, 126
        %v4201 = vpop.permute.xlu0 %4200
        %4202 = vrot.lane.b32.xlu0 %v4106, 126
        %v4203 = vpop.permute.xlu0 %4202
        %4204 = vrot.lane.b32.xlu0 %v4107, 126
        %v4205 = vpop.permute.xlu0 %4204
        %4206 = vrot.lane.b32.xlu0 %v4108, 126
        %v4207 = vpop.permute.xlu0 %4206
        %4208 = vrot.lane.b32.xlu0 %v4109, 126
        %v4209 = vpop.permute.xlu0 %4208
        %4210 = vrot.lane.b32.xlu0 %v4110, 126
        %v4211 = vpop.permute.xlu0 %4210
        %4212 = vrot.lane.b32.xlu0 %v4111, 126
        %v4213 = vpop.permute.xlu0 %4212
        %4214 = vrot.lane.b32.xlu0 %v4112, 126
        %v4215 = vpop.permute.xlu0 %4214
        %4229 = vrot.lane.b32.xlu0 %v4126, 125
        %v4230 = vpop.permute.xlu0 %4229
        %4231 = vrot.lane.b32.xlu0 %v4128, 125
        %v4232 = vpop.permute.xlu0 %4231
        %4233 = vrot.lane.b32.xlu0 %v4130, 125
        %v4234 = vpop.permute.xlu0 %4233
        %4235 = vrot.lane.b32.xlu0 %v4132, 125
        %v4236 = vpop.permute.xlu0 %4235
        %4237 = vrot.lane.b32.xlu0 %v4134, 125
        %v4238 = vpop.permute.xlu0 %4237
        %4239 = vrot.lane.b32.xlu0 %v4136, 125
        %v4240 = vpop.permute.xlu0 %4239
        %4241 = vrot.lane.b32.xlu0 %v4138, 125
        %v4242 = vpop.permute.xlu0 %4241
        %4243 = vrot.lane.b32.xlu0 %v4140, 125
        %v4244 = vpop.permute.xlu0 %4243
        %4245 = vrot.lane.b32.xlu0 %v4142, 125
        %v4246 = vpop.permute.xlu0 %4245
        %4247 = vrot.lane.b32.xlu0 %v4144, 125
        %v4248 = vpop.permute.xlu0 %4247
        %4249 = vrot.lane.b32.xlu0 %v4146, 125
        %v4250 = vpop.permute.xlu0 %4249
        %4251 = vrot.lane.b32.xlu0 %v4148, 125
        %v4252 = vpop.permute.xlu0 %4251
        %4253 = vrot.lane.b32.xlu0 %v4150, 125
        %v4254 = vpop.permute.xlu0 %4253
        %4268 = vrot.lane.b32.xlu0 %v4100, 124
        %v4269 = vpop.permute.xlu0 %4268
        %4270 = vrot.lane.b32.xlu0 %v4101, 124
        %v4271 = vpop.permute.xlu0 %4270
        %4272 = vrot.lane.b32.xlu0 %v4102, 124
        %v4273 = vpop.permute.xlu0 %4272
        %4274 = vrot.lane.b32.xlu0 %v4103, 124
        %v4275 = vpop.permute.xlu0 %4274
        %4276 = vrot.lane.b32.xlu0 %v4104, 124
        %v4277 = vpop.permute.xlu0 %4276
        %4278 = vrot.lane.b32.xlu0 %v4105, 124
        %v4279 = vpop.permute.xlu0 %4278
        %4280 = vrot.lane.b32.xlu0 %v4106, 124
        %v4281 = vpop.permute.xlu0 %4280
        %4282 = vrot.lane.b32.xlu0 %v4107, 124
        %v4283 = vpop.permute.xlu0 %4282
        %4284 = vrot.lane.b32.xlu0 %v4108, 124
        %v4285 = vpop.permute.xlu0 %4284
        %4286 = vrot.lane.b32.xlu0 %v4109, 124
        %v4287 = vpop.permute.xlu0 %4286
        %4288 = vrot.lane.b32.xlu0 %v4110, 124
        %v4289 = vpop.permute.xlu0 %4288
        %4290 = vrot.lane.b32.xlu0 %v4111, 124
        %v4291 = vpop.permute.xlu0 %4290
        %4292 = vrot.lane.b32.xlu0 %v4112, 124
        %v4293 = vpop.permute.xlu0 %4292
        %v4306 = vsel %vm729, %v4112, %v4152
        %v4307 = vsel %vm729, %v4215, %v4230
        %v4308 = vld [vmem:[%s7] sm:$0xff]
        %v4309 = vld [vmem:[%s7 + $0x8] sm:$0xff]
        %v4310 = vld [vmem:[%s7 + $0x10] sm:$0xff]
        %v4311 = vld [vmem:[%s7 + $0x18] sm:$0xff]
        %v4312 = vld [vmem:[%s7 + $0x20] sm:$0xff]
        %v4313 = vld [vmem:[%s7 + $0x28] sm:$0xff]
        %v4314 = vld [vmem:[%s7 + $0x30] sm:$0xff]
        %v4315 = vld [vmem:[%s7 + $0x38] sm:$0xff]
        %v4316 = vld [vmem:[%s7 + $0x40] sm:$0xff]
        %v4317 = vld [vmem:[%s7 + $0x48] sm:$0xff]
        %v4318 = vld [vmem:[%s7 + $0x50] sm:$0xff]
        %v4319 = vld [vmem:[%s7 + $0x58] sm:$0xff]
        %v4320 = vld [vmem:[%s7 + $0x60] sm:$0xff]
        %v4321 = vld [vmem:[%s7 + $0x68] sm:$0xff]
        %v4322 = vld [vmem:[%s7 + $0x70] sm:$0xff]
        %v4323 = vld [vmem:[%s7 + $0x78] sm:$0xff]
        %v4324 = vld [vmem:[%s7 + $0x80] sm:$0xff]
        %v4325 = vld [vmem:[%s7 + $0x88] sm:$0xff]
        %v4326 = vld [vmem:[%s7 + $0x90] sm:$0xff]
        %v4327 = vld [vmem:[%s7 + $0x98] sm:$0xff]
        %v4328 = vld [vmem:[%s7 + $0xa0] sm:$0xff]
        %v4329 = vld [vmem:[%s7 + $0xa8] sm:$0xff]
        %v4330 = vld [vmem:[%s7 + $0xb0] sm:$0xff]
        %v4331 = vld [vmem:[%s7 + $0xb8] sm:$0xff]
        %v4332 = vld [vmem:[%s7 + $0xc0] sm:$0xff]
        %v4333 = vld [vmem:[%s7 + $0xc8] sm:$0xff]
        %v4334 = vld [vmem:[%s7 + $0xd0] sm:$0xff]
        %v4335 = vld [vmem:[%s7 + $0xd8] sm:$0xff]
        %v4336 = vld [vmem:[%s7 + $0xe0] sm:$0xff]
        %v4337 = vld [vmem:[%s7 + $0xe8] sm:$0xff]
        %v4338 = vld [vmem:[%s7 + $0xf0] sm:$0xff]
        %v4339 = vld [vmem:[%s7 + $0xf8] sm:$0xff]
        %v4340 = vld [vmem:[%s7 + $0x100] sm:$0xff]
        %v4341 = vld [vmem:[%s7 + $0x108] sm:$0xff]
        %v4342 = vld [vmem:[%s7 + $0x110] sm:$0xff]
        %v4343 = vld [vmem:[%s7 + $0x118] sm:$0xff]
        %v4344 = vld [vmem:[%s7 + $0x120] sm:$0xff]
        %v4345 = vld [vmem:[%s7 + $0x128] sm:$0xff]
        %v4346 = vld [vmem:[%s7 + $0x130] sm:$0xff]
        %v4347 = vld [vmem:[%s7 + $0x138] sm:$0xff]
        %v4348 = vld [vmem:[%s7 + $0x140] sm:$0xff]
        %v4349 = vld [vmem:[%s7 + $0x148] sm:$0xff]
        %v4350 = vld [vmem:[%s7 + $0x150] sm:$0xff]
        %v4351 = vld [vmem:[%s7 + $0x158] sm:$0xff]
        %v4352 = vld [vmem:[%s7 + $0x160] sm:$0xff]
        %v4353 = vld [vmem:[%s7 + $0x168] sm:$0xff]
        %v4354 = vld [vmem:[%s7 + $0x170] sm:$0xff]
        %v4355 = vld [vmem:[%s7 + $0x178] sm:$0xff]
        %v4356 = vld [vmem:[%s7 + $0x180] sm:$0xff]
        %v4357 = vld [vmem:[%s7 + $0x188] sm:$0xff]
        %v4358 = vld [vmem:[%s7 + $0x190] sm:$0xff]
        %v4359 = vld [vmem:[%s7 + $0x198] sm:$0xff]
        %v4360 = vld [vmem:[%s7 + $0x1a0] sm:$0xff]
        %v4361 = vld [vmem:[%s7 + $0x1a8] sm:$0xff]
        %v4362 = vld [vmem:[%s7 + $0x1b0] sm:$0xff]
        %v4363 = vld [vmem:[%s7 + $0x1b8] sm:$0xff]
        %v4364 = vld [vmem:[%s7 + $0x1c0] sm:$0xff]
        %v4365 = vld [vmem:[%s7 + $0x1c8] sm:$0xff]
        %v4366 = vld [vmem:[%s7 + $0x1d0] sm:$0xff]
        %v4367 = vld [vmem:[%s7 + $0x1d8] sm:$0xff]
        %v4368 = vld [vmem:[%s7 + $0x1e0] sm:$0xff]
        %v4369 = vld [vmem:[%s7 + $0x1e8] sm:$0xff]
        %v4370 = vld [vmem:[%s7 + $0x1f0] sm:$0xff]
        %v4371 = vld [vmem:[%s7 + $0x1f8] sm:$0xff]
        %v4372 = vld [vmem:[%s7 + $0x200] sm:$0xff]
        %v4373 = vld [vmem:[%s7 + $0x208] sm:$0xff]
        %v4374 = vld [vmem:[%s7 + $0x210] sm:$0xff]
        %v4375 = vld [vmem:[%s7 + $0x218] sm:$0xff]
        %v4376 = vld [vmem:[%s7 + $0x220] sm:$0xff]
        %v4377 = vld [vmem:[%s7 + $0x228] sm:$0xff]
        %v4378 = vld [vmem:[%s7 + $0x230] sm:$0xff]
        %v4379 = vld [vmem:[%s7 + $0x238] sm:$0xff]
        %v4380 = vld [vmem:[%s7 + $0x240] sm:$0xff]
        %v4381 = vld [vmem:[%s7 + $0x248] sm:$0xff]
        %v4382 = vld [vmem:[%s7 + $0x250] sm:$0xff]
        %v4383 = vld [vmem:[%s7 + $0x258] sm:$0xff]
        %v4384 = vld [vmem:[%s7 + $0x260] sm:$0xff]
        %v4385 = vld [vmem:[%s7 + $0x268] sm:$0xff]
        %v4386 = vld [vmem:[%s7 + $0x270] sm:$0xff]
        %v4387 = vld [vmem:[%s7 + $0x278] sm:$0xff]
        %v4388 = vld [vmem:[%s7 + $0x280] sm:$0xff]
        %v4389 = vld [vmem:[%s7 + $0x288] sm:$0xff]
        %v4390 = vld [vmem:[%s7 + $0x290] sm:$0xff]
        %v4391 = vld [vmem:[%s7 + $0x298] sm:$0xff]
        %v4392 = vld [vmem:[%s7 + $0x2a0] sm:$0xff]
        %v4393 = vld [vmem:[%s7 + $0x2a8] sm:$0xff]
        %v4394 = vld [vmem:[%s7 + $0x2b0] sm:$0xff]
        %v4395 = vld [vmem:[%s7 + $0x2b8] sm:$0xff]
        %v4396 = vld [vmem:[%s7 + $0x2c0] sm:$0xff]
        %v4397 = vld [vmem:[%s7 + $0x2c8] sm:$0xff]
        %v4398 = vld [vmem:[%s7 + $0x2d0] sm:$0xff]
        %v4399 = vld [vmem:[%s7 + $0x2d8] sm:$0xff]
        %v4400 = vld [vmem:[%s7 + $0x2e0] sm:$0xff]
        %v4401 = vld [vmem:[%s7 + $0x2e8] sm:$0xff]
        %v4402 = vld [vmem:[%s7 + $0x2f0] sm:$0xff]
        %v4403 = vld [vmem:[%s7 + $0x2f8] sm:$0xff]
        %v4404 = vld [vmem:[%s7 + $0x300] sm:$0xff]
        %v4405 = vld [vmem:[%s7 + $0x308] sm:$0xff]
        %v4406 = vld [vmem:[%s7 + $0x310] sm:$0xff]
        %v4407 = vld [vmem:[%s7 + $0x318] sm:$0xff]
        %v4408 = vld [vmem:[%s8] sm:$0xff]
        %v4409 = vld [vmem:[%s8 + $0x8] sm:$0xff]
        %v4410 = vld [vmem:[%s8 + $0x10] sm:$0xff]
        %v4411 = vld [vmem:[%s8 + $0x18] sm:$0xff]
        %v4412 = vld [vmem:[%s8 + $0x20] sm:$0xff]
        %v4413 = vld [vmem:[%s8 + $0x28] sm:$0xff]
        %v4414 = vld [vmem:[%s8 + $0x30] sm:$0xff]
        %v4415 = vld [vmem:[%s8 + $0x38] sm:$0xff]
        %v4416 = vld [vmem:[%s8 + $0x40] sm:$0xff]
        %v4417 = vld [vmem:[%s8 + $0x48] sm:$0xff]
        %v4418 = vld [vmem:[%s8 + $0x50] sm:$0xff]
        %v4419 = vld [vmem:[%s8 + $0x58] sm:$0xff]
        %v4420 = vld [vmem:[%s8 + $0x60] sm:$0xff]
        %v4421 = vld [vmem:[%s8 + $0x68] sm:$0xff]
        %v4422 = vld [vmem:[%s8 + $0x70] sm:$0xff]
        %v4423 = vld [vmem:[%s8 + $0x78] sm:$0xff]
        %v4424 = vld [vmem:[%s8 + $0x80] sm:$0xff]
        %v4425 = vld [vmem:[%s8 + $0x88] sm:$0xff]
        %v4426 = vld [vmem:[%s8 + $0x90] sm:$0xff]
        %v4427 = vld [vmem:[%s8 + $0x98] sm:$0xff]
        %v4428 = vld [vmem:[%s8 + $0xa0] sm:$0xff]
        %v4429 = vld [vmem:[%s8 + $0xa8] sm:$0xff]
        %v4430 = vld [vmem:[%s8 + $0xb0] sm:$0xff]
        %v4431 = vld [vmem:[%s8 + $0xb8] sm:$0xff]
        %v4432 = vld [vmem:[%s8 + $0xc0] sm:$0xff]
        %4434 = vset.pattern.permute.xlu0 0
        %4435 = vperm.xlu0 %4434, %v4408
        %v4436 = vpop.permute.xlu0 %4435
        %4439 = vset.pattern.permute.xlu0 0
        %4440 = vperm.xlu0 %4439, %v4409
        %v4441 = vpop.permute.xlu0 %4440
        %4444 = vset.pattern.permute.xlu0 0
        %4445 = vperm.xlu0 %4444, %v4410
        %v4446 = vpop.permute.xlu0 %4445
        %4449 = vset.pattern.permute.xlu0 0
        %4450 = vperm.xlu0 %4449, %v4411
        %v4451 = vpop.permute.xlu0 %4450
        %4454 = vset.pattern.permute.xlu0 0
        %4455 = vperm.xlu0 %4454, %v4412
        %v4456 = vpop.permute.xlu0 %4455
        %4459 = vset.pattern.permute.xlu0 0
        %4460 = vperm.xlu0 %4459, %v4413
        %v4461 = vpop.permute.xlu0 %4460
        %4464 = vset.pattern.permute.xlu0 0
        %4465 = vperm.xlu0 %4464, %v4414
        %v4466 = vpop.permute.xlu0 %4465
        %4469 = vset.pattern.permute.xlu0 0
        %4470 = vperm.xlu0 %4469, %v4415
        %v4471 = vpop.permute.xlu0 %4470
        %4474 = vset.pattern.permute.xlu0 0
        %4475 = vperm.xlu0 %4474, %v4416
        %v4476 = vpop.permute.xlu0 %4475
        %4479 = vset.pattern.permute.xlu0 0
        %4480 = vperm.xlu0 %4479, %v4417
        %v4481 = vpop.permute.xlu0 %4480
        %4484 = vset.pattern.permute.xlu0 0
        %4485 = vperm.xlu0 %4484, %v4418
        %v4486 = vpop.permute.xlu0 %4485
        %4489 = vset.pattern.permute.xlu0 0
        %4490 = vperm.xlu0 %4489, %v4419
        %v4491 = vpop.permute.xlu0 %4490
        %4494 = vset.pattern.permute.xlu0 0
        %4495 = vperm.xlu0 %4494, %v4420
        %v4496 = vpop.permute.xlu0 %4495
        %4499 = vset.pattern.permute.xlu0 0
        %4500 = vperm.xlu0 %4499, %v4421
        %v4501 = vpop.permute.xlu0 %4500
        %4504 = vset.pattern.permute.xlu0 0
        %4505 = vperm.xlu0 %4504, %v4422
        %v4506 = vpop.permute.xlu0 %4505
        %4509 = vset.pattern.permute.xlu0 0
        %4510 = vperm.xlu0 %4509, %v4423
        %v4511 = vpop.permute.xlu0 %4510
        %4514 = vset.pattern.permute.xlu0 0
        %4515 = vperm.xlu0 %4514, %v4424
        %v4516 = vpop.permute.xlu0 %4515
        %4519 = vset.pattern.permute.xlu0 0
        %4520 = vperm.xlu0 %4519, %v4425
        %v4521 = vpop.permute.xlu0 %4520
        %4524 = vset.pattern.permute.xlu0 0
        %4525 = vperm.xlu0 %4524, %v4426
        %v4526 = vpop.permute.xlu0 %4525
        %4529 = vset.pattern.permute.xlu0 0
        %4530 = vperm.xlu0 %4529, %v4427
        %v4531 = vpop.permute.xlu0 %4530
        %4534 = vset.pattern.permute.xlu0 0
        %4535 = vperm.xlu0 %4534, %v4428
        %v4536 = vpop.permute.xlu0 %4535
        %4539 = vset.pattern.permute.xlu0 0
        %4540 = vperm.xlu0 %4539, %v4429
        %v4541 = vpop.permute.xlu0 %4540
        %4544 = vset.pattern.permute.xlu0 0
        %4545 = vperm.xlu0 %4544, %v4430
        %v4546 = vpop.permute.xlu0 %4545
        %4549 = vset.pattern.permute.xlu0 0
        %4550 = vperm.xlu0 %4549, %v4431
        %v4551 = vpop.permute.xlu0 %4550
        %4554 = vset.pattern.permute.xlu0 0
        %4555 = vperm.xlu0 %4554, %v4432
        %v4556 = vpop.permute.xlu0 %4555
        %vm4558 = vcmask 949248
        %v4560 = vsel %vm4558, %v4311, 0
        %v4563 = vsel %vm4558, %v4315, 0
        %v4566 = vsel %vm4558, %v4319, 0
        %v4569 = vsel %vm4558, %v4323, 0
        %v4572 = vsel %vm4558, %v4327, 0
        %v4575 = vsel %vm4558, %v4331, 0
        %v4578 = vsel %vm4558, %v4335, 0
        %v4581 = vsel %vm4558, %v4339, 0
        %v4584 = vsel %vm4558, %v4343, 0
        %v4587 = vsel %vm4558, %v4347, 0
        %v4590 = vsel %vm4558, %v4351, 0
        %v4593 = vsel %vm4558, %v4355, 0
        %v4596 = vsel %vm4558, %v4359, 0
        %v4599 = vsel %vm4558, %v4363, 0
        %v4602 = vsel %vm4558, %v4367, 0
        %v4605 = vsel %vm4558, %v4371, 0
        %v4608 = vsel %vm4558, %v4375, 0
        %v4611 = vsel %vm4558, %v4379, 0
        %v4614 = vsel %vm4558, %v4383, 0
        %v4617 = vsel %vm4558, %v4387, 0
        %v4620 = vsel %vm4558, %v4391, 0
        %v4623 = vsel %vm4558, %v4395, 0
        %v4626 = vsel %vm4558, %v4399, 0
        %v4629 = vsel %vm4558, %v4403, 0
        %v4632 = vsel %vm4558, %v4407, 0
        %v4634 = vsel %vm729, %v4293, 0
        %4636 = vmatpush.msra.mxu0 %v4158
        %4637 = vmatpush.msra.mxu0 %v4156
        %4638 = vmatpush.msra.mxu0 %v4154
        %4639 = vmatpush.msra.mxu0 %v4306
        %4640 = vmatpush.msra.mxu0 %v4111
        %4641 = vmatpush.msra.mxu0 %v4110
        %4642 = vmatpush.msra.mxu0 %v4109
        %4643 = vmatpush.msra.mxu0 %v4108
        %4644 = vmatpush.msra.mxu0 %v4107
        %4645 = vmatpush.msra.mxu0 %v4106
        %4646 = vmatpush.msra.mxu0 %v4105
        %4647 = vmatpush.msra.mxu0 %v4104
        %4648 = vmatpush.msra.mxu0 %v4103
        %4649 = vmatpush.msra.mxu0 %v4102
        %4650 = vmatpush.msra.mxu0 %v4101
        %4651 = vmatpush.msra.mxu0 %v4100
        %4652 = vmatmul.f32.gmra.mxu0 %v4308
        %v4653 = vpop.f32.mrf.mxu0
        %v4654 = vadd.f32 %v4436, %v4653
        %4655 = vmatmul.f32.gmra.mxu0 %v4312
        %v4656 = vpop.f32.mrf.mxu0
        %v4657 = vadd.f32 %v4441, %v4656
        %4658 = vmatmul.f32.gmra.mxu0 %v4316
        %v4659 = vpop.f32.mrf.mxu0
        %v4660 = vadd.f32 %v4446, %v4659
        %4661 = vmatmul.f32.gmra.mxu0 %v4320
        %v4662 = vpop.f32.mrf.mxu0
        %v4663 = vadd.f32 %v4451, %v4662
        %4664 = vmatmul.f32.gmra.mxu0 %v4324
        %v4665 = vpop.f32.mrf.mxu0
        %v4666 = vadd.f32 %v4456, %v4665
        %4667 = vmatmul.f32.gmra.mxu0 %v4328
        %v4668 = vpop.f32.mrf.mxu0
        %v4669 = vadd.f32 %v4461, %v4668
        %4670 = vmatmul.f32.gmra.mxu0 %v4332
        %v4671 = vpop.f32.mrf.mxu0
        %v4672 = vadd.f32 %v4466, %v4671
        %4673 = vmatmul.f32.gmra.mxu0 %v4336
        %v4674 = vpop.f32.mrf.mxu0
        %v4675 = vadd.f32 %v4471, %v4674
        %4676 = vmatmul.f32.gmra.mxu0 %v4340
        %v4677 = vpop.f32.mrf.mxu0
        %v4678 = vadd.f32 %v4476, %v4677
        %4679 = vmatmul.f32.gmra.mxu0 %v4344
        %v4680 = vpop.f32.mrf.mxu0
        %v4681 = vadd.f32 %v4481, %v4680
        %4682 = vmatmul.f32.gmra.mxu0 %v4348
        %v4683 = vpop.f32.mrf.mxu0
        %v4684 = vadd.f32 %v4486, %v4683
        %4685 = vmatmul.f32.gmra.mxu0 %v4352
        %v4686 = vpop.f32.mrf.mxu0
        %v4687 = vadd.f32 %v4491, %v4686
        %4688 = vmatmul.f32.gmra.mxu0 %v4356
        %v4689 = vpop.f32.mrf.mxu0
        %v4690 = vadd.f32 %v4496, %v4689
        %4691 = vmatmul.f32.gmra.mxu0 %v4360
        %v4692 = vpop.f32.mrf.mxu0
        %v4693 = vadd.f32 %v4501, %v4692
        %4694 = vmatmul.f32.gmra.mxu0 %v4364
        %v4695 = vpop.f32.mrf.mxu0
        %v4696 = vadd.f32 %v4506, %v4695
        %4697 = vmatmul.f32.gmra.mxu0 %v4368
        %v4698 = vpop.f32.mrf.mxu0
        %v4699 = vadd.f32 %v4511, %v4698
        %4700 = vmatmul.f32.gmra.mxu0 %v4372
        %v4701 = vpop.f32.mrf.mxu0
        %v4702 = vadd.f32 %v4516, %v4701
        %4703 = vmatmul.f32.gmra.mxu0 %v4376
        %v4704 = vpop.f32.mrf.mxu0
        %v4705 = vadd.f32 %v4521, %v4704
        %4706 = vmatmul.f32.gmra.mxu0 %v4380
        %v4707 = vpop.f32.mrf.mxu0
        %v4708 = vadd.f32 %v4526, %v4707
        %4709 = vmatmul.f32.gmra.mxu0 %v4384
        %v4710 = vpop.f32.mrf.mxu0
        %v4711 = vadd.f32 %v4531, %v4710
        %4712 = vmatmul.f32.gmra.mxu0 %v4388
        %v4713 = vpop.f32.mrf.mxu0
        %v4714 = vadd.f32 %v4536, %v4713
        %4715 = vmatmul.f32.gmra.mxu0 %v4392
        %v4716 = vpop.f32.mrf.mxu0
        %v4717 = vadd.f32 %v4541, %v4716
        %4718 = vmatmul.f32.gmra.mxu0 %v4396
        %v4719 = vpop.f32.mrf.mxu0
        %v4720 = vadd.f32 %v4546, %v4719
        %4721 = vmatmul.f32.gmra.mxu0 %v4400
        %v4722 = vpop.f32.mrf.mxu0
        %v4723 = vadd.f32 %v4551, %v4722
        %4724 = vmatmul.f32.gmra.mxu0 %v4404
        %v4725 = vpop.f32.mrf.mxu0
        %v4726 = vadd.f32 %v4556, %v4725
        %4727 = vdwg.mxu0
        %4728 = vmatpush.msra.mxu0 %v4203
        %4729 = vmatpush.msra.mxu0 %v4201
        %4730 = vmatpush.msra.mxu0 %v4199
        %4731 = vmatpush.msra.mxu0 %v4197
        %4732 = vmatpush.msra.mxu0 %v4195
        %4733 = vmatpush.msra.mxu0 %v4193
        %4734 = vmatpush.msra.mxu0 %v4191
        %4735 = vmatpush.msra.mxu0 %v4176
        %4736 = vmatpush.msra.mxu0 %v4174
        %4737 = vmatpush.msra.mxu0 %v4172
        %4738 = vmatpush.msra.mxu0 %v4170
        %4739 = vmatpush.msra.mxu0 %v4168
        %4740 = vmatpush.msra.mxu0 %v4166
        %4741 = vmatpush.msra.mxu0 %v4164
        %4742 = vmatpush.msra.mxu0 %v4162
        %4743 = vmatpush.msra.mxu0 %v4160
        %4744 = vmatmul.f32.gmra.mxu0 %v4309
        %v4745 = vpop.f32.mrf.mxu0
        %v4746 = vadd.f32 %v4654, %v4745
        %4747 = vmatmul.f32.gmra.mxu0 %v4313
        %v4748 = vpop.f32.mrf.mxu0
        %v4749 = vadd.f32 %v4657, %v4748
        %4750 = vmatmul.f32.gmra.mxu0 %v4317
        %v4751 = vpop.f32.mrf.mxu0
        %v4752 = vadd.f32 %v4660, %v4751
        %4753 = vmatmul.f32.gmra.mxu0 %v4321
        %v4754 = vpop.f32.mrf.mxu0
        %v4755 = vadd.f32 %v4663, %v4754
        %4756 = vmatmul.f32.gmra.mxu0 %v4325
        %v4757 = vpop.f32.mrf.mxu0
        %v4758 = vadd.f32 %v4666, %v4757
        %4759 = vmatmul.f32.gmra.mxu0 %v4329
        %v4760 = vpop.f32.mrf.mxu0
        %v4761 = vadd.f32 %v4669, %v4760
        %4762 = vmatmul.f32.gmra.mxu0 %v4333
        %v4763 = vpop.f32.mrf.mxu0
        %v4764 = vadd.f32 %v4672, %v4763
        %4765 = vmatmul.f32.gmra.mxu0 %v4337
        %v4766 = vpop.f32.mrf.mxu0
        %v4767 = vadd.f32 %v4675, %v4766
        %4768 = vmatmul.f32.gmra.mxu0 %v4341
        %v4769 = vpop.f32.mrf.mxu0
        %v4770 = vadd.f32 %v4678, %v4769
        %4771 = vmatmul.f32.gmra.mxu0 %v4345
        %v4772 = vpop.f32.mrf.mxu0
        %v4773 = vadd.f32 %v4681, %v4772
        %4774 = vmatmul.f32.gmra.mxu0 %v4349
        %v4775 = vpop.f32.mrf.mxu0
        %v4776 = vadd.f32 %v4684, %v4775
        %4777 = vmatmul.f32.gmra.mxu0 %v4353
        %v4778 = vpop.f32.mrf.mxu0
        %v4779 = vadd.f32 %v4687, %v4778
        %4780 = vmatmul.f32.gmra.mxu0 %v4357
        %v4781 = vpop.f32.mrf.mxu0
        %v4782 = vadd.f32 %v4690, %v4781
        %4783 = vmatmul.f32.gmra.mxu0 %v4361
        %v4784 = vpop.f32.mrf.mxu0
        %v4785 = vadd.f32 %v4693, %v4784
        %4786 = vmatmul.f32.gmra.mxu0 %v4365
        %v4787 = vpop.f32.mrf.mxu0
        %v4788 = vadd.f32 %v4696, %v4787
        %4789 = vmatmul.f32.gmra.mxu0 %v4369
        %v4790 = vpop.f32.mrf.mxu0
        %v4791 = vadd.f32 %v4699, %v4790
        %4792 = vmatmul.f32.gmra.mxu0 %v4373
        %v4793 = vpop.f32.mrf.mxu0
        %v4794 = vadd.f32 %v4702, %v4793
        %4795 = vmatmul.f32.gmra.mxu0 %v4377
        %v4796 = vpop.f32.mrf.mxu0
        %v4797 = vadd.f32 %v4705, %v4796
        %4798 = vmatmul.f32.gmra.mxu0 %v4381
        %v4799 = vpop.f32.mrf.mxu0
        %v4800 = vadd.f32 %v4708, %v4799
        %4801 = vmatmul.f32.gmra.mxu0 %v4385
        %v4802 = vpop.f32.mrf.mxu0
        %v4803 = vadd.f32 %v4711, %v4802
        %4804 = vmatmul.f32.gmra.mxu0 %v4389
        %v4805 = vpop.f32.mrf.mxu0
        %v4806 = vadd.f32 %v4714, %v4805
        %4807 = vmatmul.f32.gmra.mxu0 %v4393
        %v4808 = vpop.f32.mrf.mxu0
        %v4809 = vadd.f32 %v4717, %v4808
        %4810 = vmatmul.f32.gmra.mxu0 %v4397
        %v4811 = vpop.f32.mrf.mxu0
        %v4812 = vadd.f32 %v4720, %v4811
        %4813 = vmatmul.f32.gmra.mxu0 %v4401
        %v4814 = vpop.f32.mrf.mxu0
        %v4815 = vadd.f32 %v4723, %v4814
        %4816 = vmatmul.f32.gmra.mxu0 %v4405
        %v4817 = vpop.f32.mrf.mxu0
        %v4818 = vadd.f32 %v4726, %v4817
        %4819 = vdwg.mxu0
        %4820 = vmatpush.msra.mxu0 %v4250
        %4821 = vmatpush.msra.mxu0 %v4248
        %4822 = vmatpush.msra.mxu0 %v4246
        %4823 = vmatpush.msra.mxu0 %v4244
        %4824 = vmatpush.msra.mxu0 %v4242
        %4825 = vmatpush.msra.mxu0 %v4240
        %4826 = vmatpush.msra.mxu0 %v4238
        %4827 = vmatpush.msra.mxu0 %v4236
        %4828 = vmatpush.msra.mxu0 %v4234
        %4829 = vmatpush.msra.mxu0 %v4232
        %4830 = vmatpush.msra.mxu0 %v4307
        %4831 = vmatpush.msra.mxu0 %v4213
        %4832 = vmatpush.msra.mxu0 %v4211
        %4833 = vmatpush.msra.mxu0 %v4209
        %4834 = vmatpush.msra.mxu0 %v4207
        %4835 = vmatpush.msra.mxu0 %v4205
        %4836 = vmatmul.f32.gmra.mxu0 %v4310
        %v4837 = vpop.f32.mrf.mxu0
        %v4838 = vadd.f32 %v4746, %v4837
        %4839 = vmatmul.f32.gmra.mxu0 %v4314
        %v4840 = vpop.f32.mrf.mxu0
        %v4841 = vadd.f32 %v4749, %v4840
        %4842 = vmatmul.f32.gmra.mxu0 %v4318
        %v4843 = vpop.f32.mrf.mxu0
        %v4844 = vadd.f32 %v4752, %v4843
        %4845 = vmatmul.f32.gmra.mxu0 %v4322
        %v4846 = vpop.f32.mrf.mxu0
        %v4847 = vadd.f32 %v4755, %v4846
        %4848 = vmatmul.f32.gmra.mxu0 %v4326
        %v4849 = vpop.f32.mrf.mxu0
        %v4850 = vadd.f32 %v4758, %v4849
        %4851 = vmatmul.f32.gmra.mxu0 %v4330
        %v4852 = vpop.f32.mrf.mxu0
        %v4853 = vadd.f32 %v4761, %v4852
        %4854 = vmatmul.f32.gmra.mxu0 %v4334
        %v4855 = vpop.f32.mrf.mxu0
        %v4856 = vadd.f32 %v4764, %v4855
        %4857 = vmatmul.f32.gmra.mxu0 %v4338
        %v4858 = vpop.f32.mrf.mxu0
        %v4859 = vadd.f32 %v4767, %v4858
        %4860 = vmatmul.f32.gmra.mxu0 %v4342
        %v4861 = vpop.f32.mrf.mxu0
        %v4862 = vadd.f32 %v4770, %v4861
        %4863 = vmatmul.f32.gmra.mxu0 %v4346
        %v4864 = vpop.f32.mrf.mxu0
        %v4865 = vadd.f32 %v4773, %v4864
        %4866 = vmatmul.f32.gmra.mxu0 %v4350
        %v4867 = vpop.f32.mrf.mxu0
        %v4868 = vadd.f32 %v4776, %v4867
        %4869 = vmatmul.f32.gmra.mxu0 %v4354
        %v4870 = vpop.f32.mrf.mxu0
        %v4871 = vadd.f32 %v4779, %v4870
        %4872 = vmatmul.f32.gmra.mxu0 %v4358
        %v4873 = vpop.f32.mrf.mxu0
        %v4874 = vadd.f32 %v4782, %v4873
        %4875 = vmatmul.f32.gmra.mxu0 %v4362
        %v4876 = vpop.f32.mrf.mxu0
        %v4877 = vadd.f32 %v4785, %v4876
        %4878 = vmatmul.f32.gmra.mxu0 %v4366
        %v4879 = vpop.f32.mrf.mxu0
        %v4880 = vadd.f32 %v4788, %v4879
        %4881 = vmatmul.f32.gmra.mxu0 %v4370
        %v4882 = vpop.f32.mrf.mxu0
        %v4883 = vadd.f32 %v4791, %v4882
        %4884 = vmatmul.f32.gmra.mxu0 %v4374
        %v4885 = vpop.f32.mrf.mxu0
        %v4886 = vadd.f32 %v4794, %v4885
        %4887 = vmatmul.f32.gmra.mxu0 %v4378
        %v4888 = vpop.f32.mrf.mxu0
        %v4889 = vadd.f32 %v4797, %v4888
        %4890 = vmatmul.f32.gmra.mxu0 %v4382
        %v4891 = vpop.f32.mrf.mxu0
        %v4892 = vadd.f32 %v4800, %v4891
        %4893 = vmatmul.f32.gmra.mxu0 %v4386
        %v4894 = vpop.f32.mrf.mxu0
        %v4895 = vadd.f32 %v4803, %v4894
        %4896 = vmatmul.f32.gmra.mxu0 %v4390
        %v4897 = vpop.f32.mrf.mxu0
        %v4898 = vadd.f32 %v4806, %v4897
        %4899 = vmatmul.f32.gmra.mxu0 %v4394
        %v4900 = vpop.f32.mrf.mxu0
        %v4901 = vadd.f32 %v4809, %v4900
        %4902 = vmatmul.f32.gmra.mxu0 %v4398
        %v4903 = vpop.f32.mrf.mxu0
        %v4904 = vadd.f32 %v4812, %v4903
        %4905 = vmatmul.f32.gmra.mxu0 %v4402
        %v4906 = vpop.f32.mrf.mxu0
        %v4907 = vadd.f32 %v4815, %v4906
        %4908 = vmatmul.f32.gmra.mxu0 %v4406
        %v4909 = vpop.f32.mrf.mxu0
        %v4910 = vadd.f32 %v4818, %v4909
        %4911 = vdwg.mxu0
        %4912 = vmatpush.msra.mxu0 0.0
        %4913 = vmatpush.msra.mxu0 %v4634
        %4914 = vmatpush.msra.mxu0 %v4291
        %4915 = vmatpush.msra.mxu0 %v4289
        %4916 = vmatpush.msra.mxu0 %v4287
        %4917 = vmatpush.msra.mxu0 %v4285
        %4918 = vmatpush.msra.mxu0 %v4283
        %4919 = vmatpush.msra.mxu0 %v4281
        %4920 = vmatpush.msra.mxu0 %v4279
        %4921 = vmatpush.msra.mxu0 %v4277
        %4922 = vmatpush.msra.mxu0 %v4275
        %4923 = vmatpush.msra.mxu0 %v4273
        %4924 = vmatpush.msra.mxu0 %v4271
        %4925 = vmatpush.msra.mxu0 %v4269
        %4926 = vmatpush.msra.mxu0 %v4254
        %4927 = vmatpush.msra.mxu0 %v4252
        %4928 = vmatmul.f32.gmra.mxu0 %v4560
        %v4929 = vpop.f32.mrf.mxu0
        %v4930 = vadd.f32 %v4838, %v4929
        %4931 = vmatmul.f32.gmra.mxu0 %v4563
        %v4932 = vpop.f32.mrf.mxu0
        %v4933 = vadd.f32 %v4841, %v4932
        %4934 = vmatmul.f32.gmra.mxu0 %v4566
        %v4935 = vpop.f32.mrf.mxu0
        %v4936 = vadd.f32 %v4844, %v4935
        %4937 = vmatmul.f32.gmra.mxu0 %v4569
        %v4938 = vpop.f32.mrf.mxu0
        %v4939 = vadd.f32 %v4847, %v4938
        %4940 = vmatmul.f32.gmra.mxu0 %v4572
        %v4941 = vpop.f32.mrf.mxu0
        %v4942 = vadd.f32 %v4850, %v4941
        %4943 = vmatmul.f32.gmra.mxu0 %v4575
        %v4944 = vpop.f32.mrf.mxu0
        %v4945 = vadd.f32 %v4853, %v4944
        %4946 = vmatmul.f32.gmra.mxu0 %v4578
        %v4947 = vpop.f32.mrf.mxu0
        %v4948 = vadd.f32 %v4856, %v4947
        %4949 = vmatmul.f32.gmra.mxu0 %v4581
        %v4950 = vpop.f32.mrf.mxu0
        %v4951 = vadd.f32 %v4859, %v4950
        %4952 = vmatmul.f32.gmra.mxu0 %v4584
        %v4953 = vpop.f32.mrf.mxu0
        %v4954 = vadd.f32 %v4862, %v4953
        %4955 = vmatmul.f32.gmra.mxu0 %v4587
        %v4956 = vpop.f32.mrf.mxu0
        %v4957 = vadd.f32 %v4865, %v4956
        %4958 = vmatmul.f32.gmra.mxu0 %v4590
        %v4959 = vpop.f32.mrf.mxu0
        %v4960 = vadd.f32 %v4868, %v4959
        %4961 = vmatmul.f32.gmra.mxu0 %v4593
        %v4962 = vpop.f32.mrf.mxu0
        %v4963 = vadd.f32 %v4871, %v4962
        %4964 = vmatmul.f32.gmra.mxu0 %v4596
        %v4965 = vpop.f32.mrf.mxu0
        %v4966 = vadd.f32 %v4874, %v4965
        %4967 = vmatmul.f32.gmra.mxu0 %v4599
        %v4968 = vpop.f32.mrf.mxu0
        %v4969 = vadd.f32 %v4877, %v4968
        %4970 = vmatmul.f32.gmra.mxu0 %v4602
        %v4971 = vpop.f32.mrf.mxu0
        %v4972 = vadd.f32 %v4880, %v4971
        %4973 = vmatmul.f32.gmra.mxu0 %v4605
        %v4974 = vpop.f32.mrf.mxu0
        %v4975 = vadd.f32 %v4883, %v4974
        %4976 = vmatmul.f32.gmra.mxu0 %v4608
        %v4977 = vpop.f32.mrf.mxu0
        %v4978 = vadd.f32 %v4886, %v4977
        %4979 = vmatmul.f32.gmra.mxu0 %v4611
        %v4980 = vpop.f32.mrf.mxu0
        %v4981 = vadd.f32 %v4889, %v4980
        %4982 = vmatmul.f32.gmra.mxu0 %v4614
        %v4983 = vpop.f32.mrf.mxu0
        %v4984 = vadd.f32 %v4892, %v4983
        %4985 = vmatmul.f32.gmra.mxu0 %v4617
        %v4986 = vpop.f32.mrf.mxu0
        %v4987 = vadd.f32 %v4895, %v4986
        %4988 = vmatmul.f32.gmra.mxu0 %v4620
        %v4989 = vpop.f32.mrf.mxu0
        %v4990 = vadd.f32 %v4898, %v4989
        %4991 = vmatmul.f32.gmra.mxu0 %v4623
        %v4992 = vpop.f32.mrf.mxu0
        %v4993 = vadd.f32 %v4901, %v4992
        %4994 = vmatmul.f32.gmra.mxu0 %v4626
        %v4995 = vpop.f32.mrf.mxu0
        %v4996 = vadd.f32 %v4904, %v4995
        %4997 = vmatmul.f32.gmra.mxu0 %v4629
        %v4998 = vpop.f32.mrf.mxu0
        %v4999 = vadd.f32 %v4907, %v4998
        %5000 = vmatmul.f32.gmra.mxu0 %v4632
        %v5001 = vpop.f32.mrf.mxu0
        %v5002 = vadd.f32 %v4910, %v5001
        %5003 = vdwg.mxu0
        %v5004 = vld [vmem:[%s14] sm:$0xff]
        %v5005 = vld [vmem:[%s14 + $0x8] sm:$0xff]
        %v5006 = vld [vmem:[%s14 + $0x10] sm:$0xff]
        %v5007 = vld [vmem:[%s14 + $0x18] sm:$0xff]
        %v5008 = vld [vmem:[%s14 + $0x20] sm:$0xff]
        %v5009 = vld [vmem:[%s14 + $0x28] sm:$0xff]
        %v5010 = vld [vmem:[%s14 + $0x30] sm:$0xff]
        %v5011 = vld [vmem:[%s14 + $0x38] sm:$0xff]
        %v5012 = vld [vmem:[%s14 + $0x40] sm:$0xff]
        %v5013 = vld [vmem:[%s14 + $0x48] sm:$0xff]
        %v5014 = vld [vmem:[%s14 + $0x50] sm:$0x1f]
        %5040 = vrot.lane.b32.xlu0 %v4930, 127
        %v5041 = vpop.permute.xlu0 %5040
        %5042 = vrot.lane.b32.xlu0 %v4933, 127
        %v5043 = vpop.permute.xlu0 %5042
        %5044 = vrot.lane.b32.xlu0 %v4936, 127
        %v5045 = vpop.permute.xlu0 %5044
        %5046 = vrot.lane.b32.xlu0 %v4939, 127
        %v5047 = vpop.permute.xlu0 %5046
        %5048 = vrot.lane.b32.xlu0 %v4942, 127
        %v5049 = vpop.permute.xlu0 %5048
        %5050 = vrot.lane.b32.xlu0 %v4945, 127
        %v5051 = vpop.permute.xlu0 %5050
        %5052 = vrot.lane.b32.xlu0 %v4948, 127
        %v5053 = vpop.permute.xlu0 %5052
        %5054 = vrot.lane.b32.xlu0 %v4951, 127
        %v5055 = vpop.permute.xlu0 %5054
        %5056 = vrot.lane.b32.xlu0 %v4954, 127
        %v5057 = vpop.permute.xlu0 %5056
        %5058 = vrot.lane.b32.xlu0 %v4957, 127
        %v5059 = vpop.permute.xlu0 %5058
        %5060 = vrot.lane.b32.xlu0 %v4960, 127
        %v5061 = vpop.permute.xlu0 %5060
        %5062 = vrot.lane.b32.xlu0 %v4963, 127
        %v5063 = vpop.permute.xlu0 %5062
        %5064 = vrot.lane.b32.xlu0 %v4966, 127
        %v5065 = vpop.permute.xlu0 %5064
        %5066 = vrot.lane.b32.xlu0 %v4969, 127
        %v5067 = vpop.permute.xlu0 %5066
        %5068 = vrot.lane.b32.xlu0 %v4972, 127
        %v5069 = vpop.permute.xlu0 %5068
        %5070 = vrot.lane.b32.xlu0 %v4975, 127
        %v5071 = vpop.permute.xlu0 %5070
        %5072 = vrot.lane.b32.xlu0 %v4978, 127
        %v5073 = vpop.permute.xlu0 %5072
        %5074 = vrot.lane.b32.xlu0 %v4981, 127
        %v5075 = vpop.permute.xlu0 %5074
        %5076 = vrot.lane.b32.xlu0 %v4984, 127
        %v5077 = vpop.permute.xlu0 %5076
        %5078 = vrot.lane.b32.xlu0 %v4987, 127
        %v5079 = vpop.permute.xlu0 %5078
        %5080 = vrot.lane.b32.xlu0 %v4990, 127
        %v5081 = vpop.permute.xlu0 %5080
        %5082 = vrot.lane.b32.xlu0 %v4993, 127
        %v5083 = vpop.permute.xlu0 %5082
        %5084 = vrot.lane.b32.xlu0 %v4996, 127
        %v5085 = vpop.permute.xlu0 %5084
        %5086 = vrot.lane.b32.xlu0 %v4999, 127
        %v5087 = vpop.permute.xlu0 %5086
        %5088 = vrot.lane.b32.xlu0 %v5002, 127
        %v5089 = vpop.permute.xlu0 %5088
        %v5115 = vmax.f32 %v4930, %v5041
        %v5116 = vmax.f32 %v4933, %v5043
        %v5117 = vmax.f32 %v4936, %v5045
        %v5118 = vmax.f32 %v4939, %v5047
        %v5119 = vmax.f32 %v4942, %v5049
        %v5120 = vmax.f32 %v4945, %v5051
        %v5121 = vmax.f32 %v4948, %v5053
        %v5122 = vmax.f32 %v4951, %v5055
        %v5123 = vmax.f32 %v4954, %v5057
        %v5124 = vmax.f32 %v4957, %v5059
        %v5125 = vmax.f32 %v4960, %v5061
        %v5126 = vmax.f32 %v4963, %v5063
        %v5127 = vmax.f32 %v4966, %v5065
        %v5128 = vmax.f32 %v4969, %v5067
        %v5129 = vmax.f32 %v4972, %v5069
        %v5130 = vmax.f32 %v4975, %v5071
        %v5131 = vmax.f32 %v4978, %v5073
        %v5132 = vmax.f32 %v4981, %v5075
        %v5133 = vmax.f32 %v4984, %v5077
        %v5134 = vmax.f32 %v4987, %v5079
        %v5135 = vmax.f32 %v4990, %v5081
        %v5136 = vmax.f32 %v4993, %v5083
        %v5137 = vmax.f32 %v4996, %v5085
        %v5138 = vmax.f32 %v4999, %v5087
        %v5139 = vmax.f32 %v5002, %v5089
        %vm5140 = vcmask 695296
        %v5142 = vsel %vm5140, %v5115, 0
        %v5145 = vsel %vm5140, %v5116, 0
        %v5148 = vsel %vm5140, %v5117, 0
        %v5151 = vsel %vm5140, %v5118, 0
        %v5154 = vsel %vm5140, %v5119, 0
        %v5157 = vsel %vm5140, %v5120, 0
        %v5160 = vsel %vm5140, %v5121, 0
        %v5163 = vsel %vm5140, %v5122, 0
        %v5166 = vsel %vm5140, %v5123, 0
        %v5169 = vsel %vm5140, %v5124, 0
        %v5172 = vsel %vm5140, %v5125, 0
        %v5175 = vsel %vm5140, %v5126, 0
        %v5178 = vsel %vm5140, %v5127, 0
        %v5181 = vsel %vm5140, %v5128, 0
        %v5184 = vsel %vm5140, %v5129, 0
        %v5187 = vsel %vm5140, %v5130, 0
        %v5190 = vsel %vm5140, %v5131, 0
        %v5193 = vsel %vm5140, %v5132, 0
        %v5196 = vsel %vm5140, %v5133, 0
        %v5199 = vsel %vm5140, %v5134, 0
        %v5202 = vsel %vm5140, %v5135, 0
        %v5205 = vsel %vm5140, %v5136, 0
        %v5208 = vsel %vm5140, %v5137, 0
        %v5211 = vsel %vm5140, %v5138, 0
        %v5214 = vsel %vm5140, %v5139, 0
        %v5217 = vsel %vm736, %v5014, 0
        %5219 = vmatpush.msra.mxu0 0.0
        %5220 = vmatpush.msra.mxu0 0.0
        %5221 = vmatpush.msra.mxu0 0.0
        %5222 = vmatpush.msra.mxu0 0.0
        %5223 = vmatpush.msra.mxu0 0.0
        %5224 = vmatpush.msra.mxu0 %v5217
        %5225 = vmatpush.msra.mxu0 %v5013
        %5226 = vmatpush.msra.mxu0 %v5012
        %5227 = vmatpush.msra.mxu0 %v5011
        %5228 = vmatpush.msra.mxu0 %v5010
        %5229 = vmatpush.msra.mxu0 %v5009
        %5230 = vmatpush.msra.mxu0 %v5008
        %5231 = vmatpush.msra.mxu0 %v5007
        %5232 = vmatpush.msra.mxu0 %v5006
        %5233 = vmatpush.msra.mxu0 %v5005
        %5234 = vmatpush.msra.mxu0 %v5004
        %5235 = vmatmul.f32.gmra.mxu0 %v5142
        %v5236 = vpop.f32.mrf.mxu0
        %v5237 = vadd.f32 0.0, %v5236
        %5238 = vmatmul.f32.gmra.mxu0 %v5145
        %v5239 = vpop.f32.mrf.mxu0
        %v5240 = vadd.f32 0.0, %v5239
        %5241 = vmatmul.f32.gmra.mxu0 %v5148
        %v5242 = vpop.f32.mrf.mxu0
        %v5243 = vadd.f32 0.0, %v5242
        %5244 = vmatmul.f32.gmra.mxu0 %v5151
        %v5245 = vpop.f32.mrf.mxu0
        %v5246 = vadd.f32 0.0, %v5245
        %5247 = vmatmul.f32.gmra.mxu0 %v5154
        %v5248 = vpop.f32.mrf.mxu0
        %v5249 = vadd.f32 0.0, %v5248
        %5250 = vmatmul.f32.gmra.mxu0 %v5157
        %v5251 = vpop.f32.mrf.mxu0
        %v5252 = vadd.f32 0.0, %v5251
        %5253 = vmatmul.f32.gmra.mxu0 %v5160
        %v5254 = vpop.f32.mrf.mxu0
        %v5255 = vadd.f32 0.0, %v5254
        %5256 = vmatmul.f32.gmra.mxu0 %v5163
        %v5257 = vpop.f32.mrf.mxu0
        %v5258 = vadd.f32 0.0, %v5257
        %5259 = vmatmul.f32.gmra.mxu0 %v5166
        %v5260 = vpop.f32.mrf.mxu0
        %v5261 = vadd.f32 0.0, %v5260
        %5262 = vmatmul.f32.gmra.mxu0 %v5169
        %v5263 = vpop.f32.mrf.mxu0
        %v5264 = vadd.f32 0.0, %v5263
        %5265 = vmatmul.f32.gmra.mxu0 %v5172
        %v5266 = vpop.f32.mrf.mxu0
        %v5267 = vadd.f32 0.0, %v5266
        %5268 = vmatmul.f32.gmra.mxu0 %v5175
        %v5269 = vpop.f32.mrf.mxu0
        %v5270 = vadd.f32 0.0, %v5269
        %5271 = vmatmul.f32.gmra.mxu0 %v5178
        %v5272 = vpop.f32.mrf.mxu0
        %v5273 = vadd.f32 0.0, %v5272
        %5274 = vmatmul.f32.gmra.mxu0 %v5181
        %v5275 = vpop.f32.mrf.mxu0
        %v5276 = vadd.f32 0.0, %v5275
        %5277 = vmatmul.f32.gmra.mxu0 %v5184
        %v5278 = vpop.f32.mrf.mxu0
        %v5279 = vadd.f32 0.0, %v5278
        %5280 = vmatmul.f32.gmra.mxu0 %v5187
        %v5281 = vpop.f32.mrf.mxu0
        %v5282 = vadd.f32 0.0, %v5281
        %5283 = vmatmul.f32.gmra.mxu0 %v5190
        %v5284 = vpop.f32.mrf.mxu0
        %v5285 = vadd.f32 0.0, %v5284
        %5286 = vmatmul.f32.gmra.mxu0 %v5193
        %v5287 = vpop.f32.mrf.mxu0
        %v5288 = vadd.f32 0.0, %v5287
        %5289 = vmatmul.f32.gmra.mxu0 %v5196
        %v5290 = vpop.f32.mrf.mxu0
        %v5291 = vadd.f32 0.0, %v5290
        %5292 = vmatmul.f32.gmra.mxu0 %v5199
        %v5293 = vpop.f32.mrf.mxu0
        %v5294 = vadd.f32 0.0, %v5293
        %5295 = vmatmul.f32.gmra.mxu0 %v5202
        %v5296 = vpop.f32.mrf.mxu0
        %v5297 = vadd.f32 0.0, %v5296
        %5298 = vmatmul.f32.gmra.mxu0 %v5205
        %v5299 = vpop.f32.mrf.mxu0
        %v5300 = vadd.f32 0.0, %v5299
        %5301 = vmatmul.f32.gmra.mxu0 %v5208
        %v5302 = vpop.f32.mrf.mxu0
        %v5303 = vadd.f32 0.0, %v5302
        %5304 = vmatmul.f32.gmra.mxu0 %v5211
        %v5305 = vpop.f32.mrf.mxu0
        %v5306 = vadd.f32 0.0, %v5305
        %5307 = vmatmul.f32.gmra.mxu0 %v5214
        %v5308 = vpop.f32.mrf.mxu0
        %v5309 = vadd.f32 0.0, %v5308
        %5310 = vdwg.mxu0
        %vm5311 = vcmp.gt.f32.partialorder %v5237, 0.0
        %vm5312 = vcmp.gt.f32.partialorder %v5240, 0.0
        %vm5313 = vcmp.gt.f32.partialorder %v5243, 0.0
        %vm5314 = vcmp.gt.f32.partialorder %v5246, 0.0
        %vm5315 = vcmp.gt.f32.partialorder %v5249, 0.0
        %vm5316 = vcmp.gt.f32.partialorder %v5252, 0.0
        %vm5317 = vcmp.gt.f32.partialorder %v5255, 0.0
        %vm5318 = vcmp.gt.f32.partialorder %v5258, 0.0
        %vm5319 = vcmp.gt.f32.partialorder %v5261, 0.0
        %vm5320 = vcmp.gt.f32.partialorder %v5264, 0.0
        %vm5321 = vcmp.gt.f32.partialorder %v5267, 0.0
        %vm5322 = vcmp.gt.f32.partialorder %v5270, 0.0
        %vm5323 = vcmp.gt.f32.partialorder %v5273, 0.0
        %vm5324 = vcmp.gt.f32.partialorder %v5276, 0.0
        %vm5325 = vcmp.gt.f32.partialorder %v5279, 0.0
        %vm5326 = vcmp.gt.f32.partialorder %v5282, 0.0
        %vm5327 = vcmp.gt.f32.partialorder %v5285, 0.0
        %vm5328 = vcmp.gt.f32.partialorder %v5288, 0.0
        %vm5329 = vcmp.gt.f32.partialorder %v5291, 0.0
        %vm5330 = vcmp.gt.f32.partialorder %v5294, 0.0
        %vm5331 = vcmp.gt.f32.partialorder %v5297, 0.0
        %vm5332 = vcmp.gt.f32.partialorder %v5300, 0.0
        %vm5333 = vcmp.gt.f32.partialorder %v5303, 0.0
        %vm5334 = vcmp.gt.f32.partialorder %v5306, 0.0
        %vm5335 = vcmp.gt.f32.partialorder %v5309, 0.0
        %v5336 = vmin.f32 %v5237, 0.0
        %v5337 = vmin.f32 %v5240, 0.0
        %v5338 = vmin.f32 %v5243, 0.0
        %v5339 = vmin.f32 %v5246, 0.0
        %v5340 = vmin.f32 %v5249, 0.0
        %v5341 = vmin.f32 %v5252, 0.0
        %v5342 = vmin.f32 %v5255, 0.0
        %v5343 = vmin.f32 %v5258, 0.0
        %v5344 = vmin.f32 %v5261, 0.0
        %v5345 = vmin.f32 %v5264, 0.0
        %v5346 = vmin.f32 %v5267, 0.0
        %v5347 = vmin.f32 %v5270, 0.0
        %v5348 = vmin.f32 %v5273, 0.0
        %v5349 = vmin.f32 %v5276, 0.0
        %v5350 = vmin.f32 %v5279, 0.0
        %v5351 = vmin.f32 %v5282, 0.0
        %v5352 = vmin.f32 %v5285, 0.0
        %v5353 = vmin.f32 %v5288, 0.0
        %v5354 = vmin.f32 %v5291, 0.0
        %v5355 = vmin.f32 %v5294, 0.0
        %v5356 = vmin.f32 %v5297, 0.0
        %v5357 = vmin.f32 %v5300, 0.0
        %v5358 = vmin.f32 %v5303, 0.0
        %v5359 = vmin.f32 %v5306, 0.0
        %v5360 = vmin.f32 %v5309, 0.0
        %v5361 = vmul.f32 %v5336, 1.442695
        %v5362 = vpow.pop %v5361
        %v5363 = vmul.f32 %v5337, 1.442695
        %v5364 = vpow.pop %v5363
        %v5365 = vmul.f32 %v5338, 1.442695
        %v5366 = vpow.pop %v5365
        %v5367 = vmul.f32 %v5339, 1.442695
        %v5368 = vpow.pop %v5367
        %v5369 = vmul.f32 %v5340, 1.442695
        %v5370 = vpow.pop %v5369
        %v5371 = vmul.f32 %v5341, 1.442695
        %v5372 = vpow.pop %v5371
        %v5373 = vmul.f32 %v5342, 1.442695
        %v5374 = vpow.pop %v5373
        %v5375 = vmul.f32 %v5343, 1.442695
        %v5376 = vpow.pop %v5375
        %v5377 = vmul.f32 %v5344, 1.442695
        %v5378 = vpow.pop %v5377
        %v5379 = vmul.f32 %v5345, 1.442695
        %v5380 = vpow.pop %v5379
        %v5381 = vmul.f32 %v5346, 1.442695
        %v5382 = vpow.pop %v5381
        %v5383 = vmul.f32 %v5347, 1.442695
        %v5384 = vpow.pop %v5383
        %v5385 = vmul.f32 %v5348, 1.442695
        %v5386 = vpow.pop %v5385
        %v5387 = vmul.f32 %v5349, 1.442695
        %v5388 = vpow.pop %v5387
        %v5389 = vmul.f32 %v5350, 1.442695
        %v5390 = vpow.pop %v5389
        %v5391 = vmul.f32 %v5351, 1.442695
        %v5392 = vpow.pop %v5391
        %v5393 = vmul.f32 %v5352, 1.442695
        %v5394 = vpow.pop %v5393
        %v5395 = vmul.f32 %v5353, 1.442695
        %v5396 = vpow.pop %v5395
        %v5397 = vmul.f32 %v5354, 1.442695
        %v5398 = vpow.pop %v5397
        %v5399 = vmul.f32 %v5355, 1.442695
        %v5400 = vpow.pop %v5399
        %v5401 = vmul.f32 %v5356, 1.442695
        %v5402 = vpow.pop %v5401
        %v5403 = vmul.f32 %v5357, 1.442695
        %v5404 = vpow.pop %v5403
        %v5405 = vmul.f32 %v5358, 1.442695
        %v5406 = vpow.pop %v5405
        %v5407 = vmul.f32 %v5359, 1.442695
        %v5408 = vpow.pop %v5407
        %v5409 = vmul.f32 %v5360, 1.442695
        %v5410 = vpow.pop %v5409
        %v5411 = vsub.f32 %v5362, 1.0
        %v5412 = vsub.f32 %v5364, 1.0
        %v5413 = vsub.f32 %v5366, 1.0
        %v5414 = vsub.f32 %v5368, 1.0
        %v5415 = vsub.f32 %v5370, 1.0
        %v5416 = vsub.f32 %v5372, 1.0
        %v5417 = vsub.f32 %v5374, 1.0
        %v5418 = vsub.f32 %v5376, 1.0
        %v5419 = vsub.f32 %v5378, 1.0
        %v5420 = vsub.f32 %v5380, 1.0
        %v5421 = vsub.f32 %v5382, 1.0
        %v5422 = vsub.f32 %v5384, 1.0
        %v5423 = vsub.f32 %v5386, 1.0
        %v5424 = vsub.f32 %v5388, 1.0
        %v5425 = vsub.f32 %v5390, 1.0
        %v5426 = vsub.f32 %v5392, 1.0
        %v5427 = vsub.f32 %v5394, 1.0
        %v5428 = vsub.f32 %v5396, 1.0
        %v5429 = vsub.f32 %v5398, 1.0
        %v5430 = vsub.f32 %v5400, 1.0
        %v5431 = vsub.f32 %v5402, 1.0
        %v5432 = vsub.f32 %v5404, 1.0
        %v5433 = vsub.f32 %v5406, 1.0
        %v5434 = vsub.f32 %v5408, 1.0
        %v5435 = vsub.f32 %v5410, 1.0
        %v5436 = vsel %vm5311, %v5237, %v5411
        %v5437 = vsel %vm5312, %v5240, %v5412
        %v5438 = vsel %vm5313, %v5243, %v5413
        %v5439 = vsel %vm5314, %v5246, %v5414
        %v5440 = vsel %vm5315, %v5249, %v5415
        %v5441 = vsel %vm5316, %v5252, %v5416
        %v5442 = vsel %vm5317, %v5255, %v5417
        %v5443 = vsel %vm5318, %v5258, %v5418
        %v5444 = vsel %vm5319, %v5261, %v5419
        %v5445 = vsel %vm5320, %v5264, %v5420
        %v5446 = vsel %vm5321, %v5267, %v5421
        %v5447 = vsel %vm5322, %v5270, %v5422
        %v5448 = vsel %vm5323, %v5273, %v5423
        %v5449 = vsel %vm5324, %v5276, %v5424
        %v5450 = vsel %vm5325, %v5279, %v5425
        %v5451 = vsel %vm5326, %v5282, %v5426
        %v5452 = vsel %vm5327, %v5285, %v5427
        %v5453 = vsel %vm5328, %v5288, %v5428
        %v5454 = vsel %vm5329, %v5291, %v5429
        %v5455 = vsel %vm5330, %v5294, %v5430
        %v5456 = vsel %vm5331, %v5297, %v5431
        %v5457 = vsel %vm5332, %v5300, %v5432
        %v5458 = vsel %vm5333, %v5303, %v5433
        %v5459 = vsel %vm5334, %v5306, %v5434
        %v5460 = vsel %vm5335, %v5309, %v5435
        %v5461 = vld [vmem:[%s9] sm:$0xff]
        %v5462 = vld [vmem:[%s9 + $0x8] sm:$0xff]
        %v5463 = vld [vmem:[%s9 + $0x10] sm:$0xff]
        %v5464 = vld [vmem:[%s9 + $0x18] sm:$0xff]
        %v5465 = vld [vmem:[%s9 + $0x20] sm:$0xff]
        %v5466 = vld [vmem:[%s9 + $0x28] sm:$0xff]
        %v5467 = vld [vmem:[%s9 + $0x30] sm:$0xff]
        %v5468 = vld [vmem:[%s9 + $0x38] sm:$0xff]
        %v5469 = vld [vmem:[%s9 + $0x40] sm:$0xff]
        %v5470 = vld [vmem:[%s9 + $0x48] sm:$0xff]
        %v5471 = vld [vmem:[%s9 + $0x50] sm:$0xff]
        %v5472 = vld [vmem:[%s9 + $0x58] sm:$0xff]
        %v5473 = vld [vmem:[%s9 + $0x60] sm:$0xff]
        %v5474 = vld [vmem:[%s9 + $0x68] sm:$0xff]
        %v5475 = vld [vmem:[%s9 + $0x70] sm:$0xff]
        %v5476 = vld [vmem:[%s9 + $0x78] sm:$0xff]
        %v5477 = vld [vmem:[%s9 + $0x80] sm:$0xff]
        %v5478 = vld [vmem:[%s9 + $0x88] sm:$0xff]
        %v5479 = vld [vmem:[%s9 + $0x90] sm:$0xff]
        %v5480 = vld [vmem:[%s9 + $0x98] sm:$0xff]
        %v5481 = vld [vmem:[%s9 + $0xa0] sm:$0xff]
        %v5482 = vld [vmem:[%s9 + $0xa8] sm:$0xff]
        %v5483 = vld [vmem:[%s9 + $0xb0] sm:$0xff]
        %v5484 = vld [vmem:[%s9 + $0xb8] sm:$0xff]
        %v5485 = vld [vmem:[%s9 + $0xc0] sm:$0xff]
        %v5486 = vmul.f32 %v5461, %v5436
        %v5487 = vmul.f32 %v5462, %v5437
        %v5488 = vmul.f32 %v5463, %v5438
        %v5489 = vmul.f32 %v5464, %v5439
        %v5490 = vmul.f32 %v5465, %v5440
        %v5491 = vmul.f32 %v5466, %v5441
        %v5492 = vmul.f32 %v5467, %v5442
        %v5493 = vmul.f32 %v5468, %v5443
        %v5494 = vmul.f32 %v5469, %v5444
        %v5495 = vmul.f32 %v5470, %v5445
        %v5496 = vmul.f32 %v5471, %v5446
        %v5497 = vmul.f32 %v5472, %v5447
        %v5498 = vmul.f32 %v5473, %v5448
        %v5499 = vmul.f32 %v5474, %v5449
        %v5500 = vmul.f32 %v5475, %v5450
        %v5501 = vmul.f32 %v5476, %v5451
        %v5502 = vmul.f32 %v5477, %v5452
        %v5503 = vmul.f32 %v5478, %v5453
        %v5504 = vmul.f32 %v5479, %v5454
        %v5505 = vmul.f32 %v5480, %v5455
        %v5506 = vmul.f32 %v5481, %v5456
        %v5507 = vmul.f32 %v5482, %v5457
        %v5508 = vmul.f32 %v5483, %v5458
        %v5509 = vmul.f32 %v5484, %v5459
        %v5510 = vmul.f32 %v5485, %v5460
        %vm5511 = vcmask 351232
        %v5512 = vsel %vm5511, %v5486, 0.0
        %5513 = vadd.xlane.f32.xlu0 %v5512
        %v5514 = vpop.xlane.xlu0 %5513
        %v5515 = vsel %vm5511, %v5487, 0.0
        %5516 = vadd.xlane.f32.xlu0 %v5515
        %v5517 = vpop.xlane.xlu0 %5516
        %v5518 = vsel %vm5511, %v5488, 0.0
        %5519 = vadd.xlane.f32.xlu0 %v5518
        %v5520 = vpop.xlane.xlu0 %5519
        %v5521 = vsel %vm5511, %v5489, 0.0
        %5522 = vadd.xlane.f32.xlu0 %v5521
        %v5523 = vpop.xlane.xlu0 %5522
        %v5524 = vsel %vm5511, %v5490, 0.0
        %5525 = vadd.xlane.f32.xlu0 %v5524
        %v5526 = vpop.xlane.xlu0 %5525
        %v5527 = vsel %vm5511, %v5491, 0.0
        %5528 = vadd.xlane.f32.xlu0 %v5527
        %v5529 = vpop.xlane.xlu0 %5528
        %v5530 = vsel %vm5511, %v5492, 0.0
        %5531 = vadd.xlane.f32.xlu0 %v5530
        %v5532 = vpop.xlane.xlu0 %5531
        %v5533 = vsel %vm5511, %v5493, 0.0
        %5534 = vadd.xlane.f32.xlu0 %v5533
        %v5535 = vpop.xlane.xlu0 %5534
        %v5536 = vsel %vm5511, %v5494, 0.0
        %5537 = vadd.xlane.f32.xlu0 %v5536
        %v5538 = vpop.xlane.xlu0 %5537
        %v5539 = vsel %vm5511, %v5495, 0.0
        %5540 = vadd.xlane.f32.xlu0 %v5539
        %v5541 = vpop.xlane.xlu0 %5540
        %v5542 = vsel %vm5511, %v5496, 0.0
        %5543 = vadd.xlane.f32.xlu0 %v5542
        %v5544 = vpop.xlane.xlu0 %5543
        %v5545 = vsel %vm5511, %v5497, 0.0
        %5546 = vadd.xlane.f32.xlu0 %v5545
        %v5547 = vpop.xlane.xlu0 %5546
        %v5548 = vsel %vm5511, %v5498, 0.0
        %5549 = vadd.xlane.f32.xlu0 %v5548
        %v5550 = vpop.xlane.xlu0 %5549
        %v5551 = vsel %vm5511, %v5499, 0.0
        %5552 = vadd.xlane.f32.xlu0 %v5551
        %v5553 = vpop.xlane.xlu0 %5552
        %v5554 = vsel %vm5511, %v5500, 0.0
        %5555 = vadd.xlane.f32.xlu0 %v5554
        %v5556 = vpop.xlane.xlu0 %5555
        %v5557 = vsel %vm5511, %v5501, 0.0
        %5558 = vadd.xlane.f32.xlu0 %v5557
        %v5559 = vpop.xlane.xlu0 %5558
        %v5560 = vsel %vm5511, %v5502, 0.0
        %5561 = vadd.xlane.f32.xlu0 %v5560
        %v5562 = vpop.xlane.xlu0 %5561
        %v5563 = vsel %vm5511, %v5503, 0.0
        %5564 = vadd.xlane.f32.xlu0 %v5563
        %v5565 = vpop.xlane.xlu0 %5564
        %v5566 = vsel %vm5511, %v5504, 0.0
        %5567 = vadd.xlane.f32.xlu0 %v5566
        %v5568 = vpop.xlane.xlu0 %5567
        %v5569 = vsel %vm5511, %v5505, 0.0
        %5570 = vadd.xlane.f32.xlu0 %v5569
        %v5571 = vpop.xlane.xlu0 %5570
        %v5572 = vsel %vm5511, %v5506, 0.0
        %5573 = vadd.xlane.f32.xlu0 %v5572
        %v5574 = vpop.xlane.xlu0 %5573
        %v5575 = vsel %vm5511, %v5507, 0.0
        %5576 = vadd.xlane.f32.xlu0 %v5575
        %v5577 = vpop.xlane.xlu0 %5576
        %v5578 = vsel %vm5511, %v5508, 0.0
        %5579 = vadd.xlane.f32.xlu0 %v5578
        %v5580 = vpop.xlane.xlu0 %5579
        %v5581 = vsel %vm5511, %v5509, 0.0
        %5582 = vadd.xlane.f32.xlu0 %v5581
        %v5583 = vpop.xlane.xlu0 %5582
        %v5584 = vsel %vm5511, %v5510, 0.0
        %5585 = vadd.xlane.f32.xlu0 %v5584
        %v5586 = vpop.xlane.xlu0 %5585
        %v5587 = vadd.f32 %v5514, %v5517
        %v5588 = vadd.f32 %v5587, %v5520
        %v5589 = vadd.f32 %v5588, %v5523
        %v5590 = vadd.f32 %v5589, %v5526
        %v5591 = vadd.f32 %v5590, %v5529
        %v5592 = vadd.f32 %v5591, %v5532
        %v5593 = vadd.f32 %v5592, %v5535
        %v5594 = vadd.f32 %v5593, %v5538
        %v5595 = vadd.f32 %v5594, %v5541
        %v5596 = vadd.f32 %v5595, %v5544
        %v5597 = vadd.f32 %v5596, %v5547
        %v5598 = vadd.f32 %v5597, %v5550
        %v5599 = vadd.f32 %v5598, %v5553
        %v5600 = vadd.f32 %v5599, %v5556
        %v5601 = vadd.f32 %v5600, %v5559
        %v5602 = vadd.f32 %v5601, %v5562
        %v5603 = vadd.f32 %v5602, %v5565
        %v5604 = vadd.f32 %v5603, %v5568
        %v5605 = vadd.f32 %v5604, %v5571
        %v5606 = vadd.f32 %v5605, %v5574
        %v5607 = vadd.f32 %v5606, %v5577
        %v5608 = vadd.f32 %v5607, %v5580
        %v5609 = vadd.f32 %v5608, %v5583
        %v5610 = vadd.f32 %v5609, %v5586
        %v5611 = vrot.slane %v5610, 4
        %v5612 = vadd.f32 %v5610, %v5611
        %v5613 = vrot.slane %v5612, 2
        %v5614 = vadd.f32 %v5612, %v5613
        %v5615 = vrot.slane %v5614, 1
        %v5616 = vadd.f32 %v5614, %v5615
        %s5617 = scalar_lea.vmem %s9, 200
        %v5618 = vld [vmem:[%s5617] sm:$0xff]
        %v5619 = vld [vmem:[%s5617 + $0x8] sm:$0xff]
        %v5620 = vld [vmem:[%s5617 + $0x10] sm:$0xff]
        %v5621 = vld [vmem:[%s5617 + $0x18] sm:$0xff]
        %v5622 = vld [vmem:[%s5617 + $0x20] sm:$0xff]
        %v5623 = vld [vmem:[%s5617 + $0x28] sm:$0xff]
        %v5624 = vld [vmem:[%s5617 + $0x30] sm:$0xff]
        %v5625 = vld [vmem:[%s5617 + $0x38] sm:$0xff]
        %v5626 = vld [vmem:[%s5617 + $0x40] sm:$0xff]
        %v5627 = vld [vmem:[%s5617 + $0x48] sm:$0xff]
        %v5628 = vld [vmem:[%s5617 + $0x50] sm:$0xff]
        %v5629 = vld [vmem:[%s5617 + $0x58] sm:$0xff]
        %v5630 = vld [vmem:[%s5617 + $0x60] sm:$0xff]
        %v5631 = vld [vmem:[%s5617 + $0x68] sm:$0xff]
        %v5632 = vld [vmem:[%s5617 + $0x70] sm:$0xff]
        %v5633 = vld [vmem:[%s5617 + $0x78] sm:$0xff]
        %v5634 = vld [vmem:[%s5617 + $0x80] sm:$0xff]
        %v5635 = vld [vmem:[%s5617 + $0x88] sm:$0xff]
        %v5636 = vld [vmem:[%s5617 + $0x90] sm:$0xff]
        %v5637 = vld [vmem:[%s5617 + $0x98] sm:$0xff]
        %v5638 = vld [vmem:[%s5617 + $0xa0] sm:$0xff]
        %v5639 = vld [vmem:[%s5617 + $0xa8] sm:$0xff]
        %v5640 = vld [vmem:[%s5617 + $0xb0] sm:$0xff]
        %v5641 = vld [vmem:[%s5617 + $0xb8] sm:$0xff]
        %v5642 = vld [vmem:[%s5617 + $0xc0] sm:$0xff]
        %v5643 = vmul.f32 %v5618, %v5436
        %v5644 = vmul.f32 %v5619, %v5437
        %v5645 = vmul.f32 %v5620, %v5438
        %v5646 = vmul.f32 %v5621, %v5439
        %v5647 = vmul.f32 %v5622, %v5440
        %v5648 = vmul.f32 %v5623, %v5441
        %v5649 = vmul.f32 %v5624, %v5442
        %v5650 = vmul.f32 %v5625, %v5443
        %v5651 = vmul.f32 %v5626, %v5444
        %v5652 = vmul.f32 %v5627, %v5445
        %v5653 = vmul.f32 %v5628, %v5446
        %v5654 = vmul.f32 %v5629, %v5447
        %v5655 = vmul.f32 %v5630, %v5448
        %v5656 = vmul.f32 %v5631, %v5449
        %v5657 = vmul.f32 %v5632, %v5450
        %v5658 = vmul.f32 %v5633, %v5451
        %v5659 = vmul.f32 %v5634, %v5452
        %v5660 = vmul.f32 %v5635, %v5453
        %v5661 = vmul.f32 %v5636, %v5454
        %v5662 = vmul.f32 %v5637, %v5455
        %v5663 = vmul.f32 %v5638, %v5456
        %v5664 = vmul.f32 %v5639, %v5457
        %v5665 = vmul.f32 %v5640, %v5458
        %v5666 = vmul.f32 %v5641, %v5459
        %v5667 = vmul.f32 %v5642, %v5460
        %v5668 = vsel %vm5511, %v5643, 0.0
        %5669 = vadd.xlane.f32.xlu0 %v5668
        %v5670 = vpop.xlane.xlu0 %5669
        %v5671 = vsel %vm5511, %v5644, 0.0
        %5672 = vadd.xlane.f32.xlu0 %v5671
        %v5673 = vpop.xlane.xlu0 %5672
        %v5674 = vsel %vm5511, %v5645, 0.0
        %5675 = vadd.xlane.f32.xlu0 %v5674
        %v5676 = vpop.xlane.xlu0 %5675
        %v5677 = vsel %vm5511, %v5646, 0.0
        %5678 = vadd.xlane.f32.xlu0 %v5677
        %v5679 = vpop.xlane.xlu0 %5678
        %v5680 = vsel %vm5511, %v5647, 0.0
        %5681 = vadd.xlane.f32.xlu0 %v5680
        %v5682 = vpop.xlane.xlu0 %5681
        %v5683 = vsel %vm5511, %v5648, 0.0
        %5684 = vadd.xlane.f32.xlu0 %v5683
        %v5685 = vpop.xlane.xlu0 %5684
        %v5686 = vsel %vm5511, %v5649, 0.0
        %5687 = vadd.xlane.f32.xlu0 %v5686
        %v5688 = vpop.xlane.xlu0 %5687
        %v5689 = vsel %vm5511, %v5650, 0.0
        %5690 = vadd.xlane.f32.xlu0 %v5689
        %v5691 = vpop.xlane.xlu0 %5690
        %v5692 = vsel %vm5511, %v5651, 0.0
        %5693 = vadd.xlane.f32.xlu0 %v5692
        %v5694 = vpop.xlane.xlu0 %5693
        %v5695 = vsel %vm5511, %v5652, 0.0
        %5696 = vadd.xlane.f32.xlu0 %v5695
        %v5697 = vpop.xlane.xlu0 %5696
        %v5698 = vsel %vm5511, %v5653, 0.0
        %5699 = vadd.xlane.f32.xlu0 %v5698
        %v5700 = vpop.xlane.xlu0 %5699
        %v5701 = vsel %vm5511, %v5654, 0.0
        %5702 = vadd.xlane.f32.xlu0 %v5701
        %v5703 = vpop.xlane.xlu0 %5702
        %v5704 = vsel %vm5511, %v5655, 0.0
        %5705 = vadd.xlane.f32.xlu0 %v5704
        %v5706 = vpop.xlane.xlu0 %5705
        %v5707 = vsel %vm5511, %v5656, 0.0
        %5708 = vadd.xlane.f32.xlu0 %v5707
        %v5709 = vpop.xlane.xlu0 %5708
        %v5710 = vsel %vm5511, %v5657, 0.0
        %5711 = vadd.xlane.f32.xlu0 %v5710
        %v5712 = vpop.xlane.xlu0 %5711
        %v5713 = vsel %vm5511, %v5658, 0.0
        %5714 = vadd.xlane.f32.xlu0 %v5713
        %v5715 = vpop.xlane.xlu0 %5714
        %v5716 = vsel %vm5511, %v5659, 0.0
        %5717 = vadd.xlane.f32.xlu0 %v5716
        %v5718 = vpop.xlane.xlu0 %5717
        %v5719 = vsel %vm5511, %v5660, 0.0
        %5720 = vadd.xlane.f32.xlu0 %v5719
        %v5721 = vpop.xlane.xlu0 %5720
        %v5722 = vsel %vm5511, %v5661, 0.0
        %5723 = vadd.xlane.f32.xlu0 %v5722
        %v5724 = vpop.xlane.xlu0 %5723
        %v5725 = vsel %vm5511, %v5662, 0.0
        %5726 = vadd.xlane.f32.xlu0 %v5725
        %v5727 = vpop.xlane.xlu0 %5726
        %v5728 = vsel %vm5511, %v5663, 0.0
        %5729 = vadd.xlane.f32.xlu0 %v5728
        %v5730 = vpop.xlane.xlu0 %5729
        %v5731 = vsel %vm5511, %v5664, 0.0
        %5732 = vadd.xlane.f32.xlu0 %v5731
        %v5733 = vpop.xlane.xlu0 %5732
        %v5734 = vsel %vm5511, %v5665, 0.0
        %5735 = vadd.xlane.f32.xlu0 %v5734
        %v5736 = vpop.xlane.xlu0 %5735
        %v5737 = vsel %vm5511, %v5666, 0.0
        %5738 = vadd.xlane.f32.xlu0 %v5737
        %v5739 = vpop.xlane.xlu0 %5738
        %v5740 = vsel %vm5511, %v5667, 0.0
        %5741 = vadd.xlane.f32.xlu0 %v5740
        %v5742 = vpop.xlane.xlu0 %5741
        %v5743 = vadd.f32 %v5670, %v5673
        %v5744 = vadd.f32 %v5743, %v5676
        %v5745 = vadd.f32 %v5744, %v5679
        %v5746 = vadd.f32 %v5745, %v5682
        %v5747 = vadd.f32 %v5746, %v5685
        %v5748 = vadd.f32 %v5747, %v5688
        %v5749 = vadd.f32 %v5748, %v5691
        %v5750 = vadd.f32 %v5749, %v5694
        %v5751 = vadd.f32 %v5750, %v5697
        %v5752 = vadd.f32 %v5751, %v5700
        %v5753 = vadd.f32 %v5752, %v5703
        %v5754 = vadd.f32 %v5753, %v5706
        %v5755 = vadd.f32 %v5754, %v5709
        %v5756 = vadd.f32 %v5755, %v5712
        %v5757 = vadd.f32 %v5756, %v5715
        %v5758 = vadd.f32 %v5757, %v5718
        %v5759 = vadd.f32 %v5758, %v5721
        %v5760 = vadd.f32 %v5759, %v5724
        %v5761 = vadd.f32 %v5760, %v5727
        %v5762 = vadd.f32 %v5761, %v5730
        %v5763 = vadd.f32 %v5762, %v5733
        %v5764 = vadd.f32 %v5763, %v5736
        %v5765 = vadd.f32 %v5764, %v5739
        %v5766 = vadd.f32 %v5765, %v5742
        %v5767 = vrot.slane %v5766, 4
        %v5768 = vadd.f32 %v5766, %v5767
        %v5769 = vrot.slane %v5768, 2
        %v5770 = vadd.f32 %v5768, %v5769
        %v5771 = vrot.slane %v5770, 1
        %v5772 = vadd.f32 %v5770, %v5771
        %v5773 = vlaneseq
        %v5774 = vand.u32 %v5773, 127
        %vm5775 = vcmp.eq.s32.totalorder %v5774, 0
        %v5776 = vsel %vm5775, %v5616, %v5772
        %v5777 = vld [vmem:[%s10] sm:$0x1]
        %v5778 = vadd.f32 %v5776, %v5777
        %vm5779 = vcmask 8192
        %5780 = vst.msk [vmem:[%s486] sm:$0x1] %vm5779, %v5778
        %s5781 = sand.u32 %s357, 1
        %s5782 = scalar_lea.sflag [#allocation3], %s5781
        %s5783 = sand.u32 %s357, 1
        %s5784 = scalar_lea.vmem [#allocation2], %s5783
        // Predicated region
        $region81: #{deepconvnet_forward.1} parent=79 // pred_check
          %p5785 = pneg %p367
        $region82: #{deepconvnet_forward.1} parent=79 // pred_check_branch
          %5787 = sbr.rel (%p5785) target = $region84
        $region83: #{deepconvnet_forward.1} parent=79 // pred_region
          %5789 = vsyncadd %s5782, 0
          %s5790 = scalar_lea.hbm %s15, %s29
          %s5792 = sshll.u32 %s5784, 4
          %s5793 = int_to_ptr.vmem [resolvable:$true] %s5792
          %s5794 = sshll.u32 %s5790, 4
          %s5795 = int_to_ptr.hbm [resolvable:$true] %s5794
          %5797 = dma.vmem_to_hbm [thread:$0]  %s5793, 16, %s5795, %s5782
        $region84: #{deepconvnet_forward.1} parent=79 // pred_fallthru
          _
      $region80: #{deepconvnet_forward.1} parent=5 // pred_fallthru
        _
      %p5798 = scmp.le.s32.totalorder 2, %s24
      // Predicated region
      $region85: #{deepconvnet_forward.1} parent=5 // pred_check
        %p5799 = pneg %p5798
      $region86: #{deepconvnet_forward.1} parent=5 // pred_check_branch
        %5801 = sbr.rel (%p5799) target = $region88
      $region87: #{deepconvnet_forward.1} parent=5 // pred_region
        %s5802 = ssub.s32 %s24, 2
        // Predicated region
        $region89: #{deepconvnet_forward.1} parent=87 // pred_check
          %p5803 = pneg %p373
        $region90: #{deepconvnet_forward.1} parent=87 // pred_check_branch
          %5805 = sbr.rel (%p5803) target = $region92
        $region91: #{deepconvnet_forward.1} parent=87 // pred_region
          %s5806 = sand.u32 %s358, 1
          %s5807 = scalar_lea.sflag [#allocation3], %s5806
          %s5808 = sand.u32 %s358, 1
          %s5809 = scalar_lea.vmem [#allocation2], %s5808
          %5811 = dma.done %s5807, 16
        $region92: #{deepconvnet_forward.1} parent=87 // pred_fallthru
          _
      $region88: #{deepconvnet_forward.1} parent=5 // pred_fallthru
        _
    $region6: #{deepconvnet_forward.1} parent=1 // loop_footer
      %s28 = sadd.s32 1, %s24
    $region7: #{deepconvnet_forward.1} parent=1 // loop_footer_branch
      %23 = sbr.rel target = $region3
    $region8: #{deepconvnet_forward.1} parent=1 // loop_exit
      _
    %5812 = vsyncpa [#allocation3], 1
    %s5813 = scalar_lea.sflag [#allocation3], 1
    %5814 = vsyncpa %s5813, 1

</llo_original>
